<compile_context>
chip_gen: v7x
topology: tpu7x:2x2x1
jax: 0.10.0
libtpu: 0.0.40
codegen_flags: <defaults>
</compile_context>

<pallas_src>
import functools

import jax
import jax.numpy as jnp
from jax.experimental import pallas as pl
from jax.experimental.pallas import tpu as pltpu

SLOPE = 0.1  # LeakyReLU negative slope used everywhere in the module

# Conservative scoped-VMEM budget: safe on v7x (64 MiB physical) and far below
# v5e/v6e's 128 MiB; demo-sized blocks use well under 1 MiB.
_COMPILER_PARAMS = pltpu.CompilerParams(
    dimension_semantics=("parallel",),
    vmem_limit_bytes=32 * 1024 * 1024,
)


# --------------------------------------------------------------------------- #
# small helpers
# --------------------------------------------------------------------------- #
def _leaky(x, slope):
    return jnp.where(x >= 0, x, x * slope)


def _sigmoid(x):
    # explicit EUP-friendly sigmoid (avoids relying on `logistic` lowering)
    return 1.0 / (1.0 + jnp.exp(-x))


def _round_up(x, m):
    return ((x + m - 1) // m) * m


def _row_tiling(m, max_tm=512):
    """Row-tile size + padded row count.

    Always a multiple of 8, never a 'whole array in one block' fallback, and
    shrunk so the 1-D grid has >= 2 steps when the problem allows it (so the
    "parallel" grid axis can actually be sharded across TensorCores)."""
    tm = min(max_tm, _round_up(m, 8))
    if _round_up(m, tm) // tm < 2 and tm > 8:
        tm = max(8, _round_up(pl.cdiv(m, 2), 8))
    return tm, _round_up(m, tm)


def _pad_rows(a, mp):
    m = a.shape[0]
    return a if mp == m else jnp.pad(a, ((0, mp - m), (0, 0)))


# --------------------------------------------------------------------------- #
# Fused KxK convolution kernel (per-image block, K accumulated shifted dots)
# --------------------------------------------------------------------------- #
def _make_conv_kernel(k, width, hw, slope, sigmoid_from, has_residual):
    def kernel(*refs):
        if has_residual:
            xc_ref, w_ref, b_ref, r_ref, o_ref = refs
        else:
            xc_ref, w_ref, b_ref, o_ref = refs
            r_ref = None
        cout = o_ref.shape[-1]
        acc = jnp.zeros((hw, cout), jnp.float32)
        # K H-tap dots; the W-taps are folded into the contraction dimension of
        # the pre-concatenated slab, so there is no im2col matrix in HBM.  The
        # slice starts (i*width) are static and (for the demo sizes) multiples
        # of 8, so these are aligned sublane slices of the resident VMEM block.
        for i in range(k):
            lhs = xc_ref[0, i * width:i * width + hw, :]
            acc = acc + jnp.dot(lhs, w_ref[i], preferred_element_type=jnp.float32)
        acc = acc + b_ref[...]
        if sigmoid_from is not None:
            # fused epilogue for the offset/mask conv: sigmoid on mask channels
            col = jax.lax.broadcasted_iota(jnp.int32, (hw, cout), 1)
            acc = jnp.where(col >= sigmoid_from, _sigmoid(acc), acc)
        if slope is not None:
            acc = _leaky(acc, slope)
        if has_residual:
            acc = acc + r_ref[0]
        # TODO(synk): with cout < 128 this store is lane-masked; a lane-dense
        # repack (e.g. (HW/16, 16*cout)) needs an in-kernel sublane->lane
        # relayout and is left out for lowering robustness.
        o_ref[0, :, :] = acc.astype(o_ref.dtype)
    return kernel


def conv2d_nhwc(x, weight, bias=None, slope=None, residual=None, sigmoid_from=None):
    """KxK conv, stride 1, 'same' padding. weight is PyTorch (Cout,Cin,K,K).
    Optionally fuses bias, LeakyReLU, residual add and a sigmoid epilogue."""
    b, h, w, cin = x.shape
    cout, _, k, _ = weight.shape
    pad = (k - 1) // 2
    hp = h + 2 * pad
    xp = jnp.pad(x, ((0, 0), (pad, pad), (pad, pad), (0, 0)))
    # K width-shifted copies, concatenated on channels and row-flattened:
    # xcat[b, r*W + c, j*Cin + cc] = xp[b, r, c + j, cc]   (bf16 halves DMA)
    xcat = jnp.concatenate([xp[:, :, j:j + w, :] for j in range(k)], axis=-1)
    xcat = xcat.reshape(b, hp * w, k * cin).astype(jnp.bfloat16)
    # weight -> (K, K*Cin, Cout) with wm[i, j*Cin + cc, d] = weight[d, cc, i, j]
    wm = jnp.transpose(weight, (2, 3, 1, 0)).reshape(k, k * cin, cout)
    wm = wm.astype(jnp.bfloat16)
    bias_v = (jnp.zeros((1, cout), jnp.float32) if bias is None
              else bias.reshape(1, cout).astype(jnp.float32))

    args = [xcat, wm, bias_v]
    in_specs = [
        pl.BlockSpec((1, hp * w, k * cin), lambda i: (i, 0, 0)),
        pl.BlockSpec((k, k * cin, cout), lambda i: (0, 0, 0)),
        pl.BlockSpec((1, cout), lambda i: (0, 0)),
    ]
    if residual is not None:
        args.append(residual.reshape(b, h * w, cout).astype(jnp.float32))
        in_specs.append(pl.BlockSpec((1, h * w, cout), lambda i: (i, 0, 0)))

    kernel = _make_conv_kernel(k, w, h * w, slope, sigmoid_from,
                               residual is not None)
    # TODO(synk): grid is over batch only (whole padded image resident in VMEM);
    # large spatial sizes would need H-tiling with halo loads (pl.Element maps).
    out = pl.pallas_call(
        kernel,
        out_shape=jax.ShapeDtypeStruct((b, h * w, cout), jnp.float32),
        grid_spec=pltpu.PrefetchScalarGridSpec(
            num_scalar_prefetch=0,
            grid=(b,),
            in_specs=in_specs,
            out_specs=pl.BlockSpec((1, h * w, cout), lambda i: (i, 0, 0)),
        ),
        compiler_params=_COMPILER_PARAMS,
    )(*args)
    return out.reshape(b, h, w, cout)


# --------------------------------------------------------------------------- #
# Fused DGM kernel: DCN contraction + SFT (3 merged dots) + residual + LeakyReLU
# --------------------------------------------------------------------------- #
def _dgm_kernel(x_ref, inter_ref, p_ref, wd_ref, wgb1_ref, wg2_ref, wb2_ref,
                o_ref, *, slope, out_act):
    # deformable-conv contraction (patches already masked/bilinear-sampled)
    dcn = jnp.dot(p_ref[...], wd_ref[...], preferred_element_type=jnp.float32)
    # SFT branch: stage 1 computes the gamma/beta first 1x1 convs in one dot;
    # stage 2 uses zero-padded weights so no lane slicing is needed.
    s1 = jnp.dot(inter_ref[...], wgb1_ref[...], preferred_element_type=jnp.float32)
    s1 = _leaky(s1, slope).astype(jnp.bfloat16)
    gamma = jnp.dot(s1, wg2_ref[...], preferred_element_type=jnp.float32)
    beta = jnp.dot(s1, wb2_ref[...], preferred_element_type=jnp.float32)
    x = x_ref[...]
    out = x + dcn + x * gamma + beta          # DGM: x + (dcn_out + sft_out)
    if out_act:                               # LeakyReLU applied by DGB after DGM
        out = _leaky(out, slope)
    o_ref[...] = out.astype(o_ref.dtype)


def dgm_fused_pallas(x_flat, inter_flat, patches, wd, wgb1, wg2p, wb2p,
                     slope=SLOPE, out_act=True):
    m, c = x_flat.shape
    kkc = patches.shape[-1]
    tm, mp = _row_tiling(m)
    x_p = _pad_rows(x_flat.astype(jnp.float32), mp)
    inter_p = _pad_rows(inter_flat.astype(jnp.bfloat16), mp)
    patch_p = _pad_rows(patches, mp)

    def row(n):
        return pl.BlockSpec((tm, n), lambda i: (i, 0))

    def full(shape):
        return pl.BlockSpec(shape, lambda i: (0, 0))

    out = pl.pallas_call(
        functools.partial(_dgm_kernel, slope=slope, out_act=out_act),
        out_shape=jax.ShapeDtypeStruct((mp, c), jnp.float32),
        grid_spec=pltpu.PrefetchScalarGridSpec(
            num_scalar_prefetch=0,
            grid=(mp // tm,),
            in_specs=[row(c), row(c), row(kkc),
                      full((kkc, c)), full((c, 2 * c)),
                      full((2 * c, c)), full((2 * c, c))],
            out_specs=row(c),
        ),
        compiler_params=_COMPILER_PARAMS,
    )(x_p, inter_p, patch_p, wd, wgb1, wg2p, wb2p)
    return out[:m]


# --------------------------------------------------------------------------- #
# Deformable sampling glue (XLA gather) — output feeds the fused DGM kernel
# --------------------------------------------------------------------------- #
def _bilinear_sample(img, py, px):
    """img: (B,H,W,C); py,px: (B,H,W,KK) -> (B,H,W,KK,C); zero outside image."""
    bsz, h, w, _ = img.shape
    y0 = jnp.floor(py)
    x0 = jnp.floor(px)
    y1 = y0 + 1.0
    x1 = x0 + 1.0
    wy1 = py - y0
    wx1 = px - x0
    wy0 = 1.0 - wy1
    wx0 = 1.0 - wx1
    b_idx = jnp.arange(bsz)[:, None, None, None]

    def gather(yi, xi):
        valid = ((yi >= 0) & (yi < h) & (xi >= 0) & (xi < w)).astype(img.dtype)
        yc = jnp.clip(yi, 0, h - 1).astype(jnp.int32)
        xc = jnp.clip(xi, 0, w - 1).astype(jnp.int32)
        v = img[b_idx, yc, xc]              # (B,H,W,KK,C)
        return v * valid[..., None]

    return (gather(y0, x0) * (wy0 * wx0)[..., None]
            + gather(y0, x1) * (wy0 * wx1)[..., None]
            + gather(y1, x0) * (wy1 * wx0)[..., None]
            + gather(y1, x1) * (wy1 * wx1)[..., None])


def deform_sample(x, off_y, off_x, mask, k):
    """Masked bilinear-sampled patches, row-flattened (M, K*K*C) in bf16.
    TODO(synk): data-dependent bilinear gather stays in XLA; a manual-DMA
    Pallas gather (pl.ANY refs + make_async_copy) is the remaining big item."""
    b, h, w, c = x.shape
    pad = (k - 1) // 2
    ki = jnp.arange(k, dtype=x.dtype)
    ii = jnp.repeat(ki, k)
    jj = jnp.tile(ki, k)
    hh = jnp.arange(h, dtype=x.dtype)
    ww = jnp.arange(w, dtype=x.dtype)
    py = hh[None, :, None, None] - pad + ii[None, None, None, :] + off_y
    px = ww[None, None, :, None] - pad + jj[None, None, None, :] + off_x
    sampled = _bilinear_sample(x, py, px) * mask[..., None]       # (B,H,W,KK,C)
    return sampled.reshape(b * h * w, k * k * c).astype(jnp.bfloat16)


# --------------------------------------------------------------------------- #
# DGM / DGB forward
# --------------------------------------------------------------------------- #
def dgm_forward(x, inter, p, out_act=True):
    b, h, w, c = x.shape
    k = p["dcn_w"].shape[-1]
    kk = k * k

    # offsets & mask from a KxK conv on concat(x, inter); sigmoid fused in-kernel
    feat = jnp.concatenate([x, inter], axis=-1)
    om = conv2d_nhwc(feat, p["offset_w"], bias=p["offset_b"], sigmoid_from=2 * kk)
    # TODO(synk): channel->(dy,dx) interleave differs from torchvision's exact
    # ordering; equivalent up to a permutation of the learned offset-conv channels.
    off_y, off_x, mask = om[..., :kk], om[..., kk:2 * kk], om[..., 2 * kk:]
    patches = deform_sample(x, off_y, off_x, mask, k)             # (M, KK*C) bf16

    # matmul-form weights (bf16 operands, f32 accumulation in-kernel)
    wd = jnp.transpose(p["dcn_w"], (2, 3, 1, 0)).reshape(kk * c, c).astype(jnp.bfloat16)
    zero = jnp.zeros((c, c), jnp.float32)
    wgb1 = jnp.concatenate([p["wg1"], p["wb1"]], axis=1).astype(jnp.bfloat16)   # (C, 2C)
    wg2p = jnp.concatenate([p["wg2"], zero], axis=0).astype(jnp.bfloat16)       # (2C, C)
    wb2p = jnp.concatenate([zero, p["wb2"]], axis=0).astype(jnp.bfloat16)       # (2C, C)

    m = b * h * w
    out = dgm_fused_pallas(x.reshape(m, c), inter.reshape(m, c), patches,
                           wd, wgb1, wg2p, wb2p, slope=SLOPE, out_act=out_act)
    return out.reshape(b, h, w, c)


def dgb_forward(x_nchw, inter_nchw, params):
    # NCHW in/out; NHWC inside.
    x = jnp.transpose(x_nchw, (0, 2, 3, 1))
    inter = jnp.transpose(inter_nchw, (0, 2, 3, 1))

    out = dgm_forward(x, inter, params["dgm1"], out_act=True)                     # relu(dgm1)
    out = conv2d_nhwc(out, params["conv1_w"], params["conv1_b"], slope=SLOPE)     # relu(conv1)
    out = dgm_forward(out, inter, params["dgm2"], out_act=True)                   # relu(dgm2)
    out = conv2d_nhwc(out, params["conv2_w"], params["conv2_b"], residual=x)      # conv2 + x

    return jnp.transpose(out, (0, 3, 1, 2))


# --------------------------------------------------------------------------- #
# Deterministic parameter init (shapes match the PyTorch module's __init__)
# --------------------------------------------------------------------------- #
def init_params(key, c, k):
    def nrm(kk, shape, scale):
        return jax.random.normal(kk, shape, jnp.float32) * scale

    def dgm_params(kk):
        ks = jax.random.split(kk, 6)
        return {
            "dcn_w": nrm(ks[0], (c, c, k, k), 0.1),            # DCN weight, bias=False
            # NOTE: the original init_offset() zeros this conv; small nonzero
            # values are used here so the deformable sampling path is exercised.
            "offset_w": nrm(ks[1], (3 * k * k, 2 * c, k, k), 0.01),
            "offset_b": jnp.zeros((3 * k * k,), jnp.float32),
            # 1x1 convs of SFT, stored directly in matmul form (Cin, Cout), bias=False
            "wg1": nrm(ks[2], (c, c), 0.1),
            "wg2": nrm(ks[3], (c, c), 0.1),
            "wb1": nrm(ks[4], (c, c), 0.1),
            "wb2": nrm(ks[5], (c, c), 0.1),
        }

    k1, k2, k3, k4, k5, k6 = jax.random.split(key, 6)
    return {
        "dgm1": dgm_params(k1),
        "dgm2": dgm_params(k2),
        "conv1_w": nrm(k3, (c, c, k, k), 0.1),
        "conv1_b": nrm(k4, (c,), 0.01),
        "conv2_w": nrm(k5, (c, c, k, k), 0.1),
        "conv2_b": nrm(k6, (c,), 0.01),
    }


# --------------------------------------------------------------------------- #
if __name__ == "__main__":
    n_feat, ksize = 8, 3
    B, H, W = 2, 16, 16

    key = jax.random.PRNGKey(0)
    kx, ki, kp = jax.random.split(key, 3)
    x = jax.random.normal(kx, (B, n_feat, H, W), jnp.float32)       # feature map (NCHW)
    inter = jax.random.normal(ki, (B, n_feat, H, W), jnp.float32)   # degradation map (NCHW)
    params = init_params(kp, n_feat, ksize)

    fwd = jax.jit(dgb_forward)
    out = fwd(x, inter, params)
    out = jax.block_until_ready(out)

    assert out.shape == (B, n_feat, H, W), out.shape
    assert bool(jnp.all(jnp.isfinite(out)))
    print("KERNEL_OK")
</pallas_src>

<mosaic_0001>
module attributes {stable_mosaic.version = 11 : i64} {
  func.func @kernel(%arg0: i32, %arg1: memref<1x288x48xbf16, #tpu.memory_space<vmem>>, %arg2: memref<3x48x27xbf16, #tpu.memory_space<vmem>>, %arg3: memref<1x27xf32, #tpu.memory_space<vmem>>, %arg4: memref<1x256x27xf32, #tpu.memory_space<vmem>>) attributes {dimension_semantics = [#tpu.dimension_semantics<parallel>], iteration_bounds = array<i64: 2>, scalar_prefetch = 0 : i64, scratch_operands = 0 : i64, tpu.core_type = #tpu.core_type<tc>, window_params = [{transform_indices = @transform_0, window_bounds = array<i64: 1, 288, 48>}, {pipeline_mode = #tpu.pipeline_mode<synchronous>, transform_indices = @transform_1, window_bounds = array<i64: 3, 48, 27>}, {pipeline_mode = #tpu.pipeline_mode<synchronous>, transform_indices = @transform_2, window_bounds = array<i64: 1, 27>}, {transform_indices = @transform_3, window_bounds = array<i64: 1, 256, 27>}]} {
    %cst = arith.constant 0.000000e+00 : f32
    %0 = vector.broadcast %cst : f32 to vector<256x27xf32>
    %c0 = arith.constant 0 : index
    %c0_0 = arith.constant 0 : index
    %c0_1 = arith.constant 0 : index
    %1 = vector.load %arg1[%c0, %c0_0, %c0_1] : memref<1x288x48xbf16, #tpu.memory_space<vmem>>, vector<1x256x48xbf16>
    %2 = vector.shape_cast %1 : vector<1x256x48xbf16> to vector<256x48xbf16>
    %c0_2 = arith.constant 0 : index
    %c0_3 = arith.constant 0 : index
    %c0_4 = arith.constant 0 : index
    %3 = vector.load %arg2[%c0_2, %c0_3, %c0_4] : memref<3x48x27xbf16, #tpu.memory_space<vmem>>, vector<1x48x27xbf16>
    %4 = vector.shape_cast %3 : vector<1x48x27xbf16> to vector<48x27xbf16>
    %cst_5 = arith.constant dense<0.000000e+00> : vector<256x27xf32>
    %5 = tpu.matmul %2, %4, %cst_5 {dimension_numbers = #tpu.dot_dimension_numbers<[1], [0], [0], [1], [0, 0, 1, 1], [], []>} : vector<256x48xbf16>, vector<48x27xbf16>, vector<256x27xf32> -> vector<256x27xf32>
    %6 = arith.addf %0, %5 : vector<256x27xf32>
    %c0_6 = arith.constant 0 : index
    %c16 = arith.constant 16 : index
    %c0_7 = arith.constant 0 : index
    %7 = vector.load %arg1[%c0_6, %c16, %c0_7] : memref<1x288x48xbf16, #tpu.memory_space<vmem>>, vector<1x256x48xbf16>
    %8 = vector.shape_cast %7 : vector<1x256x48xbf16> to vector<256x48xbf16>
    %c1 = arith.constant 1 : index
    %c0_8 = arith.constant 0 : index
    %c0_9 = arith.constant 0 : index
    %9 = vector.load %arg2[%c1, %c0_8, %c0_9] : memref<3x48x27xbf16, #tpu.memory_space<vmem>>, vector<1x48x27xbf16>
    %10 = vector.shape_cast %9 : vector<1x48x27xbf16> to vector<48x27xbf16>
    %cst_10 = arith.constant dense<0.000000e+00> : vector<256x27xf32>
    %11 = tpu.matmul %8, %10, %cst_10 {dimension_numbers = #tpu.dot_dimension_numbers<[1], [0], [0], [1], [0, 0, 1, 1], [], []>} : vector<256x48xbf16>, vector<48x27xbf16>, vector<256x27xf32> -> vector<256x27xf32>
    %12 = arith.addf %6, %11 : vector<256x27xf32>
    %c0_11 = arith.constant 0 : index
    %c32 = arith.constant 32 : index
    %c0_12 = arith.constant 0 : index
    %13 = vector.load %arg1[%c0_11, %c32, %c0_12] : memref<1x288x48xbf16, #tpu.memory_space<vmem>>, vector<1x256x48xbf16>
    %14 = vector.shape_cast %13 : vector<1x256x48xbf16> to vector<256x48xbf16>
    %c2 = arith.constant 2 : index
    %c0_13 = arith.constant 0 : index
    %c0_14 = arith.constant 0 : index
    %15 = vector.load %arg2[%c2, %c0_13, %c0_14] : memref<3x48x27xbf16, #tpu.memory_space<vmem>>, vector<1x48x27xbf16>
    %16 = vector.shape_cast %15 : vector<1x48x27xbf16> to vector<48x27xbf16>
    %cst_15 = arith.constant dense<0.000000e+00> : vector<256x27xf32>
    %17 = tpu.matmul %14, %16, %cst_15 {dimension_numbers = #tpu.dot_dimension_numbers<[1], [0], [0], [1], [0, 0, 1, 1], [], []>} : vector<256x48xbf16>, vector<48x27xbf16>, vector<256x27xf32> -> vector<256x27xf32>
    %18 = arith.addf %12, %17 : vector<256x27xf32>
    %c0_16 = arith.constant 0 : index
    %c0_17 = arith.constant 0 : index
    %19 = vector.load %arg3[%c0_16, %c0_17] : memref<1x27xf32, #tpu.memory_space<vmem>>, vector<1x27xf32>
    %20 = vector.broadcast %19 : vector<1x27xf32> to vector<256x27xf32>
    %21 = arith.addf %18, %20 : vector<256x27xf32>
    %22 = tpu.iota {dimensions = array<i32: 1>} : vector<256x27xi32>
    %c18_i32 = arith.constant 18 : i32
    %23 = vector.broadcast %c18_i32 : i32 to vector<256x27xi32>
    %24 = arith.cmpi sge, %22, %23 : vector<256x27xi32>
    %cst_18 = arith.constant 0.000000e+00 : f32
    %25 = vector.broadcast %cst_18 : f32 to vector<256x27xf32>
    %26 = arith.subf %25, %21 : vector<256x27xf32>
    %27 = math.exp %26 : vector<256x27xf32>
    %cst_19 = arith.constant 1.000000e+00 : f32
    %28 = vector.broadcast %cst_19 : f32 to vector<256x27xf32>
    %29 = arith.addf %28, %27 : vector<256x27xf32>
    %cst_20 = arith.constant 1.000000e+00 : f32
    %30 = vector.broadcast %cst_20 : f32 to vector<256x27xf32>
    %31 = arith.divf %30, %29 : vector<256x27xf32>
    %32 = arith.select %24, %31, %21 : vector<256x27xi1>, vector<256x27xf32>
    %c0_21 = arith.constant 0 : index
    %c0_22 = arith.constant 0 : index
    %c0_23 = arith.constant 0 : index
    %33 = vector.load %arg4[%c0_21, %c0_22, %c0_23] : memref<1x256x27xf32, #tpu.memory_space<vmem>>, vector<1x256x27xf32>
    %34 = vector.shape_cast %33 : vector<1x256x27xf32> to vector<256x27xf32>
    %35 = vector.shape_cast %32 : vector<256x27xf32> to vector<1x256x27xf32>
    tpu.vector_store %arg4[%c0_21, %c0_22, %c0_23], %35 {strides = array<i32>} : memref<1x256x27xf32, #tpu.memory_space<vmem>>, vector<1x256x27xf32>,
    return
  }
  func.func @transform_0(%arg0: i32) -> (i32, i32, i32) {
    %c0_i32 = arith.constant 0 : i32
    %c0_i32_0 = arith.constant 0 : i32
    %c0_i32_1 = arith.constant 0 : i32
    return %arg0, %c0_i32, %c0_i32_0 : i32, i32, i32
  }
  func.func @transform_1(%arg0: i32) -> (i32, i32, i32) {
    %c0_i32 = arith.constant 0 : i32
    %c0_i32_0 = arith.constant 0 : i32
    %c0_i32_1 = arith.constant 0 : i32
    %c0_i32_2 = arith.constant 0 : i32
    return %c0_i32, %c0_i32_0, %c0_i32_1 : i32, i32, i32
  }
  func.func @transform_2(%arg0: i32) -> (i32, i32) {
    %c0_i32 = arith.constant 0 : i32
    %c0_i32_0 = arith.constant 0 : i32
    %c0_i32_1 = arith.constant 0 : i32
    return %c0_i32, %c0_i32_0 : i32, i32
  }
  func.func @transform_3(%arg0: i32) -> (i32, i32, i32) {
    %c0_i32 = arith.constant 0 : i32
    %c0_i32_0 = arith.constant 0 : i32
    %c0_i32_1 = arith.constant 0 : i32
    return %arg0, %c0_i32, %c0_i32_0 : i32, i32, i32
  }
}

module attributes {stable_mosaic.version = 11 : i64} {
  func.func @_dgm_kernel(%arg0: i32, %arg1: memref<256x8xf32, #tpu.memory_space<vmem>>, %arg2: memref<256x8xbf16, #tpu.memory_space<vmem>>, %arg3: memref<256x72xbf16, #tpu.memory_space<vmem>>, %arg4: memref<72x8xbf16, #tpu.memory_space<vmem>>, %arg5: memref<8x16xbf16, #tpu.memory_space<vmem>>, %arg6: memref<16x8xbf16, #tpu.memory_space<vmem>>, %arg7: memref<16x8xbf16, #tpu.memory_space<vmem>>, %arg8: memref<256x8xf32, #tpu.memory_space<vmem>>) attributes {dimension_semantics = [#tpu.dimension_semantics<parallel>], iteration_bounds = array<i64: 2>, scalar_prefetch = 0 : i64, scratch_operands = 0 : i64, tpu.core_type = #tpu.core_type<tc>, window_params = [{transform_indices = @transform_0, window_bounds = array<i64: 256, 8>}, {transform_indices = @transform_1, window_bounds = array<i64: 256, 8>}, {transform_indices = @transform_2, window_bounds = array<i64: 256, 72>}, {pipeline_mode = #tpu.pipeline_mode<synchronous>, transform_indices = @transform_3, window_bounds = array<i64: 72, 8>}, {pipeline_mode = #tpu.pipeline_mode<synchronous>, transform_indices = @transform_4, window_bounds = array<i64: 8, 16>}, {pipeline_mode = #tpu.pipeline_mode<synchronous>, transform_indices = @transform_5, window_bounds = array<i64: 16, 8>}, {pipeline_mode = #tpu.pipeline_mode<synchronous>, transform_indices = @transform_6, window_bounds = array<i64: 16, 8>}, {transform_indices = @transform_7, window_bounds = array<i64: 256, 8>}]} {
    %c0 = arith.constant 0 : index
    %c0_0 = arith.constant 0 : index
    %0 = vector.load %arg3[%c0, %c0_0] : memref<256x72xbf16, #tpu.memory_space<vmem>>, vector<256x72xbf16>
    %c0_1 = arith.constant 0 : index
    %c0_2 = arith.constant 0 : index
    %1 = vector.load %arg4[%c0_1, %c0_2] : memref<72x8xbf16, #tpu.memory_space<vmem>>, vector<72x8xbf16>
    %cst = arith.constant dense<0.000000e+00> : vector<256x8xf32>
    %2 = tpu.matmul %0, %1, %cst {dimension_numbers = #tpu.dot_dimension_numbers<[1], [0], [0], [1], [0, 0, 1, 1], [], []>} : vector<256x72xbf16>, vector<72x8xbf16>, vector<256x8xf32> -> vector<256x8xf32>
    %c0_3 = arith.constant 0 : index
    %c0_4 = arith.constant 0 : index
    %3 = vector.load %arg2[%c0_3, %c0_4] : memref<256x8xbf16, #tpu.memory_space<vmem>>, vector<256x8xbf16>
    %c0_5 = arith.constant 0 : index
    %c0_6 = arith.constant 0 : index
    %4 = vector.load %arg5[%c0_5, %c0_6] : memref<8x16xbf16, #tpu.memory_space<vmem>>, vector<8x16xbf16>
    %cst_7 = arith.constant dense<0.000000e+00> : vector<256x16xf32>
    %5 = tpu.matmul %3, %4, %cst_7 {dimension_numbers = #tpu.dot_dimension_numbers<[1], [0], [0], [1], [0, 0, 1, 1], [], []>} : vector<256x8xbf16>, vector<8x16xbf16>, vector<256x16xf32> -> vector<256x16xf32>
    %cst_8 = arith.constant 0.000000e+00 : f32
    %6 = vector.broadcast %cst_8 : f32 to vector<256x16xf32>
    %7 = arith.cmpf oge, %5, %6 : vector<256x16xf32>
    %cst_9 = arith.constant 1.000000e-01 : f32
    %8 = vector.broadcast %cst_9 : f32 to vector<256x16xf32>
    %9 = arith.mulf %5, %8 : vector<256x16xf32>
    %10 = arith.select %7, %5, %9 : vector<256x16xi1>, vector<256x16xf32>
    %11 = arith.truncf %10 : vector<256x16xf32> to vector<256x16xbf16>
    %c0_10 = arith.constant 0 : index
    %c0_11 = arith.constant 0 : index
    %12 = vector.load %arg6[%c0_10, %c0_11] : memref<16x8xbf16, #tpu.memory_space<vmem>>, vector<16x8xbf16>
    %cst_12 = arith.constant dense<0.000000e+00> : vector<256x8xf32>
    %13 = tpu.matmul %11, %12, %cst_12 {dimension_numbers = #tpu.dot_dimension_numbers<[1], [0], [0], [1], [0, 0, 1, 1], [], []>} : vector<256x16xbf16>, vector<16x8xbf16>, vector<256x8xf32> -> vector<256x8xf32>
    %c0_13 = arith.constant 0 : index
    %c0_14 = arith.constant 0 : index
    %14 = vector.load %arg7[%c0_13, %c0_14] : memref<16x8xbf16, #tpu.memory_space<vmem>>, vector<16x8xbf16>
    %cst_15 = arith.constant dense<0.000000e+00> : vector<256x8xf32>
    %15 = tpu.matmul %11, %14, %cst_15 {dimension_numbers = #tpu.dot_dimension_numbers<[1], [0], [0], [1], [0, 0, 1, 1], [], []>} : vector<256x16xbf16>, vector<16x8xbf16>, vector<256x8xf32> -> vector<256x8xf32>
    %c0_16 = arith.constant 0 : index
    %c0_17 = arith.constant 0 : index
    %16 = vector.load %arg1[%c0_16, %c0_17] : memref<256x8xf32, #tpu.memory_space<vmem>>, vector<256x8xf32>
    %17 = arith.addf %16, %2 : vector<256x8xf32>
    %18 = arith.mulf %16, %13 : vector<256x8xf32>
    %19 = arith.addf %17, %18 : vector<256x8xf32>
    %20 = arith.addf %19, %15 : vector<256x8xf32>
    %cst_18 = arith.constant 0.000000e+00 : f32
    %21 = vector.broadcast %cst_18 : f32 to vector<256x8xf32>
    %22 = arith.cmpf oge, %20, %21 : vector<256x8xf32>
    %cst_19 = arith.constant 1.000000e-01 : f32
    %23 = vector.broadcast %cst_19 : f32 to vector<256x8xf32>
    %24 = arith.mulf %20, %23 : vector<256x8xf32>
    %25 = arith.select %22, %20, %24 : vector<256x8xi1>, vector<256x8xf32>
    %c0_20 = arith.constant 0 : index
    %c0_21 = arith.constant 0 : index
    %26 = vector.load %arg8[%c0_20, %c0_21] : memref<256x8xf32, #tpu.memory_space<vmem>>, vector<256x8xf32>
    tpu.vector_store %arg8[%c0_20, %c0_21], %25 {strides = array<i32>} : memref<256x8xf32, #tpu.memory_space<vmem>>, vector<256x8xf32>,
    return
  }
  func.func @transform_0(%arg0: i32) -> (i32, i32) {
    %c0_i32 = arith.constant 0 : i32
    %c0_i32_0 = arith.constant 0 : i32
    return %arg0, %c0_i32 : i32, i32
  }
  func.func @transform_1(%arg0: i32) -> (i32, i32) {
    %c0_i32 = arith.constant 0 : i32
    %c0_i32_0 = arith.constant 0 : i32
    return %arg0, %c0_i32 : i32, i32
  }
  func.func @transform_2(%arg0: i32) -> (i32, i32) {
    %c0_i32 = arith.constant 0 : i32
    %c0_i32_0 = arith.constant 0 : i32
    return %arg0, %c0_i32 : i32, i32
  }
  func.func @transform_3(%arg0: i32) -> (i32, i32) {
    %c0_i32 = arith.constant 0 : i32
    %c0_i32_0 = arith.constant 0 : i32
    %c0_i32_1 = arith.constant 0 : i32
    return %c0_i32, %c0_i32_0 : i32, i32
  }
  func.func @transform_4(%arg0: i32) -> (i32, i32) {
    %c0_i32 = arith.constant 0 : i32
    %c0_i32_0 = arith.constant 0 : i32
    %c0_i32_1 = arith.constant 0 : i32
    return %c0_i32, %c0_i32_0 : i32, i32
  }
  func.func @transform_5(%arg0: i32) -> (i32, i32) {
    %c0_i32 = arith.constant 0 : i32
    %c0_i32_0 = arith.constant 0 : i32
    %c0_i32_1 = arith.constant 0 : i32
    return %c0_i32, %c0_i32_0 : i32, i32
  }
  func.func @transform_6(%arg0: i32) -> (i32, i32) {
    %c0_i32 = arith.constant 0 : i32
    %c0_i32_0 = arith.constant 0 : i32
    %c0_i32_1 = arith.constant 0 : i32
    return %c0_i32, %c0_i32_0 : i32, i32
  }
  func.func @transform_7(%arg0: i32) -> (i32, i32) {
    %c0_i32 = arith.constant 0 : i32
    %c0_i32_0 = arith.constant 0 : i32
    return %arg0, %c0_i32 : i32, i32
  }
}

module attributes {stable_mosaic.version = 11 : i64} {
  func.func @kernel(%arg0: i32, %arg1: memref<1x288x24xbf16, #tpu.memory_space<vmem>>, %arg2: memref<3x24x8xbf16, #tpu.memory_space<vmem>>, %arg3: memref<1x8xf32, #tpu.memory_space<vmem>>, %arg4: memref<1x256x8xf32, #tpu.memory_space<vmem>>) attributes {dimension_semantics = [#tpu.dimension_semantics<parallel>], iteration_bounds = array<i64: 2>, scalar_prefetch = 0 : i64, scratch_operands = 0 : i64, tpu.core_type = #tpu.core_type<tc>, window_params = [{transform_indices = @transform_0, window_bounds = array<i64: 1, 288, 24>}, {pipeline_mode = #tpu.pipeline_mode<synchronous>, transform_indices = @transform_1, window_bounds = array<i64: 3, 24, 8>}, {pipeline_mode = #tpu.pipeline_mode<synchronous>, transform_indices = @transform_2, window_bounds = array<i64: 1, 8>}, {transform_indices = @transform_3, window_bounds = array<i64: 1, 256, 8>}]} {
    %cst = arith.constant 0.000000e+00 : f32
    %0 = vector.broadcast %cst : f32 to vector<256x8xf32>
    %c0 = arith.constant 0 : index
    %c0_0 = arith.constant 0 : index
    %c0_1 = arith.constant 0 : index
    %1 = vector.load %arg1[%c0, %c0_0, %c0_1] : memref<1x288x24xbf16, #tpu.memory_space<vmem>>, vector<1x256x24xbf16>
    %2 = vector.shape_cast %1 : vector<1x256x24xbf16> to vector<256x24xbf16>
    %c0_2 = arith.constant 0 : index
    %c0_3 = arith.constant 0 : index
    %c0_4 = arith.constant 0 : index
    %3 = vector.load %arg2[%c0_2, %c0_3, %c0_4] : memref<3x24x8xbf16, #tpu.memory_space<vmem>>, vector<1x24x8xbf16>
    %4 = vector.shape_cast %3 : vector<1x24x8xbf16> to vector<24x8xbf16>
    %cst_5 = arith.constant dense<0.000000e+00> : vector<256x8xf32>
    %5 = tpu.matmul %2, %4, %cst_5 {dimension_numbers = #tpu.dot_dimension_numbers<[1], [0], [0], [1], [0, 0, 1, 1], [], []>} : vector<256x24xbf16>, vector<24x8xbf16>, vector<256x8xf32> -> vector<256x8xf32>
    %6 = arith.addf %0, %5 : vector<256x8xf32>
    %c0_6 = arith.constant 0 : index
    %c16 = arith.constant 16 : index
    %c0_7 = arith.constant 0 : index
    %7 = vector.load %arg1[%c0_6, %c16, %c0_7] : memref<1x288x24xbf16, #tpu.memory_space<vmem>>, vector<1x256x24xbf16>
    %8 = vector.shape_cast %7 : vector<1x256x24xbf16> to vector<256x24xbf16>
    %c1 = arith.constant 1 : index
    %c0_8 = arith.constant 0 : index
    %c0_9 = arith.constant 0 : index
    %9 = vector.load %arg2[%c1, %c0_8, %c0_9] : memref<3x24x8xbf16, #tpu.memory_space<vmem>>, vector<1x24x8xbf16>
    %10 = vector.shape_cast %9 : vector<1x24x8xbf16> to vector<24x8xbf16>
    %cst_10 = arith.constant dense<0.000000e+00> : vector<256x8xf32>
    %11 = tpu.matmul %8, %10, %cst_10 {dimension_numbers = #tpu.dot_dimension_numbers<[1], [0], [0], [1], [0, 0, 1, 1], [], []>} : vector<256x24xbf16>, vector<24x8xbf16>, vector<256x8xf32> -> vector<256x8xf32>
    %12 = arith.addf %6, %11 : vector<256x8xf32>
    %c0_11 = arith.constant 0 : index
    %c32 = arith.constant 32 : index
    %c0_12 = arith.constant 0 : index
    %13 = vector.load %arg1[%c0_11, %c32, %c0_12] : memref<1x288x24xbf16, #tpu.memory_space<vmem>>, vector<1x256x24xbf16>
    %14 = vector.shape_cast %13 : vector<1x256x24xbf16> to vector<256x24xbf16>
    %c2 = arith.constant 2 : index
    %c0_13 = arith.constant 0 : index
    %c0_14 = arith.constant 0 : index
    %15 = vector.load %arg2[%c2, %c0_13, %c0_14] : memref<3x24x8xbf16, #tpu.memory_space<vmem>>, vector<1x24x8xbf16>
    %16 = vector.shape_cast %15 : vector<1x24x8xbf16> to vector<24x8xbf16>
    %cst_15 = arith.constant dense<0.000000e+00> : vector<256x8xf32>
    %17 = tpu.matmul %14, %16, %cst_15 {dimension_numbers = #tpu.dot_dimension_numbers<[1], [0], [0], [1], [0, 0, 1, 1], [], []>} : vector<256x24xbf16>, vector<24x8xbf16>, vector<256x8xf32> -> vector<256x8xf32>
    %18 = arith.addf %12, %17 : vector<256x8xf32>
    %c0_16 = arith.constant 0 : index
    %c0_17 = arith.constant 0 : index
    %19 = vector.load %arg3[%c0_16, %c0_17] : memref<1x8xf32, #tpu.memory_space<vmem>>, vector<1x8xf32>
    %20 = vector.broadcast %19 : vector<1x8xf32> to vector<256x8xf32>
    %21 = arith.addf %18, %20 : vector<256x8xf32>
    %cst_18 = arith.constant 0.000000e+00 : f32
    %22 = vector.broadcast %cst_18 : f32 to vector<256x8xf32>
    %23 = arith.cmpf oge, %21, %22 : vector<256x8xf32>
    %cst_19 = arith.constant 1.000000e-01 : f32
    %24 = vector.broadcast %cst_19 : f32 to vector<256x8xf32>
    %25 = arith.mulf %21, %24 : vector<256x8xf32>
    %26 = arith.select %23, %21, %25 : vector<256x8xi1>, vector<256x8xf32>
    %c0_20 = arith.constant 0 : index
    %c0_21 = arith.constant 0 : index
    %c0_22 = arith.constant 0 : index
    %27 = vector.load %arg4[%c0_20, %c0_21, %c0_22] : memref<1x256x8xf32, #tpu.memory_space<vmem>>, vector<1x256x8xf32>
    %28 = vector.shape_cast %27 : vector<1x256x8xf32> to vector<256x8xf32>
    %29 = vector.shape_cast %26 : vector<256x8xf32> to vector<1x256x8xf32>
    tpu.vector_store %arg4[%c0_20, %c0_21, %c0_22], %29 {strides = array<i32>} : memref<1x256x8xf32, #tpu.memory_space<vmem>>, vector<1x256x8xf32>,
    return
  }
  func.func @transform_0(%arg0: i32) -> (i32, i32, i32) {
    %c0_i32 = arith.constant 0 : i32
    %c0_i32_0 = arith.constant 0 : i32
    %c0_i32_1 = arith.constant 0 : i32
    return %arg0, %c0_i32, %c0_i32_0 : i32, i32, i32
  }
  func.func @transform_1(%arg0: i32) -> (i32, i32, i32) {
    %c0_i32 = arith.constant 0 : i32
    %c0_i32_0 = arith.constant 0 : i32
    %c0_i32_1 = arith.constant 0 : i32
    %c0_i32_2 = arith.constant 0 : i32
    return %c0_i32, %c0_i32_0, %c0_i32_1 : i32, i32, i32
  }
  func.func @transform_2(%arg0: i32) -> (i32, i32) {
    %c0_i32 = arith.constant 0 : i32
    %c0_i32_0 = arith.constant 0 : i32
    %c0_i32_1 = arith.constant 0 : i32
    return %c0_i32, %c0_i32_0 : i32, i32
  }
  func.func @transform_3(%arg0: i32) -> (i32, i32, i32) {
    %c0_i32 = arith.constant 0 : i32
    %c0_i32_0 = arith.constant 0 : i32
    %c0_i32_1 = arith.constant 0 : i32
    return %arg0, %c0_i32, %c0_i32_0 : i32, i32, i32
  }
}

module attributes {stable_mosaic.version = 11 : i64} {
  func.func @kernel(%arg0: i32, %arg1: memref<1x288x24xbf16, #tpu.memory_space<vmem>>, %arg2: memref<3x24x8xbf16, #tpu.memory_space<vmem>>, %arg3: memref<1x8xf32, #tpu.memory_space<vmem>>, %arg4: memref<1x256x8xf32, #tpu.memory_space<vmem>>, %arg5: memref<1x256x8xf32, #tpu.memory_space<vmem>>) attributes {dimension_semantics = [#tpu.dimension_semantics<parallel>], iteration_bounds = array<i64: 2>, scalar_prefetch = 0 : i64, scratch_operands = 0 : i64, tpu.core_type = #tpu.core_type<tc>, window_params = [{transform_indices = @transform_0, window_bounds = array<i64: 1, 288, 24>}, {pipeline_mode = #tpu.pipeline_mode<synchronous>, transform_indices = @transform_1, window_bounds = array<i64: 3, 24, 8>}, {pipeline_mode = #tpu.pipeline_mode<synchronous>, transform_indices = @transform_2, window_bounds = array<i64: 1, 8>}, {transform_indices = @transform_3, window_bounds = array<i64: 1, 256, 8>}, {transform_indices = @transform_4, window_bounds = array<i64: 1, 256, 8>}]} {
    %cst = arith.constant 0.000000e+00 : f32
    %0 = vector.broadcast %cst : f32 to vector<256x8xf32>
    %c0 = arith.constant 0 : index
    %c0_0 = arith.constant 0 : index
    %c0_1 = arith.constant 0 : index
    %1 = vector.load %arg1[%c0, %c0_0, %c0_1] : memref<1x288x24xbf16, #tpu.memory_space<vmem>>, vector<1x256x24xbf16>
    %2 = vector.shape_cast %1 : vector<1x256x24xbf16> to vector<256x24xbf16>
    %c0_2 = arith.constant 0 : index
    %c0_3 = arith.constant 0 : index
    %c0_4 = arith.constant 0 : index
    %3 = vector.load %arg2[%c0_2, %c0_3, %c0_4] : memref<3x24x8xbf16, #tpu.memory_space<vmem>>, vector<1x24x8xbf16>
    %4 = vector.shape_cast %3 : vector<1x24x8xbf16> to vector<24x8xbf16>
    %cst_5 = arith.constant dense<0.000000e+00> : vector<256x8xf32>
    %5 = tpu.matmul %2, %4, %cst_5 {dimension_numbers = #tpu.dot_dimension_numbers<[1], [0], [0], [1], [0, 0, 1, 1], [], []>} : vector<256x24xbf16>, vector<24x8xbf16>, vector<256x8xf32> -> vector<256x8xf32>
    %6 = arith.addf %0, %5 : vector<256x8xf32>
    %c0_6 = arith.constant 0 : index
    %c16 = arith.constant 16 : index
    %c0_7 = arith.constant 0 : index
    %7 = vector.load %arg1[%c0_6, %c16, %c0_7] : memref<1x288x24xbf16, #tpu.memory_space<vmem>>, vector<1x256x24xbf16>
    %8 = vector.shape_cast %7 : vector<1x256x24xbf16> to vector<256x24xbf16>
    %c1 = arith.constant 1 : index
    %c0_8 = arith.constant 0 : index
    %c0_9 = arith.constant 0 : index
    %9 = vector.load %arg2[%c1, %c0_8, %c0_9] : memref<3x24x8xbf16, #tpu.memory_space<vmem>>, vector<1x24x8xbf16>
    %10 = vector.shape_cast %9 : vector<1x24x8xbf16> to vector<24x8xbf16>
    %cst_10 = arith.constant dense<0.000000e+00> : vector<256x8xf32>
    %11 = tpu.matmul %8, %10, %cst_10 {dimension_numbers = #tpu.dot_dimension_numbers<[1], [0], [0], [1], [0, 0, 1, 1], [], []>} : vector<256x24xbf16>, vector<24x8xbf16>, vector<256x8xf32> -> vector<256x8xf32>
    %12 = arith.addf %6, %11 : vector<256x8xf32>
    %c0_11 = arith.constant 0 : index
    %c32 = arith.constant 32 : index
    %c0_12 = arith.constant 0 : index
    %13 = vector.load %arg1[%c0_11, %c32, %c0_12] : memref<1x288x24xbf16, #tpu.memory_space<vmem>>, vector<1x256x24xbf16>
    %14 = vector.shape_cast %13 : vector<1x256x24xbf16> to vector<256x24xbf16>
    %c2 = arith.constant 2 : index
    %c0_13 = arith.constant 0 : index
    %c0_14 = arith.constant 0 : index
    %15 = vector.load %arg2[%c2, %c0_13, %c0_14] : memref<3x24x8xbf16, #tpu.memory_space<vmem>>, vector<1x24x8xbf16>
    %16 = vector.shape_cast %15 : vector<1x24x8xbf16> to vector<24x8xbf16>
    %cst_15 = arith.constant dense<0.000000e+00> : vector<256x8xf32>
    %17 = tpu.matmul %14, %16, %cst_15 {dimension_numbers = #tpu.dot_dimension_numbers<[1], [0], [0], [1], [0, 0, 1, 1], [], []>} : vector<256x24xbf16>, vector<24x8xbf16>, vector<256x8xf32> -> vector<256x8xf32>
    %18 = arith.addf %12, %17 : vector<256x8xf32>
    %c0_16 = arith.constant 0 : index
    %c0_17 = arith.constant 0 : index
    %19 = vector.load %arg3[%c0_16, %c0_17] : memref<1x8xf32, #tpu.memory_space<vmem>>, vector<1x8xf32>
    %20 = vector.broadcast %19 : vector<1x8xf32> to vector<256x8xf32>
    %21 = arith.addf %18, %20 : vector<256x8xf32>
    %c0_18 = arith.constant 0 : index
    %c0_19 = arith.constant 0 : index
    %c0_20 = arith.constant 0 : index
    %22 = vector.load %arg4[%c0_18, %c0_19, %c0_20] : memref<1x256x8xf32, #tpu.memory_space<vmem>>, vector<1x256x8xf32>
    %23 = vector.shape_cast %22 : vector<1x256x8xf32> to vector<256x8xf32>
    %24 = arith.addf %21, %23 : vector<256x8xf32>
    %c0_21 = arith.constant 0 : index
    %c0_22 = arith.constant 0 : index
    %c0_23 = arith.constant 0 : index
    %25 = vector.load %arg5[%c0_21, %c0_22, %c0_23] : memref<1x256x8xf32, #tpu.memory_space<vmem>>, vector<1x256x8xf32>
    %26 = vector.shape_cast %25 : vector<1x256x8xf32> to vector<256x8xf32>
    %27 = vector.shape_cast %24 : vector<256x8xf32> to vector<1x256x8xf32>
    tpu.vector_store %arg5[%c0_21, %c0_22, %c0_23], %27 {strides = array<i32>} : memref<1x256x8xf32, #tpu.memory_space<vmem>>, vector<1x256x8xf32>,
    return
  }
  func.func @transform_0(%arg0: i32) -> (i32, i32, i32) {
    %c0_i32 = arith.constant 0 : i32
    %c0_i32_0 = arith.constant 0 : i32
    %c0_i32_1 = arith.constant 0 : i32
    return %arg0, %c0_i32, %c0_i32_0 : i32, i32, i32
  }
  func.func @transform_1(%arg0: i32) -> (i32, i32, i32) {
    %c0_i32 = arith.constant 0 : i32
    %c0_i32_0 = arith.constant 0 : i32
    %c0_i32_1 = arith.constant 0 : i32
    %c0_i32_2 = arith.constant 0 : i32
    return %c0_i32, %c0_i32_0, %c0_i32_1 : i32, i32, i32
  }
  func.func @transform_2(%arg0: i32) -> (i32, i32) {
    %c0_i32 = arith.constant 0 : i32
    %c0_i32_0 = arith.constant 0 : i32
    %c0_i32_1 = arith.constant 0 : i32
    return %c0_i32, %c0_i32_0 : i32, i32
  }
  func.func @transform_3(%arg0: i32) -> (i32, i32, i32) {
    %c0_i32 = arith.constant 0 : i32
    %c0_i32_0 = arith.constant 0 : i32
    %c0_i32_1 = arith.constant 0 : i32
    return %arg0, %c0_i32, %c0_i32_0 : i32, i32, i32
  }
  func.func @transform_4(%arg0: i32) -> (i32, i32, i32) {
    %c0_i32 = arith.constant 0 : i32
    %c0_i32_0 = arith.constant 0 : i32
    %c0_i32_1 = arith.constant 0 : i32
    return %arg0, %c0_i32, %c0_i32_0 : i32, i32, i32
  }
}

</mosaic_0001>

<llo_original>
// kernel: dgb_forward.6
$region0: #{dgb_forward.6}
  #allocation0 [shape = 'u32[]', space=smem, size = 0x4, offset = 0x4, fixed_abs, tag = 'smem constant byte address 0x4 - core index']
  #allocation1 [shape = 'u32[144,128]{1,0:T(1,128)}', space=vmem, size = 0x12000, scoped, tag = 'internal scratch']
  %s0 = inlined_call_operand.vmem [shape: bf16[2,288,48], index: 0, kind: input, shape index: {}]
  %s1 = inlined_call_operand.vmem [shape: bf16[3,48,27], index: 1, kind: input, shape index: {}]
  %s2 = inlined_call_operand.vmem [shape: f32[1,27], index: 2, kind: input, shape index: {}]
  %s3 = inlined_call_operand.vmem [shape: f32[2,256,27], index: 3, kind: output, shape index: {}]
  %s4 = sld [smem:[#allocation0]]
  $region45: #{dgb_forward.6} parent=0
    _
  %s6 = ssub.s32 1, %s4
  %s7 = scalar_select 0, %s6, %s4
  loop: start=0, step=1, limit=4
  $region2: #{dgb_forward.6} parent=0 // loop_pre_header
    _
  $region3: #{dgb_forward.6} parent=0 // loop_header
    %s9 = sphi 0, %s13
    %p10 = scmp.ge.s32.totalorder %s9, 4
    %s19 = sphi 0, %s21
    %s22 = sphi 0, %s19
    %s23 = sphi 0, %s22
    %s39 = sphi 0, %s23
    %s43 = sphi 0, %s43
    %s45 = sphi 0, %s43
    %s46 = sphi 0, %s45
    %s60 = sphi 0, %s46
    %s64 = sphi 0, %s64
    %s66 = sphi 0, %s64
    %s67 = sphi 0, %s66
    %s81 = sphi 0, %s67
    %s87 = sphi 0, %s89
    %s90 = sphi 0, %s87
    %s91 = sphi 0, %s90
    %s107 = sphi 0, %s91
  $region4: #{dgb_forward.6} parent=0 // loop_header_branch
    %12 = sbr.rel (%p10) target = $region8
  $region5: #{dgb_forward.6} parent=0 // loop_body
    %s14 = ssub.s32 %s9, 1
    %s15 = ssub.s32 %s9, 2
    %s16 = sadd.s32 %s9, 1
    %s17 = ssub.s32 %s9, %s16
    %p18 = scmp.eq.s32.totalorder %s17, 0
    %s20 = sadd.s32 %s19, 1
    %s21 = scalar_select %p18, %s19, %s20
    %p24 = pneg %p18
    %p25 = scmp.eq.s32.totalorder %s9, 1
    %p26 = por %p24, %p25
    %p27 = scmp.ne.s32.totalorder %s19, %s22
    %p28 = scmp.eq.s32.totalorder %s9, 0
    %p29 = por %p27, %p28
    %p30 = scmp.ne.s32.totalorder %s19, %s22
    %p31 = scmp.eq.s32.totalorder %s14, 1
    %p32 = por %p30, %p31
    %p33 = scmp.ne.s32.totalorder %s22, %s23
    %p34 = scmp.eq.s32.totalorder %s14, 0
    %p35 = por %p33, %p34
    %p36 = scmp.ne.s32.totalorder %s22, %s23
    %p37 = scmp.eq.s32.totalorder %s15, 1
    %p38 = por %p36, %p37
    %p40 = scmp.ne.s32.totalorder %s23, %s39
    %p41 = scmp.eq.s32.totalorder %s15, 0
    %p42 = por %p40, %p41
    %s44 = sadd.s32 %s43, 1
    %p47 = scmp.eq.s32.totalorder %s9, 1
    %p48 = scmp.ne.s32.totalorder %s43, %s45
    %p49 = scmp.eq.s32.totalorder %s9, 0
    %p50 = por %p48, %p49
    %p51 = scmp.ne.s32.totalorder %s43, %s45
    %p52 = scmp.eq.s32.totalorder %s14, 1
    %p53 = por %p51, %p52
    %p54 = scmp.ne.s32.totalorder %s45, %s46
    %p55 = scmp.eq.s32.totalorder %s14, 0
    %p56 = por %p54, %p55
    %p57 = scmp.ne.s32.totalorder %s45, %s46
    %p58 = scmp.eq.s32.totalorder %s15, 1
    %p59 = por %p57, %p58
    %p61 = scmp.ne.s32.totalorder %s46, %s60
    %p62 = scmp.eq.s32.totalorder %s15, 0
    %p63 = por %p61, %p62
    %s65 = sadd.s32 %s64, 1
    %p68 = scmp.eq.s32.totalorder %s9, 1
    %p69 = scmp.ne.s32.totalorder %s64, %s66
    %p70 = scmp.eq.s32.totalorder %s9, 0
    %p71 = por %p69, %p70
    %p72 = scmp.ne.s32.totalorder %s64, %s66
    %p73 = scmp.eq.s32.totalorder %s14, 1
    %p74 = por %p72, %p73
    %p75 = scmp.ne.s32.totalorder %s66, %s67
    %p76 = scmp.eq.s32.totalorder %s14, 0
    %p77 = por %p75, %p76
    %p78 = scmp.ne.s32.totalorder %s66, %s67
    %p79 = scmp.eq.s32.totalorder %s15, 1
    %p80 = por %p78, %p79
    %p82 = scmp.ne.s32.totalorder %s67, %s81
    %p83 = scmp.eq.s32.totalorder %s15, 0
    %p84 = por %p82, %p83
    %s85 = ssub.s32 %s9, %s16
    %p86 = scmp.eq.s32.totalorder %s85, 0
    %s88 = sadd.s32 %s87, 1
    %s89 = scalar_select %p86, %s87, %s88
    %p92 = pneg %p86
    %p93 = scmp.eq.s32.totalorder %s9, 1
    %p94 = por %p92, %p93
    %p95 = scmp.ne.s32.totalorder %s87, %s90
    %p96 = scmp.eq.s32.totalorder %s9, 0
    %p97 = por %p95, %p96
    %p98 = scmp.ne.s32.totalorder %s87, %s90
    %p99 = scmp.eq.s32.totalorder %s14, 1
    %p100 = por %p98, %p99
    %p101 = scmp.ne.s32.totalorder %s90, %s91
    %p102 = scmp.eq.s32.totalorder %s14, 0
    %p103 = por %p101, %p102
    %p104 = scmp.ne.s32.totalorder %s90, %s91
    %p105 = scmp.eq.s32.totalorder %s15, 1
    %p106 = por %p104, %p105
    %p108 = scmp.ne.s32.totalorder %s91, %s107
    %p109 = scmp.eq.s32.totalorder %s15, 0
    %p110 = por %p108, %p109
    %p111 = scmp.le.s32.totalorder 1, %s9
    %p112 = scmp.lt.s32.totalorder %s9, 3
    %p113 = pnand %p111, %p112
    %p114 = pneg %p113
    // Predicated region
    $region9: #{dgb_forward.6} parent=5 // pred_check
      _
    $region10: #{dgb_forward.6} parent=5 // pred_check_branch
      %116 = sbr.rel (%p113) target = $region12
    $region11: #{dgb_forward.6} parent=5 // pred_region
      %s117 = ssub.s32 %s9, 1
      // Predicated region
      $region13: #{dgb_forward.6} parent=11 // pred_check
        %p118 = pneg %p56
      $region14: #{dgb_forward.6} parent=11 // pred_check_branch
        %120 = sbr.rel (%p118) target = $region16
      $region15: #{dgb_forward.6} parent=11 // pred_region
        _
      $region16: #{dgb_forward.6} parent=11 // pred_fallthru
        _
      // Predicated region
      $region17: #{dgb_forward.6} parent=11 // pred_check
        %p121 = pneg %p77
      $region18: #{dgb_forward.6} parent=11 // pred_check_branch
        %123 = sbr.rel (%p121) target = $region20
      $region19: #{dgb_forward.6} parent=11 // pred_region
        _
      $region20: #{dgb_forward.6} parent=11 // pred_fallthru
        _
    $region12: #{dgb_forward.6} parent=5 // pred_fallthru
      _
    %p124 = scmp.lt.s32.totalorder %s9, 2
    // Predicated region
    $region21: #{dgb_forward.6} parent=5 // pred_check
      %p125 = pneg %p124
    $region22: #{dgb_forward.6} parent=5 // pred_check_branch
      %127 = sbr.rel (%p125) target = $region24
    $region23: #{dgb_forward.6} parent=5 // pred_region
      // Predicated region
      $region25: #{dgb_forward.6} parent=23 // pred_check
        %p128 = pneg %p29
      $region26: #{dgb_forward.6} parent=23 // pred_check_branch
        %130 = sbr.rel (%p128) target = $region28
      $region27: #{dgb_forward.6} parent=23 // pred_region
        %p131 = scmp.lt.s32.totalorder %s9, 1
        %s132 = scalar_select %p131, %s9, 1
        %s133 = smul.addr %s132, 36
        %s134 = smul.addr %s133, 4
        %s135 = scalar_lea.vmem %s0, %s134
      $region28: #{dgb_forward.6} parent=23 // pred_fallthru
        _
    $region24: #{dgb_forward.6} parent=5 // pred_fallthru
      _
    %p136 = scmp.le.s32.totalorder 1, %s9
    %p137 = scmp.lt.s32.totalorder %s9, 3
    %p138 = pnand %p136, %p137
    %p139 = pneg %p138
    // Predicated region
    $region29: #{dgb_forward.6} parent=5 // pred_check
      _
    $region30: #{dgb_forward.6} parent=5 // pred_check_branch
      %141 = sbr.rel (%p138) target = $region32
    $region31: #{dgb_forward.6} parent=5 // pred_region
      %s142 = ssub.s32 %s9, 1
      %p143 = scmp.lt.s32.totalorder %s14, 1
      %s144 = scalar_select %p143, %s14, 1
      %s145 = smul.addr %s144, 36
      %s146 = smul.addr %s145, 4
      %s147 = scalar_lea.vmem %s0, %s146
      %p148 = pneg %p35
      %p149 = pneg %p32
      %p150 = pneg %p56
      %p151 = pneg %p53
      %p152 = pneg %p77
      %p153 = pneg %p74
      %p154 = pneg %p103
      %p155 = pneg %p100
      %p156 = scmp.lt.s32.totalorder %s14, 1
      %s157 = scalar_select %p156, %s14, 1
      %s158 = smul.addr %s157, 32
      %s159 = smul.addr %s158, 8
      %s160 = scalar_lea.vmem %s3, %s159
      %p161 = scmp.lt.s32.totalorder %s14, 1
      %s162 = scalar_select %p161, %s14, 1
      %s163 = smul.addr %s162, 36
      %s164 = smul.addr %s163, 4
      %s165 = scalar_lea.vmem %s0, %s164
      %p166 = scmp.lt.s32.totalorder %s14, 1
      %s167 = scalar_select %p166, %s14, 1
      %s168 = smul.addr %s167, 32
      %s169 = smul.addr %s168, 8
      %s170 = scalar_lea.vmem %s3, %s169
      %v172 = vld [vmem:[%s165] sm:$0xf]
      %v173 = vld [vmem:[%s165 + $0x4] sm:$0xf]
      %v174 = vld [vmem:[%s165 + $0x8] sm:$0xf]
      %v175 = vld [vmem:[%s165 + $0xc] sm:$0xf]
      %v176 = vld [vmem:[%s165 + $0x10] sm:$0xf]
      %v177 = vld [vmem:[%s165 + $0x14] sm:$0xf]
      %v178 = vld [vmem:[%s165 + $0x18] sm:$0xf]
      %v179 = vld [vmem:[%s165 + $0x1c] sm:$0xf]
      %v180 = vld [vmem:[%s165 + $0x20] sm:$0xf]
      %v181 = vld [vmem:[%s165 + $0x24] sm:$0xf]
      %v182 = vld [vmem:[%s165 + $0x28] sm:$0xf]
      %v183 = vld [vmem:[%s165 + $0x2c] sm:$0xf]
      %v184 = vld [vmem:[%s165 + $0x30] sm:$0xf]
      %v185 = vld [vmem:[%s165 + $0x34] sm:$0xf]
      %v186 = vld [vmem:[%s165 + $0x38] sm:$0xf]
      %v187 = vld [vmem:[%s165 + $0x3c] sm:$0xf]
      %v188 = vld [vmem:[%s165 + $0x40] sm:$0xf]
      %v189 = vld [vmem:[%s165 + $0x44] sm:$0xf]
      %v190 = vld [vmem:[%s165 + $0x48] sm:$0xf]
      %v191 = vld [vmem:[%s165 + $0x4c] sm:$0xf]
      %v192 = vld [vmem:[%s165 + $0x50] sm:$0xf]
      %v193 = vld [vmem:[%s165 + $0x54] sm:$0xf]
      %v194 = vld [vmem:[%s165 + $0x58] sm:$0xf]
      %v195 = vld [vmem:[%s165 + $0x5c] sm:$0xf]
      %v196 = vld [vmem:[%s165 + $0x60] sm:$0xf]
      %v197 = vld [vmem:[%s165 + $0x64] sm:$0xf]
      %v198 = vld [vmem:[%s165 + $0x68] sm:$0xf]
      %v199 = vld [vmem:[%s165 + $0x6c] sm:$0xf]
      %v200 = vld [vmem:[%s165 + $0x70] sm:$0xf]
      %v201 = vld [vmem:[%s165 + $0x74] sm:$0xf]
      %v202 = vld [vmem:[%s165 + $0x78] sm:$0xf]
      %v203 = vld [vmem:[%s165 + $0x7c] sm:$0xf]
      %v204 = vld [vmem:[%s1] sm:$0xf]
      %v205 = vld [vmem:[%s1 + $0x4] sm:$0xf]
      %v206 = vld [vmem:[%s1 + $0x8] sm:$0xf]
      %v207 = vld [vmem:[%s1 + $0xc] sm:$0xf]
      %v208 = vld [vmem:[%s1 + $0x10] sm:$0xf]
      %v209 = vld [vmem:[%s1 + $0x14] sm:$0xf]
      %v210 = vld [vmem:[%s165 + $0x80] sm:$0xf]
      %v211 = vld [vmem:[%s165 + $0x84] sm:$0xf]
      %s212 = scalar_lea.vmem %s1, 24
      %v213 = vld [vmem:[%s212] sm:$0xf]
      %v214 = vld [vmem:[%s212 + $0x4] sm:$0xf]
      %v215 = vld [vmem:[%s212 + $0x8] sm:$0xf]
      %v216 = vld [vmem:[%s212 + $0xc] sm:$0xf]
      %v217 = vld [vmem:[%s212 + $0x10] sm:$0xf]
      %v218 = vld [vmem:[%s212 + $0x14] sm:$0xf]
      %v251 = vunpack.c.l.b16 %v174
      %v252 = vunpack.c.l.b16 %v175
      %v253 = vunpack.c.l.b16 %v176
      %v254 = vunpack.c.l.b16 %v177
      %v255 = vunpack.c.l.b16 %v178
      %v256 = vunpack.c.l.b16 %v179
      %v257 = vunpack.c.l.b16 %v180
      %v258 = vunpack.c.l.b16 %v181
      %v259 = vunpack.c.l.b16 %v182
      %v260 = vunpack.c.l.b16 %v183
      %v261 = vunpack.c.l.b16 %v184
      %v262 = vunpack.c.l.b16 %v185
      %v263 = vunpack.c.l.b16 %v186
      %v264 = vunpack.c.l.b16 %v187
      %v265 = vunpack.c.l.b16 %v188
      %v266 = vunpack.c.l.b16 %v189
      %v267 = vunpack.c.l.b16 %v190
      %v268 = vunpack.c.l.b16 %v191
      %v269 = vunpack.c.l.b16 %v192
      %v270 = vunpack.c.l.b16 %v193
      %v271 = vunpack.c.l.b16 %v194
      %v272 = vunpack.c.l.b16 %v195
      %v273 = vunpack.c.l.b16 %v196
      %v274 = vunpack.c.l.b16 %v197
      %v275 = vunpack.c.l.b16 %v198
      %v276 = vunpack.c.l.b16 %v199
      %v277 = vunpack.c.l.b16 %v200
      %v278 = vunpack.c.l.b16 %v201
      %v279 = vunpack.c.l.b16 %v202
      %v280 = vunpack.c.l.b16 %v203
      %v281 = vunpack.c.l.b16 %v210
      %v282 = vunpack.c.l.b16 %v211
      %v283 = vpack.c.b16 %v252, %v251
      %v284 = vpack.c.b16 %v254, %v253
      %v285 = vpack.c.b16 %v256, %v255
      %v286 = vpack.c.b16 %v258, %v257
      %v287 = vpack.c.b16 %v260, %v259
      %v288 = vpack.c.b16 %v262, %v261
      %v289 = vpack.c.b16 %v264, %v263
      %v290 = vpack.c.b16 %v266, %v265
      %v291 = vpack.c.b16 %v268, %v267
      %v292 = vpack.c.b16 %v270, %v269
      %v293 = vpack.c.b16 %v272, %v271
      %v294 = vpack.c.b16 %v274, %v273
      %v295 = vpack.c.b16 %v276, %v275
      %v296 = vpack.c.b16 %v278, %v277
      %v297 = vpack.c.b16 %v280, %v279
      %v298 = vpack.c.b16 %v282, %v281
      %v305 = vunpack.c.l.b16 %v213
      %v306 = vunpack.c.l.b16 %v214
      %v307 = vunpack.c.l.b16 %v215
      %v308 = vunpack.c.l.b16 %v216
      %v309 = vunpack.c.l.b16 %v217
      %v310 = vunpack.c.l.b16 %v218
      %v311 = vpack.c.b16 %v306, %v305
      %v312 = vpack.c.b16 %v308, %v307
      %v313 = vpack.c.b16 %v310, %v309
      %vm317 = vcmask 392192
      %v319 = vsel %vm317, %v283, 0
      %v322 = vsel %vm317, %v284, 0
      %v325 = vsel %vm317, %v285, 0
      %v328 = vsel %vm317, %v286, 0
      %v331 = vsel %vm317, %v287, 0
      %v334 = vsel %vm317, %v288, 0
      %v337 = vsel %vm317, %v289, 0
      %v340 = vsel %vm317, %v290, 0
      %v343 = vsel %vm317, %v291, 0
      %v346 = vsel %vm317, %v292, 0
      %v349 = vsel %vm317, %v293, 0
      %v352 = vsel %vm317, %v294, 0
      %v355 = vsel %vm317, %v295, 0
      %v358 = vsel %vm317, %v296, 0
      %v361 = vsel %vm317, %v297, 0
      %v364 = vsel %vm317, %v298, 0
      %366 = vmatprep.subr.bf16.mxu0 0
      %367 = vmatpush1.bf16.msra.mxu0 %v311
      %368 = vmatprep.subr.bf16.mxu0 0
      %369 = vmatpush1.bf16.msra.mxu0 %v312
      %370 = vmatprep.subr.bf16.mxu0 0
      %371 = vmatpush1.bf16.msra.mxu0 %v313
      %372 = vmatprep.subr.bf16.mxu0 0
      %373 = vmatpush1.bf16.msra.mxu0 0
      %374 = vmatprep.subr.bf16.mxu0 0
      %375 = vmatpush1.bf16.msra.mxu0 0
      %376 = vmatprep.subr.bf16.mxu0 0
      %377 = vmatpush1.bf16.msra.mxu0 0
      %378 = vmatprep.subr.bf16.mxu0 0
      %379 = vmatpush1.bf16.msra.mxu0 0
      %380 = vmatprep.subr.bf16.mxu0 0
      %381 = vmatpush1.bf16.msra.mxu0 0
      %382 = vmatprep.subr.bf16.mxu0 0
      %383 = vmatpush1.bf16.msra.mxu0 0
      %384 = vmatprep.subr.bf16.mxu0 0
      %385 = vmatpush1.bf16.msra.mxu0 0
      %386 = vmatprep.subr.bf16.mxu0 0
      %387 = vmatpush1.bf16.msra.mxu0 0
      %388 = vmatprep.subr.bf16.mxu0 0
      %389 = vmatpush1.bf16.msra.mxu0 0
      %390 = vmatprep.subr.bf16.mxu0 0
      %391 = vmatpush1.bf16.msra.mxu0 0
      %392 = vmatprep.subr.bf16.mxu0 0
      %393 = vmatpush1.bf16.msra.mxu0 0
      %394 = vmatprep.subr.bf16.mxu0 0
      %395 = vmatpush1.bf16.msra.mxu0 0
      %396 = vmatprep.subr.bf16.mxu0 0
      %397 = vmatpush1.bf16.msra.mxu0 0
      %398 = vmatprep.mubr.bf16.mxu0 0
      %399 = vmatmul.mubr.bf16.gmra.mrb[0].mxu0 %v319
      %v400 = vpop.f32.mrb[0].mxu0
      %v401 = vadd.f32 0.0, %v400
      %v402 = vpop.f32.mrb[0].mxu0
      %v403 = vpop.f32.mrb[0].mxu0
      %v404 = vadd.f32 0.0, %v403
      %v405 = vpop.f32.mrb[0].mxu0
      %406 = vmatprep.mubr.bf16.mxu0 0
      %407 = vmatmul.mubr.bf16.gmra.mrb[0].mxu0 %v322
      %v408 = vpop.f32.mrb[0].mxu0
      %v409 = vadd.f32 0.0, %v408
      %v410 = vpop.f32.mrb[0].mxu0
      %v411 = vpop.f32.mrb[0].mxu0
      %v412 = vadd.f32 0.0, %v411
      %v413 = vpop.f32.mrb[0].mxu0
      %414 = vmatprep.mubr.bf16.mxu0 0
      %415 = vmatmul.mubr.bf16.gmra.mrb[0].mxu0 %v325
      %v416 = vpop.f32.mrb[0].mxu0
      %v417 = vadd.f32 0.0, %v416
      %v418 = vpop.f32.mrb[0].mxu0
      %v419 = vpop.f32.mrb[0].mxu0
      %v420 = vadd.f32 0.0, %v419
      %v421 = vpop.f32.mrb[0].mxu0
      %422 = vmatprep.mubr.bf16.mxu0 0
      %423 = vmatmul.mubr.bf16.gmra.mrb[0].mxu0 %v328
      %v424 = vpop.f32.mrb[0].mxu0
      %v425 = vadd.f32 0.0, %v424
      %v426 = vpop.f32.mrb[0].mxu0
      %v427 = vpop.f32.mrb[0].mxu0
      %v428 = vadd.f32 0.0, %v427
      %v429 = vpop.f32.mrb[0].mxu0
      %430 = vmatprep.mubr.bf16.mxu0 0
      %431 = vmatmul.mubr.bf16.gmra.mrb[0].mxu0 %v331
      %v432 = vpop.f32.mrb[0].mxu0
      %v433 = vadd.f32 0.0, %v432
      %v434 = vpop.f32.mrb[0].mxu0
      %v435 = vpop.f32.mrb[0].mxu0
      %v436 = vadd.f32 0.0, %v435
      %v437 = vpop.f32.mrb[0].mxu0
      %438 = vmatprep.mubr.bf16.mxu0 0
      %439 = vmatmul.mubr.bf16.gmra.mrb[0].mxu0 %v334
      %v440 = vpop.f32.mrb[0].mxu0
      %v441 = vadd.f32 0.0, %v440
      %v442 = vpop.f32.mrb[0].mxu0
      %v443 = vpop.f32.mrb[0].mxu0
      %v444 = vadd.f32 0.0, %v443
      %v445 = vpop.f32.mrb[0].mxu0
      %446 = vmatprep.mubr.bf16.mxu0 0
      %447 = vmatmul.mubr.bf16.gmra.mrb[0].mxu0 %v337
      %v448 = vpop.f32.mrb[0].mxu0
      %v449 = vadd.f32 0.0, %v448
      %v450 = vpop.f32.mrb[0].mxu0
      %v451 = vpop.f32.mrb[0].mxu0
      %v452 = vadd.f32 0.0, %v451
      %v453 = vpop.f32.mrb[0].mxu0
      %454 = vmatprep.mubr.bf16.mxu0 0
      %455 = vmatmul.mubr.bf16.gmra.mrb[0].mxu0 %v340
      %v456 = vpop.f32.mrb[0].mxu0
      %v457 = vadd.f32 0.0, %v456
      %v458 = vpop.f32.mrb[0].mxu0
      %v459 = vpop.f32.mrb[0].mxu0
      %v460 = vadd.f32 0.0, %v459
      %v461 = vpop.f32.mrb[0].mxu0
      %462 = vmatprep.mubr.bf16.mxu0 0
      %463 = vmatmul.mubr.bf16.gmra.mrb[0].mxu0 %v343
      %v464 = vpop.f32.mrb[0].mxu0
      %v465 = vadd.f32 0.0, %v464
      %v466 = vpop.f32.mrb[0].mxu0
      %v467 = vpop.f32.mrb[0].mxu0
      %v468 = vadd.f32 0.0, %v467
      %v469 = vpop.f32.mrb[0].mxu0
      %470 = vmatprep.mubr.bf16.mxu0 0
      %471 = vmatmul.mubr.bf16.gmra.mrb[0].mxu0 %v346
      %v472 = vpop.f32.mrb[0].mxu0
      %v473 = vadd.f32 0.0, %v472
      %v474 = vpop.f32.mrb[0].mxu0
      %v475 = vpop.f32.mrb[0].mxu0
      %v476 = vadd.f32 0.0, %v475
      %v477 = vpop.f32.mrb[0].mxu0
      %478 = vmatprep.mubr.bf16.mxu0 0
      %479 = vmatmul.mubr.bf16.gmra.mrb[0].mxu0 %v349
      %v480 = vpop.f32.mrb[0].mxu0
      %v481 = vadd.f32 0.0, %v480
      %v482 = vpop.f32.mrb[0].mxu0
      %v483 = vpop.f32.mrb[0].mxu0
      %v484 = vadd.f32 0.0, %v483
      %v485 = vpop.f32.mrb[0].mxu0
      %486 = vmatprep.mubr.bf16.mxu0 0
      %487 = vmatmul.mubr.bf16.gmra.mrb[0].mxu0 %v352
      %v488 = vpop.f32.mrb[0].mxu0
      %v489 = vadd.f32 0.0, %v488
      %v490 = vpop.f32.mrb[0].mxu0
      %v491 = vpop.f32.mrb[0].mxu0
      %v492 = vadd.f32 0.0, %v491
      %v493 = vpop.f32.mrb[0].mxu0
      %494 = vmatprep.mubr.bf16.mxu0 0
      %495 = vmatmul.mubr.bf16.gmra.mrb[0].mxu0 %v355
      %v496 = vpop.f32.mrb[0].mxu0
      %v497 = vadd.f32 0.0, %v496
      %v498 = vpop.f32.mrb[0].mxu0
      %v499 = vpop.f32.mrb[0].mxu0
      %v500 = vadd.f32 0.0, %v499
      %v501 = vpop.f32.mrb[0].mxu0
      %502 = vmatprep.mubr.bf16.mxu0 0
      %503 = vmatmul.mubr.bf16.gmra.mrb[0].mxu0 %v358
      %v504 = vpop.f32.mrb[0].mxu0
      %v505 = vadd.f32 0.0, %v504
      %v506 = vpop.f32.mrb[0].mxu0
      %v507 = vpop.f32.mrb[0].mxu0
      %v508 = vadd.f32 0.0, %v507
      %v509 = vpop.f32.mrb[0].mxu0
      %510 = vmatprep.mubr.bf16.mxu0 0
      %511 = vmatmul.mubr.bf16.gmra.mrb[0].mxu0 %v361
      %v512 = vpop.f32.mrb[0].mxu0
      %v513 = vadd.f32 0.0, %v512
      %v514 = vpop.f32.mrb[0].mxu0
      %v515 = vpop.f32.mrb[0].mxu0
      %v516 = vadd.f32 0.0, %v515
      %v517 = vpop.f32.mrb[0].mxu0
      %518 = vmatprep.mubr.bf16.mxu0 0
      %519 = vmatmul.mubr.bf16.gmra.mrb[0].mxu0 %v364
      %v520 = vpop.f32.mrb[0].mxu0
      %v521 = vadd.f32 0.0, %v520
      %v522 = vpop.f32.mrb[0].mxu0
      %v523 = vpop.f32.mrb[0].mxu0
      %v524 = vadd.f32 0.0, %v523
      %v525 = vpop.f32.mrb[0].mxu0
      %526 = vdwg.mxu0
      %v529 = vunpack.c.l.b16 %v172
      %v530 = vunpack.c.l.b16 %v173
      %v531 = vpack.c.b16 %v530, %v529
      %v538 = vunpack.c.l.b16 %v204
      %v539 = vunpack.c.l.b16 %v205
      %v540 = vunpack.c.l.b16 %v206
      %v541 = vunpack.c.l.b16 %v207
      %v542 = vunpack.c.l.b16 %v208
      %v543 = vunpack.c.l.b16 %v209
      %v544 = vpack.c.b16 %v539, %v538
      %v545 = vpack.c.b16 %v541, %v540
      %v546 = vpack.c.b16 %v543, %v542
      %v551 = vsel %vm317, %v531, 0
      %553 = vmatprep.subr.bf16.mxu0 0
      %554 = vmatpush1.bf16.msra.mxu0 %v544
      %555 = vmatprep.subr.bf16.mxu0 0
      %556 = vmatpush1.bf16.msra.mxu0 %v545
      %557 = vmatprep.subr.bf16.mxu0 0
      %558 = vmatpush1.bf16.msra.mxu0 %v546
      %559 = vmatprep.subr.bf16.mxu0 0
      %560 = vmatpush1.bf16.msra.mxu0 0
      %561 = vmatprep.subr.bf16.mxu0 0
      %562 = vmatpush1.bf16.msra.mxu0 0
      %563 = vmatprep.subr.bf16.mxu0 0
      %564 = vmatpush1.bf16.msra.mxu0 0
      %565 = vmatprep.subr.bf16.mxu0 0
      %566 = vmatpush1.bf16.msra.mxu0 0
      %567 = vmatprep.subr.bf16.mxu0 0
      %568 = vmatpush1.bf16.msra.mxu0 0
      %569 = vmatprep.subr.bf16.mxu0 0
      %570 = vmatpush1.bf16.msra.mxu0 0
      %571 = vmatprep.subr.bf16.mxu0 0
      %572 = vmatpush1.bf16.msra.mxu0 0
      %573 = vmatprep.subr.bf16.mxu0 0
      %574 = vmatpush1.bf16.msra.mxu0 0
      %575 = vmatprep.subr.bf16.mxu0 0
      %576 = vmatpush1.bf16.msra.mxu0 0
      %577 = vmatprep.subr.bf16.mxu0 0
      %578 = vmatpush1.bf16.msra.mxu0 0
      %579 = vmatprep.subr.bf16.mxu0 0
      %580 = vmatpush1.bf16.msra.mxu0 0
      %581 = vmatprep.subr.bf16.mxu0 0
      %582 = vmatpush1.bf16.msra.mxu0 0
      %583 = vmatprep.subr.bf16.mxu0 0
      %584 = vmatpush1.bf16.msra.mxu0 0
      %585 = vmatprep.mubr.bf16.mxu0 0
      %586 = vmatmul.mubr.bf16.gmra.mrb[0].mxu0 %v551
      %v587 = vpop.f32.mrb[0].mxu0
      %v588 = vadd.f32 %v401, %v587
      %v589 = vpop.f32.mrb[0].mxu0
      %v590 = vpop.f32.mrb[0].mxu0
      %v591 = vadd.f32 %v404, %v590
      %v592 = vpop.f32.mrb[0].mxu0
      %593 = vmatprep.mubr.bf16.mxu0 0
      %594 = vmatmul.mubr.bf16.gmra.mrb[0].mxu0 %v319
      %v595 = vpop.f32.mrb[0].mxu0
      %v596 = vadd.f32 %v409, %v595
      %v597 = vpop.f32.mrb[0].mxu0
      %v598 = vpop.f32.mrb[0].mxu0
      %v599 = vadd.f32 %v412, %v598
      %v600 = vpop.f32.mrb[0].mxu0
      %601 = vmatprep.mubr.bf16.mxu0 0
      %602 = vmatmul.mubr.bf16.gmra.mrb[0].mxu0 %v322
      %v603 = vpop.f32.mrb[0].mxu0
      %v604 = vadd.f32 %v417, %v603
      %v605 = vpop.f32.mrb[0].mxu0
      %v606 = vpop.f32.mrb[0].mxu0
      %v607 = vadd.f32 %v420, %v606
      %v608 = vpop.f32.mrb[0].mxu0
      %609 = vmatprep.mubr.bf16.mxu0 0
      %610 = vmatmul.mubr.bf16.gmra.mrb[0].mxu0 %v325
      %v611 = vpop.f32.mrb[0].mxu0
      %v612 = vadd.f32 %v425, %v611
      %v613 = vpop.f32.mrb[0].mxu0
      %v614 = vpop.f32.mrb[0].mxu0
      %v615 = vadd.f32 %v428, %v614
      %v616 = vpop.f32.mrb[0].mxu0
      %617 = vmatprep.mubr.bf16.mxu0 0
      %618 = vmatmul.mubr.bf16.gmra.mrb[0].mxu0 %v328
      %v619 = vpop.f32.mrb[0].mxu0
      %v620 = vadd.f32 %v433, %v619
      %v621 = vpop.f32.mrb[0].mxu0
      %v622 = vpop.f32.mrb[0].mxu0
      %v623 = vadd.f32 %v436, %v622
      %v624 = vpop.f32.mrb[0].mxu0
      %625 = vmatprep.mubr.bf16.mxu0 0
      %626 = vmatmul.mubr.bf16.gmra.mrb[0].mxu0 %v331
      %v627 = vpop.f32.mrb[0].mxu0
      %v628 = vadd.f32 %v441, %v627
      %v629 = vpop.f32.mrb[0].mxu0
      %v630 = vpop.f32.mrb[0].mxu0
      %v631 = vadd.f32 %v444, %v630
      %v632 = vpop.f32.mrb[0].mxu0
      %633 = vmatprep.mubr.bf16.mxu0 0
      %634 = vmatmul.mubr.bf16.gmra.mrb[0].mxu0 %v334
      %v635 = vpop.f32.mrb[0].mxu0
      %v636 = vadd.f32 %v449, %v635
      %v637 = vpop.f32.mrb[0].mxu0
      %v638 = vpop.f32.mrb[0].mxu0
      %v639 = vadd.f32 %v452, %v638
      %v640 = vpop.f32.mrb[0].mxu0
      %641 = vmatprep.mubr.bf16.mxu0 0
      %642 = vmatmul.mubr.bf16.gmra.mrb[0].mxu0 %v337
      %v643 = vpop.f32.mrb[0].mxu0
      %v644 = vadd.f32 %v457, %v643
      %v645 = vpop.f32.mrb[0].mxu0
      %v646 = vpop.f32.mrb[0].mxu0
      %v647 = vadd.f32 %v460, %v646
      %v648 = vpop.f32.mrb[0].mxu0
      %649 = vmatprep.mubr.bf16.mxu0 0
      %650 = vmatmul.mubr.bf16.gmra.mrb[0].mxu0 %v340
      %v651 = vpop.f32.mrb[0].mxu0
      %v652 = vadd.f32 %v465, %v651
      %v653 = vpop.f32.mrb[0].mxu0
      %v654 = vpop.f32.mrb[0].mxu0
      %v655 = vadd.f32 %v468, %v654
      %v656 = vpop.f32.mrb[0].mxu0
      %657 = vmatprep.mubr.bf16.mxu0 0
      %658 = vmatmul.mubr.bf16.gmra.mrb[0].mxu0 %v343
      %v659 = vpop.f32.mrb[0].mxu0
      %v660 = vadd.f32 %v473, %v659
      %v661 = vpop.f32.mrb[0].mxu0
      %v662 = vpop.f32.mrb[0].mxu0
      %v663 = vadd.f32 %v476, %v662
      %v664 = vpop.f32.mrb[0].mxu0
      %665 = vmatprep.mubr.bf16.mxu0 0
      %666 = vmatmul.mubr.bf16.gmra.mrb[0].mxu0 %v346
      %v667 = vpop.f32.mrb[0].mxu0
      %v668 = vadd.f32 %v481, %v667
      %v669 = vpop.f32.mrb[0].mxu0
      %v670 = vpop.f32.mrb[0].mxu0
      %v671 = vadd.f32 %v484, %v670
      %v672 = vpop.f32.mrb[0].mxu0
      %673 = vmatprep.mubr.bf16.mxu0 0
      %674 = vmatmul.mubr.bf16.gmra.mrb[0].mxu0 %v349
      %v675 = vpop.f32.mrb[0].mxu0
      %v676 = vadd.f32 %v489, %v675
      %v677 = vpop.f32.mrb[0].mxu0
      %v678 = vpop.f32.mrb[0].mxu0
      %v679 = vadd.f32 %v492, %v678
      %v680 = vpop.f32.mrb[0].mxu0
      %681 = vmatprep.mubr.bf16.mxu0 0
      %682 = vmatmul.mubr.bf16.gmra.mrb[0].mxu0 %v352
      %v683 = vpop.f32.mrb[0].mxu0
      %v684 = vadd.f32 %v497, %v683
      %v685 = vpop.f32.mrb[0].mxu0
      %v686 = vpop.f32.mrb[0].mxu0
      %v687 = vadd.f32 %v500, %v686
      %v688 = vpop.f32.mrb[0].mxu0
      %689 = vmatprep.mubr.bf16.mxu0 0
      %690 = vmatmul.mubr.bf16.gmra.mrb[0].mxu0 %v355
      %v691 = vpop.f32.mrb[0].mxu0
      %v692 = vadd.f32 %v505, %v691
      %v693 = vpop.f32.mrb[0].mxu0
      %v694 = vpop.f32.mrb[0].mxu0
      %v695 = vadd.f32 %v508, %v694
      %v696 = vpop.f32.mrb[0].mxu0
      %697 = vmatprep.mubr.bf16.mxu0 0
      %698 = vmatmul.mubr.bf16.gmra.mrb[0].mxu0 %v358
      %v699 = vpop.f32.mrb[0].mxu0
      %v700 = vadd.f32 %v513, %v699
      %v701 = vpop.f32.mrb[0].mxu0
      %v702 = vpop.f32.mrb[0].mxu0
      %v703 = vadd.f32 %v516, %v702
      %v704 = vpop.f32.mrb[0].mxu0
      %705 = vmatprep.mubr.bf16.mxu0 0
      %706 = vmatmul.mubr.bf16.gmra.mrb[0].mxu0 %v361
      %v707 = vpop.f32.mrb[0].mxu0
      %v708 = vadd.f32 %v521, %v707
      %v709 = vpop.f32.mrb[0].mxu0
      %v710 = vpop.f32.mrb[0].mxu0
      %v711 = vadd.f32 %v524, %v710
      %v712 = vpop.f32.mrb[0].mxu0
      %713 = vdwg.mxu0
      %v714 = vld [vmem:[%s165 + $0x10] sm:$0xf]
      %v715 = vld [vmem:[%s165 + $0x14] sm:$0xf]
      %v716 = vld [vmem:[%s165 + $0x18] sm:$0xf]
      %v717 = vld [vmem:[%s165 + $0x1c] sm:$0xf]
      %v718 = vld [vmem:[%s165 + $0x20] sm:$0xf]
      %v719 = vld [vmem:[%s165 + $0x24] sm:$0xf]
      %v720 = vld [vmem:[%s165 + $0x28] sm:$0xf]
      %v721 = vld [vmem:[%s165 + $0x2c] sm:$0xf]
      %v722 = vld [vmem:[%s165 + $0x30] sm:$0xf]
      %v723 = vld [vmem:[%s165 + $0x34] sm:$0xf]
      %v724 = vld [vmem:[%s165 + $0x38] sm:$0xf]
      %v725 = vld [vmem:[%s165 + $0x3c] sm:$0xf]
      %v726 = vld [vmem:[%s165 + $0x40] sm:$0xf]
      %v727 = vld [vmem:[%s165 + $0x44] sm:$0xf]
      %v728 = vld [vmem:[%s165 + $0x48] sm:$0xf]
      %v729 = vld [vmem:[%s165 + $0x4c] sm:$0xf]
      %v730 = vld [vmem:[%s165 + $0x50] sm:$0xf]
      %v731 = vld [vmem:[%s165 + $0x54] sm:$0xf]
      %v732 = vld [vmem:[%s165 + $0x58] sm:$0xf]
      %v733 = vld [vmem:[%s165 + $0x5c] sm:$0xf]
      %v734 = vld [vmem:[%s165 + $0x60] sm:$0xf]
      %v735 = vld [vmem:[%s165 + $0x64] sm:$0xf]
      %v736 = vld [vmem:[%s165 + $0x68] sm:$0xf]
      %v737 = vld [vmem:[%s165 + $0x6c] sm:$0xf]
      %v738 = vld [vmem:[%s165 + $0x70] sm:$0xf]
      %v739 = vld [vmem:[%s165 + $0x74] sm:$0xf]
      %v740 = vld [vmem:[%s165 + $0x78] sm:$0xf]
      %v741 = vld [vmem:[%s165 + $0x7c] sm:$0xf]
      %v742 = vld [vmem:[%s165 + $0x80] sm:$0xf]
      %v743 = vld [vmem:[%s165 + $0x84] sm:$0xf]
      %v744 = vld [vmem:[%s165 + $0x88] sm:$0xf]
      %v745 = vld [vmem:[%s165 + $0x8c] sm:$0xf]
      %s746 = scalar_lea.vmem %s1, 48
      %v747 = vld [vmem:[%s746] sm:$0xf]
      %v748 = vld [vmem:[%s746 + $0x4] sm:$0xf]
      %v749 = vld [vmem:[%s746 + $0x8] sm:$0xf]
      %v750 = vld [vmem:[%s746 + $0xc] sm:$0xf]
      %v751 = vld [vmem:[%s746 + $0x10] sm:$0xf]
      %v752 = vld [vmem:[%s746 + $0x14] sm:$0xf]
      %v785 = vunpack.c.l.b16 %v714
      %v786 = vunpack.c.l.b16 %v715
      %v787 = vunpack.c.l.b16 %v716
      %v788 = vunpack.c.l.b16 %v717
      %v789 = vunpack.c.l.b16 %v718
      %v790 = vunpack.c.l.b16 %v719
      %v791 = vunpack.c.l.b16 %v720
      %v792 = vunpack.c.l.b16 %v721
      %v793 = vunpack.c.l.b16 %v722
      %v794 = vunpack.c.l.b16 %v723
      %v795 = vunpack.c.l.b16 %v724
      %v796 = vunpack.c.l.b16 %v725
      %v797 = vunpack.c.l.b16 %v726
      %v798 = vunpack.c.l.b16 %v727
      %v799 = vunpack.c.l.b16 %v728
      %v800 = vunpack.c.l.b16 %v729
      %v801 = vunpack.c.l.b16 %v730
      %v802 = vunpack.c.l.b16 %v731
      %v803 = vunpack.c.l.b16 %v732
      %v804 = vunpack.c.l.b16 %v733
      %v805 = vunpack.c.l.b16 %v734
      %v806 = vunpack.c.l.b16 %v735
      %v807 = vunpack.c.l.b16 %v736
      %v808 = vunpack.c.l.b16 %v737
      %v809 = vunpack.c.l.b16 %v738
      %v810 = vunpack.c.l.b16 %v739
      %v811 = vunpack.c.l.b16 %v740
      %v812 = vunpack.c.l.b16 %v741
      %v813 = vunpack.c.l.b16 %v742
      %v814 = vunpack.c.l.b16 %v743
      %v815 = vunpack.c.l.b16 %v744
      %v816 = vunpack.c.l.b16 %v745
      %v817 = vpack.c.b16 %v786, %v785
      %v818 = vpack.c.b16 %v788, %v787
      %v819 = vpack.c.b16 %v790, %v789
      %v820 = vpack.c.b16 %v792, %v791
      %v821 = vpack.c.b16 %v794, %v793
      %v822 = vpack.c.b16 %v796, %v795
      %v823 = vpack.c.b16 %v798, %v797
      %v824 = vpack.c.b16 %v800, %v799
      %v825 = vpack.c.b16 %v802, %v801
      %v826 = vpack.c.b16 %v804, %v803
      %v827 = vpack.c.b16 %v806, %v805
      %v828 = vpack.c.b16 %v808, %v807
      %v829 = vpack.c.b16 %v810, %v809
      %v830 = vpack.c.b16 %v812, %v811
      %v831 = vpack.c.b16 %v814, %v813
      %v832 = vpack.c.b16 %v816, %v815
      %v839 = vunpack.c.l.b16 %v747
      %v840 = vunpack.c.l.b16 %v748
      %v841 = vunpack.c.l.b16 %v749
      %v842 = vunpack.c.l.b16 %v750
      %v843 = vunpack.c.l.b16 %v751
      %v844 = vunpack.c.l.b16 %v752
      %v845 = vpack.c.b16 %v840, %v839
      %v846 = vpack.c.b16 %v842, %v841
      %v847 = vpack.c.b16 %v844, %v843
      %v852 = vsel %vm317, %v817, 0
      %v855 = vsel %vm317, %v818, 0
      %v858 = vsel %vm317, %v819, 0
      %v861 = vsel %vm317, %v820, 0
      %v864 = vsel %vm317, %v821, 0
      %v867 = vsel %vm317, %v822, 0
      %v870 = vsel %vm317, %v823, 0
      %v873 = vsel %vm317, %v824, 0
      %v876 = vsel %vm317, %v825, 0
      %v879 = vsel %vm317, %v826, 0
      %v882 = vsel %vm317, %v827, 0
      %v885 = vsel %vm317, %v828, 0
      %v888 = vsel %vm317, %v829, 0
      %v891 = vsel %vm317, %v830, 0
      %v894 = vsel %vm317, %v831, 0
      %v897 = vsel %vm317, %v832, 0
      %899 = vmatprep.subr.bf16.mxu0 0
      %900 = vmatpush1.bf16.msra.mxu0 %v845
      %901 = vmatprep.subr.bf16.mxu0 0
      %902 = vmatpush1.bf16.msra.mxu0 %v846
      %903 = vmatprep.subr.bf16.mxu0 0
      %904 = vmatpush1.bf16.msra.mxu0 %v847
      %905 = vmatprep.subr.bf16.mxu0 0
      %906 = vmatpush1.bf16.msra.mxu0 0
      %907 = vmatprep.subr.bf16.mxu0 0
      %908 = vmatpush1.bf16.msra.mxu0 0
      %909 = vmatprep.subr.bf16.mxu0 0
      %910 = vmatpush1.bf16.msra.mxu0 0
      %911 = vmatprep.subr.bf16.mxu0 0
      %912 = vmatpush1.bf16.msra.mxu0 0
      %913 = vmatprep.subr.bf16.mxu0 0
      %914 = vmatpush1.bf16.msra.mxu0 0
      %915 = vmatprep.subr.bf16.mxu0 0
      %916 = vmatpush1.bf16.msra.mxu0 0
      %917 = vmatprep.subr.bf16.mxu0 0
      %918 = vmatpush1.bf16.msra.mxu0 0
      %919 = vmatprep.subr.bf16.mxu0 0
      %920 = vmatpush1.bf16.msra.mxu0 0
      %921 = vmatprep.subr.bf16.mxu0 0
      %922 = vmatpush1.bf16.msra.mxu0 0
      %923 = vmatprep.subr.bf16.mxu0 0
      %924 = vmatpush1.bf16.msra.mxu0 0
      %925 = vmatprep.subr.bf16.mxu0 0
      %926 = vmatpush1.bf16.msra.mxu0 0
      %927 = vmatprep.subr.bf16.mxu0 0
      %928 = vmatpush1.bf16.msra.mxu0 0
      %929 = vmatprep.subr.bf16.mxu0 0
      %930 = vmatpush1.bf16.msra.mxu0 0
      %931 = vmatprep.mubr.bf16.mxu0 0
      %932 = vmatmul.mubr.bf16.gmra.mrb[0].mxu0 %v852
      %v933 = vpop.f32.mrb[0].mxu0
      %v934 = vadd.f32 0.0, %v933
      %v935 = vpop.f32.mrb[0].mxu0
      %v936 = vpop.f32.mrb[0].mxu0
      %v937 = vadd.f32 0.0, %v936
      %v938 = vpop.f32.mrb[0].mxu0
      %939 = vmatprep.mubr.bf16.mxu0 0
      %940 = vmatmul.mubr.bf16.gmra.mrb[0].mxu0 %v855
      %v941 = vpop.f32.mrb[0].mxu0
      %v942 = vadd.f32 0.0, %v941
      %v943 = vpop.f32.mrb[0].mxu0
      %v944 = vpop.f32.mrb[0].mxu0
      %v945 = vadd.f32 0.0, %v944
      %v946 = vpop.f32.mrb[0].mxu0
      %947 = vmatprep.mubr.bf16.mxu0 0
      %948 = vmatmul.mubr.bf16.gmra.mrb[0].mxu0 %v858
      %v949 = vpop.f32.mrb[0].mxu0
      %v950 = vadd.f32 0.0, %v949
      %v951 = vpop.f32.mrb[0].mxu0
      %v952 = vpop.f32.mrb[0].mxu0
      %v953 = vadd.f32 0.0, %v952
      %v954 = vpop.f32.mrb[0].mxu0
      %955 = vmatprep.mubr.bf16.mxu0 0
      %956 = vmatmul.mubr.bf16.gmra.mrb[0].mxu0 %v861
      %v957 = vpop.f32.mrb[0].mxu0
      %v958 = vadd.f32 0.0, %v957
      %v959 = vpop.f32.mrb[0].mxu0
      %v960 = vpop.f32.mrb[0].mxu0
      %v961 = vadd.f32 0.0, %v960
      %v962 = vpop.f32.mrb[0].mxu0
      %963 = vmatprep.mubr.bf16.mxu0 0
      %964 = vmatmul.mubr.bf16.gmra.mrb[0].mxu0 %v864
      %v965 = vpop.f32.mrb[0].mxu0
      %v966 = vadd.f32 0.0, %v965
      %v967 = vpop.f32.mrb[0].mxu0
      %v968 = vpop.f32.mrb[0].mxu0
      %v969 = vadd.f32 0.0, %v968
      %v970 = vpop.f32.mrb[0].mxu0
      %971 = vmatprep.mubr.bf16.mxu0 0
      %972 = vmatmul.mubr.bf16.gmra.mrb[0].mxu0 %v867
      %v973 = vpop.f32.mrb[0].mxu0
      %v974 = vadd.f32 0.0, %v973
      %v975 = vpop.f32.mrb[0].mxu0
      %v976 = vpop.f32.mrb[0].mxu0
      %v977 = vadd.f32 0.0, %v976
      %v978 = vpop.f32.mrb[0].mxu0
      %979 = vmatprep.mubr.bf16.mxu0 0
      %980 = vmatmul.mubr.bf16.gmra.mrb[0].mxu0 %v870
      %v981 = vpop.f32.mrb[0].mxu0
      %v982 = vadd.f32 0.0, %v981
      %v983 = vpop.f32.mrb[0].mxu0
      %v984 = vpop.f32.mrb[0].mxu0
      %v985 = vadd.f32 0.0, %v984
      %v986 = vpop.f32.mrb[0].mxu0
      %987 = vmatprep.mubr.bf16.mxu0 0
      %988 = vmatmul.mubr.bf16.gmra.mrb[0].mxu0 %v873
      %v989 = vpop.f32.mrb[0].mxu0
      %v990 = vadd.f32 0.0, %v989
      %v991 = vpop.f32.mrb[0].mxu0
      %v992 = vpop.f32.mrb[0].mxu0
      %v993 = vadd.f32 0.0, %v992
      %v994 = vpop.f32.mrb[0].mxu0
      %995 = vmatprep.mubr.bf16.mxu0 0
      %996 = vmatmul.mubr.bf16.gmra.mrb[0].mxu0 %v876
      %v997 = vpop.f32.mrb[0].mxu0
      %v998 = vadd.f32 0.0, %v997
      %v999 = vpop.f32.mrb[0].mxu0
      %v1000 = vpop.f32.mrb[0].mxu0
      %v1001 = vadd.f32 0.0, %v1000
      %v1002 = vpop.f32.mrb[0].mxu0
      %1003 = vmatprep.mubr.bf16.mxu0 0
      %1004 = vmatmul.mubr.bf16.gmra.mrb[0].mxu0 %v879
      %v1005 = vpop.f32.mrb[0].mxu0
      %v1006 = vadd.f32 0.0, %v1005
      %v1007 = vpop.f32.mrb[0].mxu0
      %v1008 = vpop.f32.mrb[0].mxu0
      %v1009 = vadd.f32 0.0, %v1008
      %v1010 = vpop.f32.mrb[0].mxu0
      %1011 = vmatprep.mubr.bf16.mxu0 0
      %1012 = vmatmul.mubr.bf16.gmra.mrb[0].mxu0 %v882
      %v1013 = vpop.f32.mrb[0].mxu0
      %v1014 = vadd.f32 0.0, %v1013
      %v1015 = vpop.f32.mrb[0].mxu0
      %v1016 = vpop.f32.mrb[0].mxu0
      %v1017 = vadd.f32 0.0, %v1016
      %v1018 = vpop.f32.mrb[0].mxu0
      %1019 = vmatprep.mubr.bf16.mxu0 0
      %1020 = vmatmul.mubr.bf16.gmra.mrb[0].mxu0 %v885
      %v1021 = vpop.f32.mrb[0].mxu0
      %v1022 = vadd.f32 0.0, %v1021
      %v1023 = vpop.f32.mrb[0].mxu0
      %v1024 = vpop.f32.mrb[0].mxu0
      %v1025 = vadd.f32 0.0, %v1024
      %v1026 = vpop.f32.mrb[0].mxu0
      %1027 = vmatprep.mubr.bf16.mxu0 0
      %1028 = vmatmul.mubr.bf16.gmra.mrb[0].mxu0 %v888
      %v1029 = vpop.f32.mrb[0].mxu0
      %v1030 = vadd.f32 0.0, %v1029
      %v1031 = vpop.f32.mrb[0].mxu0
      %v1032 = vpop.f32.mrb[0].mxu0
      %v1033 = vadd.f32 0.0, %v1032
      %v1034 = vpop.f32.mrb[0].mxu0
      %1035 = vmatprep.mubr.bf16.mxu0 0
      %1036 = vmatmul.mubr.bf16.gmra.mrb[0].mxu0 %v891
      %v1037 = vpop.f32.mrb[0].mxu0
      %v1038 = vadd.f32 0.0, %v1037
      %v1039 = vpop.f32.mrb[0].mxu0
      %v1040 = vpop.f32.mrb[0].mxu0
      %v1041 = vadd.f32 0.0, %v1040
      %v1042 = vpop.f32.mrb[0].mxu0
      %1043 = vmatprep.mubr.bf16.mxu0 0
      %1044 = vmatmul.mubr.bf16.gmra.mrb[0].mxu0 %v894
      %v1045 = vpop.f32.mrb[0].mxu0
      %v1046 = vadd.f32 0.0, %v1045
      %v1047 = vpop.f32.mrb[0].mxu0
      %v1048 = vpop.f32.mrb[0].mxu0
      %v1049 = vadd.f32 0.0, %v1048
      %v1050 = vpop.f32.mrb[0].mxu0
      %1051 = vmatprep.mubr.bf16.mxu0 0
      %1052 = vmatmul.mubr.bf16.gmra.mrb[0].mxu0 %v897
      %v1053 = vpop.f32.mrb[0].mxu0
      %v1054 = vadd.f32 0.0, %v1053
      %v1055 = vpop.f32.mrb[0].mxu0
      %v1056 = vpop.f32.mrb[0].mxu0
      %v1057 = vadd.f32 0.0, %v1056
      %v1058 = vpop.f32.mrb[0].mxu0
      %1059 = vdwg.mxu0
      %v1060 = vadd.f32 %v588, %v934
      %v1061 = vadd.f32 %v591, %v937
      %v1062 = vadd.f32 %v596, %v942
      %v1063 = vadd.f32 %v599, %v945
      %v1064 = vadd.f32 %v604, %v950
      %v1065 = vadd.f32 %v607, %v953
      %v1066 = vadd.f32 %v612, %v958
      %v1067 = vadd.f32 %v615, %v961
      %v1068 = vadd.f32 %v620, %v966
      %v1069 = vadd.f32 %v623, %v969
      %v1070 = vadd.f32 %v628, %v974
      %v1071 = vadd.f32 %v631, %v977
      %v1072 = vadd.f32 %v636, %v982
      %v1073 = vadd.f32 %v639, %v985
      %v1074 = vadd.f32 %v644, %v990
      %v1075 = vadd.f32 %v647, %v993
      %v1076 = vadd.f32 %v652, %v998
      %v1077 = vadd.f32 %v655, %v1001
      %v1078 = vadd.f32 %v660, %v1006
      %v1079 = vadd.f32 %v663, %v1009
      %v1080 = vadd.f32 %v668, %v1014
      %v1081 = vadd.f32 %v671, %v1017
      %v1082 = vadd.f32 %v676, %v1022
      %v1083 = vadd.f32 %v679, %v1025
      %v1084 = vadd.f32 %v684, %v1030
      %v1085 = vadd.f32 %v687, %v1033
      %v1086 = vadd.f32 %v692, %v1038
      %v1087 = vadd.f32 %v695, %v1041
      %v1088 = vadd.f32 %v700, %v1046
      %v1089 = vadd.f32 %v703, %v1049
      %v1090 = vadd.f32 %v708, %v1054
      %v1091 = vadd.f32 %v711, %v1057
      %v1092 = vld [vmem:[%s2] sm:$0x1]
      %v1094 = vlaneseq
      %v1095 = vshrl.u32 %v1094, 7
      %v1096 = vsub.s32 0, %v1095
      %v1097 = vrot.slane %v1092, %v1096
      %v1099 = vadd.f32 %v1060, %v1097
      %v1100 = vadd.f32 %v1061, %v1097
      %v1101 = vadd.f32 %v1062, %v1097
      %v1102 = vadd.f32 %v1063, %v1097
      %v1103 = vadd.f32 %v1064, %v1097
      %v1104 = vadd.f32 %v1065, %v1097
      %v1105 = vadd.f32 %v1066, %v1097
      %v1106 = vadd.f32 %v1067, %v1097
      %v1107 = vadd.f32 %v1068, %v1097
      %v1108 = vadd.f32 %v1069, %v1097
      %v1109 = vadd.f32 %v1070, %v1097
      %v1110 = vadd.f32 %v1071, %v1097
      %v1111 = vadd.f32 %v1072, %v1097
      %v1112 = vadd.f32 %v1073, %v1097
      %v1113 = vadd.f32 %v1074, %v1097
      %v1114 = vadd.f32 %v1075, %v1097
      %v1115 = vadd.f32 %v1076, %v1097
      %v1116 = vadd.f32 %v1077, %v1097
      %v1117 = vadd.f32 %v1078, %v1097
      %v1118 = vadd.f32 %v1079, %v1097
      %v1119 = vadd.f32 %v1080, %v1097
      %v1120 = vadd.f32 %v1081, %v1097
      %v1121 = vadd.f32 %v1082, %v1097
      %v1122 = vadd.f32 %v1083, %v1097
      %v1123 = vadd.f32 %v1084, %v1097
      %v1124 = vadd.f32 %v1085, %v1097
      %v1125 = vadd.f32 %v1086, %v1097
      %v1126 = vadd.f32 %v1087, %v1097
      %v1127 = vadd.f32 %v1088, %v1097
      %v1128 = vadd.f32 %v1089, %v1097
      %v1129 = vadd.f32 %v1090, %v1097
      %v1130 = vadd.f32 %v1091, %v1097
      %v1131 = vlaneseq
      %v1132 = vand.u32 %v1131, 127
      %vm1133 = vcmp.ge.s32.totalorder %v1132, 18
      %v1134 = vsub.f32 0.0, %v1099
      %v1135 = vsub.f32 0.0, %v1100
      %v1136 = vsub.f32 0.0, %v1101
      %v1137 = vsub.f32 0.0, %v1102
      %v1138 = vsub.f32 0.0, %v1103
      %v1139 = vsub.f32 0.0, %v1104
      %v1140 = vsub.f32 0.0, %v1105
      %v1141 = vsub.f32 0.0, %v1106
      %v1142 = vsub.f32 0.0, %v1107
      %v1143 = vsub.f32 0.0, %v1108
      %v1144 = vsub.f32 0.0, %v1109
      %v1145 = vsub.f32 0.0, %v1110
      %v1146 = vsub.f32 0.0, %v1111
      %v1147 = vsub.f32 0.0, %v1112
      %v1148 = vsub.f32 0.0, %v1113
      %v1149 = vsub.f32 0.0, %v1114
      %v1150 = vsub.f32 0.0, %v1115
      %v1151 = vsub.f32 0.0, %v1116
      %v1152 = vsub.f32 0.0, %v1117
      %v1153 = vsub.f32 0.0, %v1118
      %v1154 = vsub.f32 0.0, %v1119
      %v1155 = vsub.f32 0.0, %v1120
      %v1156 = vsub.f32 0.0, %v1121
      %v1157 = vsub.f32 0.0, %v1122
      %v1158 = vsub.f32 0.0, %v1123
      %v1159 = vsub.f32 0.0, %v1124
      %v1160 = vsub.f32 0.0, %v1125
      %v1161 = vsub.f32 0.0, %v1126
      %v1162 = vsub.f32 0.0, %v1127
      %v1163 = vsub.f32 0.0, %v1128
      %v1164 = vsub.f32 0.0, %v1129
      %v1165 = vsub.f32 0.0, %v1130
      %v1166 = vmul.f32 %v1134, 1.442695
      %v1167 = vpow.pop %v1166
      %v1168 = vmul.f32 %v1135, 1.442695
      %v1169 = vpow.pop %v1168
      %v1170 = vmul.f32 %v1136, 1.442695
      %v1171 = vpow.pop %v1170
      %v1172 = vmul.f32 %v1137, 1.442695
      %v1173 = vpow.pop %v1172
      %v1174 = vmul.f32 %v1138, 1.442695
      %v1175 = vpow.pop %v1174
      %v1176 = vmul.f32 %v1139, 1.442695
      %v1177 = vpow.pop %v1176
      %v1178 = vmul.f32 %v1140, 1.442695
      %v1179 = vpow.pop %v1178
      %v1180 = vmul.f32 %v1141, 1.442695
      %v1181 = vpow.pop %v1180
      %v1182 = vmul.f32 %v1142, 1.442695
      %v1183 = vpow.pop %v1182
      %v1184 = vmul.f32 %v1143, 1.442695
      %v1185 = vpow.pop %v1184
      %v1186 = vmul.f32 %v1144, 1.442695
      %v1187 = vpow.pop %v1186
      %v1188 = vmul.f32 %v1145, 1.442695
      %v1189 = vpow.pop %v1188
      %v1190 = vmul.f32 %v1146, 1.442695
      %v1191 = vpow.pop %v1190
      %v1192 = vmul.f32 %v1147, 1.442695
      %v1193 = vpow.pop %v1192
      %v1194 = vmul.f32 %v1148, 1.442695
      %v1195 = vpow.pop %v1194
      %v1196 = vmul.f32 %v1149, 1.442695
      %v1197 = vpow.pop %v1196
      %v1198 = vmul.f32 %v1150, 1.442695
      %v1199 = vpow.pop %v1198
      %v1200 = vmul.f32 %v1151, 1.442695
      %v1201 = vpow.pop %v1200
      %v1202 = vmul.f32 %v1152, 1.442695
      %v1203 = vpow.pop %v1202
      %v1204 = vmul.f32 %v1153, 1.442695
      %v1205 = vpow.pop %v1204
      %v1206 = vmul.f32 %v1154, 1.442695
      %v1207 = vpow.pop %v1206
      %v1208 = vmul.f32 %v1155, 1.442695
      %v1209 = vpow.pop %v1208
      %v1210 = vmul.f32 %v1156, 1.442695
      %v1211 = vpow.pop %v1210
      %v1212 = vmul.f32 %v1157, 1.442695
      %v1213 = vpow.pop %v1212
      %v1214 = vmul.f32 %v1158, 1.442695
      %v1215 = vpow.pop %v1214
      %v1216 = vmul.f32 %v1159, 1.442695
      %v1217 = vpow.pop %v1216
      %v1218 = vmul.f32 %v1160, 1.442695
      %v1219 = vpow.pop %v1218
      %v1220 = vmul.f32 %v1161, 1.442695
      %v1221 = vpow.pop %v1220
      %v1222 = vmul.f32 %v1162, 1.442695
      %v1223 = vpow.pop %v1222
      %v1224 = vmul.f32 %v1163, 1.442695
      %v1225 = vpow.pop %v1224
      %v1226 = vmul.f32 %v1164, 1.442695
      %v1227 = vpow.pop %v1226
      %v1228 = vmul.f32 %v1165, 1.442695
      %v1229 = vpow.pop %v1228
      %v1230 = vadd.f32 %v1167, 1.0
      %v1231 = vadd.f32 %v1169, 1.0
      %v1232 = vadd.f32 %v1171, 1.0
      %v1233 = vadd.f32 %v1173, 1.0
      %v1234 = vadd.f32 %v1175, 1.0
      %v1235 = vadd.f32 %v1177, 1.0
      %v1236 = vadd.f32 %v1179, 1.0
      %v1237 = vadd.f32 %v1181, 1.0
      %v1238 = vadd.f32 %v1183, 1.0
      %v1239 = vadd.f32 %v1185, 1.0
      %v1240 = vadd.f32 %v1187, 1.0
      %v1241 = vadd.f32 %v1189, 1.0
      %v1242 = vadd.f32 %v1191, 1.0
      %v1243 = vadd.f32 %v1193, 1.0
      %v1244 = vadd.f32 %v1195, 1.0
      %v1245 = vadd.f32 %v1197, 1.0
      %v1246 = vadd.f32 %v1199, 1.0
      %v1247 = vadd.f32 %v1201, 1.0
      %v1248 = vadd.f32 %v1203, 1.0
      %v1249 = vadd.f32 %v1205, 1.0
      %v1250 = vadd.f32 %v1207, 1.0
      %v1251 = vadd.f32 %v1209, 1.0
      %v1252 = vadd.f32 %v1211, 1.0
      %v1253 = vadd.f32 %v1213, 1.0
      %v1254 = vadd.f32 %v1215, 1.0
      %v1255 = vadd.f32 %v1217, 1.0
      %v1256 = vadd.f32 %v1219, 1.0
      %v1257 = vadd.f32 %v1221, 1.0
      %v1258 = vadd.f32 %v1223, 1.0
      %v1259 = vadd.f32 %v1225, 1.0
      %v1260 = vadd.f32 %v1227, 1.0
      %v1261 = vadd.f32 %v1229, 1.0
      %v1262 = vrcp.pop %v1230
      %v1263 = vmul.f32 1.0, %v1262
      %v1264 = vrcp.pop %v1231
      %v1265 = vmul.f32 1.0, %v1264
      %v1266 = vrcp.pop %v1232
      %v1267 = vmul.f32 1.0, %v1266
      %v1268 = vrcp.pop %v1233
      %v1269 = vmul.f32 1.0, %v1268
      %v1270 = vrcp.pop %v1234
      %v1271 = vmul.f32 1.0, %v1270
      %v1272 = vrcp.pop %v1235
      %v1273 = vmul.f32 1.0, %v1272
      %v1274 = vrcp.pop %v1236
      %v1275 = vmul.f32 1.0, %v1274
      %v1276 = vrcp.pop %v1237
      %v1277 = vmul.f32 1.0, %v1276
      %v1278 = vrcp.pop %v1238
      %v1279 = vmul.f32 1.0, %v1278
      %v1280 = vrcp.pop %v1239
      %v1281 = vmul.f32 1.0, %v1280
      %v1282 = vrcp.pop %v1240
      %v1283 = vmul.f32 1.0, %v1282
      %v1284 = vrcp.pop %v1241
      %v1285 = vmul.f32 1.0, %v1284
      %v1286 = vrcp.pop %v1242
      %v1287 = vmul.f32 1.0, %v1286
      %v1288 = vrcp.pop %v1243
      %v1289 = vmul.f32 1.0, %v1288
      %v1290 = vrcp.pop %v1244
      %v1291 = vmul.f32 1.0, %v1290
      %v1292 = vrcp.pop %v1245
      %v1293 = vmul.f32 1.0, %v1292
      %v1294 = vrcp.pop %v1246
      %v1295 = vmul.f32 1.0, %v1294
      %v1296 = vrcp.pop %v1247
      %v1297 = vmul.f32 1.0, %v1296
      %v1298 = vrcp.pop %v1248
      %v1299 = vmul.f32 1.0, %v1298
      %v1300 = vrcp.pop %v1249
      %v1301 = vmul.f32 1.0, %v1300
      %v1302 = vrcp.pop %v1250
      %v1303 = vmul.f32 1.0, %v1302
      %v1304 = vrcp.pop %v1251
      %v1305 = vmul.f32 1.0, %v1304
      %v1306 = vrcp.pop %v1252
      %v1307 = vmul.f32 1.0, %v1306
      %v1308 = vrcp.pop %v1253
      %v1309 = vmul.f32 1.0, %v1308
      %v1310 = vrcp.pop %v1254
      %v1311 = vmul.f32 1.0, %v1310
      %v1312 = vrcp.pop %v1255
      %v1313 = vmul.f32 1.0, %v1312
      %v1314 = vrcp.pop %v1256
      %v1315 = vmul.f32 1.0, %v1314
      %v1316 = vrcp.pop %v1257
      %v1317 = vmul.f32 1.0, %v1316
      %v1318 = vrcp.pop %v1258
      %v1319 = vmul.f32 1.0, %v1318
      %v1320 = vrcp.pop %v1259
      %v1321 = vmul.f32 1.0, %v1320
      %v1322 = vrcp.pop %v1260
      %v1323 = vmul.f32 1.0, %v1322
      %v1324 = vrcp.pop %v1261
      %v1325 = vmul.f32 1.0, %v1324
      %v1326 = vsel %vm1133, %v1263, %v1099
      %v1327 = vsel %vm1133, %v1265, %v1100
      %v1328 = vsel %vm1133, %v1267, %v1101
      %v1329 = vsel %vm1133, %v1269, %v1102
      %v1330 = vsel %vm1133, %v1271, %v1103
      %v1331 = vsel %vm1133, %v1273, %v1104
      %v1332 = vsel %vm1133, %v1275, %v1105
      %v1333 = vsel %vm1133, %v1277, %v1106
      %v1334 = vsel %vm1133, %v1279, %v1107
      %v1335 = vsel %vm1133, %v1281, %v1108
      %v1336 = vsel %vm1133, %v1283, %v1109
      %v1337 = vsel %vm1133, %v1285, %v1110
      %v1338 = vsel %vm1133, %v1287, %v1111
      %v1339 = vsel %vm1133, %v1289, %v1112
      %v1340 = vsel %vm1133, %v1291, %v1113
      %v1341 = vsel %vm1133, %v1293, %v1114
      %v1342 = vsel %vm1133, %v1295, %v1115
      %v1343 = vsel %vm1133, %v1297, %v1116
      %v1344 = vsel %vm1133, %v1299, %v1117
      %v1345 = vsel %vm1133, %v1301, %v1118
      %v1346 = vsel %vm1133, %v1303, %v1119
      %v1347 = vsel %vm1133, %v1305, %v1120
      %v1348 = vsel %vm1133, %v1307, %v1121
      %v1349 = vsel %vm1133, %v1309, %v1122
      %v1350 = vsel %vm1133, %v1311, %v1123
      %v1351 = vsel %vm1133, %v1313, %v1124
      %v1352 = vsel %vm1133, %v1315, %v1125
      %v1353 = vsel %vm1133, %v1317, %v1126
      %v1354 = vsel %vm1133, %v1319, %v1127
      %v1355 = vsel %vm1133, %v1321, %v1128
      %v1356 = vsel %vm1133, %v1323, %v1129
      %v1357 = vsel %vm1133, %v1325, %v1130
      %vm1358 = vcmask 220160
      %1359 = vst.msk [vmem:[%s170] sm:$0xff] %vm1358, %v1326
      %1360 = vst.msk [vmem:[%s170 + $0x8] sm:$0xff] %vm1358, %v1327
      %1361 = vst.msk [vmem:[%s170 + $0x10] sm:$0xff] %vm1358, %v1328
      %1362 = vst.msk [vmem:[%s170 + $0x18] sm:$0xff] %vm1358, %v1329
      %1363 = vst.msk [vmem:[%s170 + $0x20] sm:$0xff] %vm1358, %v1330
      %1364 = vst.msk [vmem:[%s170 + $0x28] sm:$0xff] %vm1358, %v1331
      %1365 = vst.msk [vmem:[%s170 + $0x30] sm:$0xff] %vm1358, %v1332
      %1366 = vst.msk [vmem:[%s170 + $0x38] sm:$0xff] %vm1358, %v1333
      %1367 = vst.msk [vmem:[%s170 + $0x40] sm:$0xff] %vm1358, %v1334
      %1368 = vst.msk [vmem:[%s170 + $0x48] sm:$0xff] %vm1358, %v1335
      %1369 = vst.msk [vmem:[%s170 + $0x50] sm:$0xff] %vm1358, %v1336
      %1370 = vst.msk [vmem:[%s170 + $0x58] sm:$0xff] %vm1358, %v1337
      %1371 = vst.msk [vmem:[%s170 + $0x60] sm:$0xff] %vm1358, %v1338
      %1372 = vst.msk [vmem:[%s170 + $0x68] sm:$0xff] %vm1358, %v1339
      %1373 = vst.msk [vmem:[%s170 + $0x70] sm:$0xff] %vm1358, %v1340
      %1374 = vst.msk [vmem:[%s170 + $0x78] sm:$0xff] %vm1358, %v1341
      %1375 = vst.msk [vmem:[%s170 + $0x80] sm:$0xff] %vm1358, %v1342
      %1376 = vst.msk [vmem:[%s170 + $0x88] sm:$0xff] %vm1358, %v1343
      %1377 = vst.msk [vmem:[%s170 + $0x90] sm:$0xff] %vm1358, %v1344
      %1378 = vst.msk [vmem:[%s170 + $0x98] sm:$0xff] %vm1358, %v1345
      %1379 = vst.msk [vmem:[%s170 + $0xa0] sm:$0xff] %vm1358, %v1346
      %1380 = vst.msk [vmem:[%s170 + $0xa8] sm:$0xff] %vm1358, %v1347
      %1381 = vst.msk [vmem:[%s170 + $0xb0] sm:$0xff] %vm1358, %v1348
      %1382 = vst.msk [vmem:[%s170 + $0xb8] sm:$0xff] %vm1358, %v1349
      %1383 = vst.msk [vmem:[%s170 + $0xc0] sm:$0xff] %vm1358, %v1350
      %1384 = vst.msk [vmem:[%s170 + $0xc8] sm:$0xff] %vm1358, %v1351
      %1385 = vst.msk [vmem:[%s170 + $0xd0] sm:$0xff] %vm1358, %v1352
      %1386 = vst.msk [vmem:[%s170 + $0xd8] sm:$0xff] %vm1358, %v1353
      %1387 = vst.msk [vmem:[%s170 + $0xe0] sm:$0xff] %vm1358, %v1354
      %1388 = vst.msk [vmem:[%s170 + $0xe8] sm:$0xff] %vm1358, %v1355
      %1389 = vst.msk [vmem:[%s170 + $0xf0] sm:$0xff] %vm1358, %v1356
      %1390 = vst.msk [vmem:[%s170 + $0xf8] sm:$0xff] %vm1358, %v1357
      %p1391 = scmp.lt.s32.totalorder %s14, 1
      %s1392 = scalar_select %p1391, %s14, 1
      %s1393 = smul.addr %s1392, 32
      %s1394 = smul.addr %s1393, 8
      %s1395 = scalar_lea.vmem %s3, %s1394
      // Predicated region
      $region33: #{dgb_forward.6} parent=31 // pred_check
        %p1396 = pneg %p100
      $region34: #{dgb_forward.6} parent=31 // pred_check_branch
        %1398 = sbr.rel (%p1396) target = $region36
      $region35: #{dgb_forward.6} parent=31 // pred_region
        _
      $region36: #{dgb_forward.6} parent=31 // pred_fallthru
        _
    $region32: #{dgb_forward.6} parent=5 // pred_fallthru
      _
    %p1399 = scmp.le.s32.totalorder 2, %s9
    // Predicated region
    $region37: #{dgb_forward.6} parent=5 // pred_check
      %p1400 = pneg %p1399
    $region38: #{dgb_forward.6} parent=5 // pred_check_branch
      %1402 = sbr.rel (%p1400) target = $region40
    $region39: #{dgb_forward.6} parent=5 // pred_region
      %s1403 = ssub.s32 %s9, 2
      // Predicated region
      $region41: #{dgb_forward.6} parent=39 // pred_check
        %p1404 = pneg %p106
      $region42: #{dgb_forward.6} parent=39 // pred_check_branch
        %1406 = sbr.rel (%p1404) target = $region44
      $region43: #{dgb_forward.6} parent=39 // pred_region
        %p1407 = scmp.lt.s32.totalorder %s15, 1
        %s1408 = scalar_select %p1407, %s15, 1
        %s1409 = smul.addr %s1408, 32
        %s1410 = smul.addr %s1409, 8
        %s1411 = scalar_lea.vmem %s3, %s1410
      $region44: #{dgb_forward.6} parent=39 // pred_fallthru
        _
    $region40: #{dgb_forward.6} parent=5 // pred_fallthru
      _
  $region6: #{dgb_forward.6} parent=0 // loop_footer
    %s13 = sadd.s32 1, %s9
  $region7: #{dgb_forward.6} parent=0 // loop_footer_branch
    %8 = sbr.rel target = $region3
  $region8: #{dgb_forward.6} parent=0 // loop_exit
    _

// kernel: dgb_forward.7
$region0: #{dgb_forward.7}
  #allocation0 [shape = 'u32[]', space=smem, size = 0x4, offset = 0x4, fixed_abs, tag = 'smem constant byte address 0x4 - core index']
  #allocation1 [shape = 'u32[144,128]{1,0:T(1,128)}', space=vmem, size = 0x12000, scoped, tag = 'internal scratch']
  %s0 = inlined_call_operand.vmem [shape: f32[512,8], index: 0, kind: input, shape index: {}]
  %s1 = inlined_call_operand.vmem [shape: bf16[512,8], index: 1, kind: input, shape index: {}]
  %s2 = inlined_call_operand.vmem [shape: bf16[512,72], index: 2, kind: input, shape index: {}]
  %s3 = inlined_call_operand.vmem [shape: bf16[72,8], index: 3, kind: input, shape index: {}]
  %s4 = inlined_call_operand.vmem [shape: bf16[8,16], index: 4, kind: input, shape index: {}]
  %s5 = inlined_call_operand.vmem [shape: bf16[16,8], index: 5, kind: input, shape index: {}]
  %s6 = inlined_call_operand.vmem [shape: bf16[16,8], index: 6, kind: input, shape index: {}]
  %s7 = inlined_call_operand.vmem [shape: f32[512,8], index: 7, kind: output, shape index: {}]
  %s8 = sld [smem:[#allocation0]]
  $region61: #{dgb_forward.7} parent=0
    _
  %s10 = ssub.s32 1, %s8
  %s11 = scalar_select 0, %s10, %s8
  loop: start=0, step=1, limit=4
  $region2: #{dgb_forward.7} parent=0 // loop_pre_header
    _
  $region3: #{dgb_forward.7} parent=0 // loop_header
    %s13 = sphi 0, %s17
    %p14 = scmp.ge.s32.totalorder %s13, 4
    %s23 = sphi 0, %s25
    %s26 = sphi 0, %s23
    %s27 = sphi 0, %s26
    %s43 = sphi 0, %s27
    %s49 = sphi 0, %s51
    %s52 = sphi 0, %s49
    %s53 = sphi 0, %s52
    %s69 = sphi 0, %s53
    %s75 = sphi 0, %s77
    %s78 = sphi 0, %s75
    %s79 = sphi 0, %s78
    %s95 = sphi 0, %s79
    %s99 = sphi 0, %s99
    %s101 = sphi 0, %s99
    %s102 = sphi 0, %s101
    %s116 = sphi 0, %s102
    %s120 = sphi 0, %s120
    %s122 = sphi 0, %s120
    %s123 = sphi 0, %s122
    %s137 = sphi 0, %s123
    %s141 = sphi 0, %s141
    %s143 = sphi 0, %s141
    %s144 = sphi 0, %s143
    %s158 = sphi 0, %s144
    %s162 = sphi 0, %s162
    %s164 = sphi 0, %s162
    %s165 = sphi 0, %s164
    %s179 = sphi 0, %s165
    %s185 = sphi 0, %s187
    %s188 = sphi 0, %s185
    %s189 = sphi 0, %s188
    %s205 = sphi 0, %s189
  $region4: #{dgb_forward.7} parent=0 // loop_header_branch
    %16 = sbr.rel (%p14) target = $region8
  $region5: #{dgb_forward.7} parent=0 // loop_body
    %s18 = ssub.s32 %s13, 1
    %s19 = ssub.s32 %s13, 2
    %s20 = sadd.s32 %s13, 1
    %s21 = ssub.s32 %s13, %s20
    %p22 = scmp.eq.s32.totalorder %s21, 0
    %s24 = sadd.s32 %s23, 1
    %s25 = scalar_select %p22, %s23, %s24
    %p28 = pneg %p22
    %p29 = scmp.eq.s32.totalorder %s13, 1
    %p30 = por %p28, %p29
    %p31 = scmp.ne.s32.totalorder %s23, %s26
    %p32 = scmp.eq.s32.totalorder %s13, 0
    %p33 = por %p31, %p32
    %p34 = scmp.ne.s32.totalorder %s23, %s26
    %p35 = scmp.eq.s32.totalorder %s18, 1
    %p36 = por %p34, %p35
    %p37 = scmp.ne.s32.totalorder %s26, %s27
    %p38 = scmp.eq.s32.totalorder %s18, 0
    %p39 = por %p37, %p38
    %p40 = scmp.ne.s32.totalorder %s26, %s27
    %p41 = scmp.eq.s32.totalorder %s19, 1
    %p42 = por %p40, %p41
    %p44 = scmp.ne.s32.totalorder %s27, %s43
    %p45 = scmp.eq.s32.totalorder %s19, 0
    %p46 = por %p44, %p45
    %s47 = ssub.s32 %s13, %s20
    %p48 = scmp.eq.s32.totalorder %s47, 0
    %s50 = sadd.s32 %s49, 1
    %s51 = scalar_select %p48, %s49, %s50
    %p54 = pneg %p48
    %p55 = scmp.eq.s32.totalorder %s13, 1
    %p56 = por %p54, %p55
    %p57 = scmp.ne.s32.totalorder %s49, %s52
    %p58 = scmp.eq.s32.totalorder %s13, 0
    %p59 = por %p57, %p58
    %p60 = scmp.ne.s32.totalorder %s49, %s52
    %p61 = scmp.eq.s32.totalorder %s18, 1
    %p62 = por %p60, %p61
    %p63 = scmp.ne.s32.totalorder %s52, %s53
    %p64 = scmp.eq.s32.totalorder %s18, 0
    %p65 = por %p63, %p64
    %p66 = scmp.ne.s32.totalorder %s52, %s53
    %p67 = scmp.eq.s32.totalorder %s19, 1
    %p68 = por %p66, %p67
    %p70 = scmp.ne.s32.totalorder %s53, %s69
    %p71 = scmp.eq.s32.totalorder %s19, 0
    %p72 = por %p70, %p71
    %s73 = ssub.s32 %s13, %s20
    %p74 = scmp.eq.s32.totalorder %s73, 0
    %s76 = sadd.s32 %s75, 1
    %s77 = scalar_select %p74, %s75, %s76
    %p80 = pneg %p74
    %p81 = scmp.eq.s32.totalorder %s13, 1
    %p82 = por %p80, %p81
    %p83 = scmp.ne.s32.totalorder %s75, %s78
    %p84 = scmp.eq.s32.totalorder %s13, 0
    %p85 = por %p83, %p84
    %p86 = scmp.ne.s32.totalorder %s75, %s78
    %p87 = scmp.eq.s32.totalorder %s18, 1
    %p88 = por %p86, %p87
    %p89 = scmp.ne.s32.totalorder %s78, %s79
    %p90 = scmp.eq.s32.totalorder %s18, 0
    %p91 = por %p89, %p90
    %p92 = scmp.ne.s32.totalorder %s78, %s79
    %p93 = scmp.eq.s32.totalorder %s19, 1
    %p94 = por %p92, %p93
    %p96 = scmp.ne.s32.totalorder %s79, %s95
    %p97 = scmp.eq.s32.totalorder %s19, 0
    %p98 = por %p96, %p97
    %s100 = sadd.s32 %s99, 1
    %p103 = scmp.eq.s32.totalorder %s13, 1
    %p104 = scmp.ne.s32.totalorder %s99, %s101
    %p105 = scmp.eq.s32.totalorder %s13, 0
    %p106 = por %p104, %p105
    %p107 = scmp.ne.s32.totalorder %s99, %s101
    %p108 = scmp.eq.s32.totalorder %s18, 1
    %p109 = por %p107, %p108
    %p110 = scmp.ne.s32.totalorder %s101, %s102
    %p111 = scmp.eq.s32.totalorder %s18, 0
    %p112 = por %p110, %p111
    %p113 = scmp.ne.s32.totalorder %s101, %s102
    %p114 = scmp.eq.s32.totalorder %s19, 1
    %p115 = por %p113, %p114
    %p117 = scmp.ne.s32.totalorder %s102, %s116
    %p118 = scmp.eq.s32.totalorder %s19, 0
    %p119 = por %p117, %p118
    %s121 = sadd.s32 %s120, 1
    %p124 = scmp.eq.s32.totalorder %s13, 1
    %p125 = scmp.ne.s32.totalorder %s120, %s122
    %p126 = scmp.eq.s32.totalorder %s13, 0
    %p127 = por %p125, %p126
    %p128 = scmp.ne.s32.totalorder %s120, %s122
    %p129 = scmp.eq.s32.totalorder %s18, 1
    %p130 = por %p128, %p129
    %p131 = scmp.ne.s32.totalorder %s122, %s123
    %p132 = scmp.eq.s32.totalorder %s18, 0
    %p133 = por %p131, %p132
    %p134 = scmp.ne.s32.totalorder %s122, %s123
    %p135 = scmp.eq.s32.totalorder %s19, 1
    %p136 = por %p134, %p135
    %p138 = scmp.ne.s32.totalorder %s123, %s137
    %p139 = scmp.eq.s32.totalorder %s19, 0
    %p140 = por %p138, %p139
    %s142 = sadd.s32 %s141, 1
    %p145 = scmp.eq.s32.totalorder %s13, 1
    %p146 = scmp.ne.s32.totalorder %s141, %s143
    %p147 = scmp.eq.s32.totalorder %s13, 0
    %p148 = por %p146, %p147
    %p149 = scmp.ne.s32.totalorder %s141, %s143
    %p150 = scmp.eq.s32.totalorder %s18, 1
    %p151 = por %p149, %p150
    %p152 = scmp.ne.s32.totalorder %s143, %s144
    %p153 = scmp.eq.s32.totalorder %s18, 0
    %p154 = por %p152, %p153
    %p155 = scmp.ne.s32.totalorder %s143, %s144
    %p156 = scmp.eq.s32.totalorder %s19, 1
    %p157 = por %p155, %p156
    %p159 = scmp.ne.s32.totalorder %s144, %s158
    %p160 = scmp.eq.s32.totalorder %s19, 0
    %p161 = por %p159, %p160
    %s163 = sadd.s32 %s162, 1
    %p166 = scmp.eq.s32.totalorder %s13, 1
    %p167 = scmp.ne.s32.totalorder %s162, %s164
    %p168 = scmp.eq.s32.totalorder %s13, 0
    %p169 = por %p167, %p168
    %p170 = scmp.ne.s32.totalorder %s162, %s164
    %p171 = scmp.eq.s32.totalorder %s18, 1
    %p172 = por %p170, %p171
    %p173 = scmp.ne.s32.totalorder %s164, %s165
    %p174 = scmp.eq.s32.totalorder %s18, 0
    %p175 = por %p173, %p174
    %p176 = scmp.ne.s32.totalorder %s164, %s165
    %p177 = scmp.eq.s32.totalorder %s19, 1
    %p178 = por %p176, %p177
    %p180 = scmp.ne.s32.totalorder %s165, %s179
    %p181 = scmp.eq.s32.totalorder %s19, 0
    %p182 = por %p180, %p181
    %s183 = ssub.s32 %s13, %s20
    %p184 = scmp.eq.s32.totalorder %s183, 0
    %s186 = sadd.s32 %s185, 1
    %s187 = scalar_select %p184, %s185, %s186
    %p190 = pneg %p184
    %p191 = scmp.eq.s32.totalorder %s13, 1
    %p192 = por %p190, %p191
    %p193 = scmp.ne.s32.totalorder %s185, %s188
    %p194 = scmp.eq.s32.totalorder %s13, 0
    %p195 = por %p193, %p194
    %p196 = scmp.ne.s32.totalorder %s185, %s188
    %p197 = scmp.eq.s32.totalorder %s18, 1
    %p198 = por %p196, %p197
    %p199 = scmp.ne.s32.totalorder %s188, %s189
    %p200 = scmp.eq.s32.totalorder %s18, 0
    %p201 = por %p199, %p200
    %p202 = scmp.ne.s32.totalorder %s188, %s189
    %p203 = scmp.eq.s32.totalorder %s19, 1
    %p204 = por %p202, %p203
    %p206 = scmp.ne.s32.totalorder %s189, %s205
    %p207 = scmp.eq.s32.totalorder %s19, 0
    %p208 = por %p206, %p207
    %p209 = scmp.le.s32.totalorder 1, %s13
    %p210 = scmp.lt.s32.totalorder %s13, 3
    %p211 = pnand %p209, %p210
    %p212 = pneg %p211
    // Predicated region
    $region9: #{dgb_forward.7} parent=5 // pred_check
      _
    $region10: #{dgb_forward.7} parent=5 // pred_check_branch
      %214 = sbr.rel (%p211) target = $region12
    $region11: #{dgb_forward.7} parent=5 // pred_region
      %s215 = ssub.s32 %s13, 1
      // Predicated region
      $region13: #{dgb_forward.7} parent=11 // pred_check
        %p216 = pneg %p112
      $region14: #{dgb_forward.7} parent=11 // pred_check_branch
        %218 = sbr.rel (%p216) target = $region16
      $region15: #{dgb_forward.7} parent=11 // pred_region
        _
      $region16: #{dgb_forward.7} parent=11 // pred_fallthru
        _
      // Predicated region
      $region17: #{dgb_forward.7} parent=11 // pred_check
        %p219 = pneg %p133
      $region18: #{dgb_forward.7} parent=11 // pred_check_branch
        %221 = sbr.rel (%p219) target = $region20
      $region19: #{dgb_forward.7} parent=11 // pred_region
        _
      $region20: #{dgb_forward.7} parent=11 // pred_fallthru
        _
      // Predicated region
      $region21: #{dgb_forward.7} parent=11 // pred_check
        %p222 = pneg %p154
      $region22: #{dgb_forward.7} parent=11 // pred_check_branch
        %224 = sbr.rel (%p222) target = $region24
      $region23: #{dgb_forward.7} parent=11 // pred_region
        _
      $region24: #{dgb_forward.7} parent=11 // pred_fallthru
        _
      // Predicated region
      $region25: #{dgb_forward.7} parent=11 // pred_check
        %p225 = pneg %p175
      $region26: #{dgb_forward.7} parent=11 // pred_check_branch
        %227 = sbr.rel (%p225) target = $region28
      $region27: #{dgb_forward.7} parent=11 // pred_region
        _
      $region28: #{dgb_forward.7} parent=11 // pred_fallthru
        _
    $region12: #{dgb_forward.7} parent=5 // pred_fallthru
      _
    %p228 = scmp.lt.s32.totalorder %s13, 2
    // Predicated region
    $region29: #{dgb_forward.7} parent=5 // pred_check
      %p229 = pneg %p228
    $region30: #{dgb_forward.7} parent=5 // pred_check_branch
      %231 = sbr.rel (%p229) target = $region32
    $region31: #{dgb_forward.7} parent=5 // pred_region
      // Predicated region
      $region33: #{dgb_forward.7} parent=31 // pred_check
        %p232 = pneg %p33
      $region34: #{dgb_forward.7} parent=31 // pred_check_branch
        %234 = sbr.rel (%p232) target = $region36
      $region35: #{dgb_forward.7} parent=31 // pred_region
        %s235 = smul.u32 32, %s13
        %p236 = scmp.lt.s32.totalorder %s235, 63
        %s237 = scalar_select %p236, %s235, 63
        %s238 = smul.addr %s237, 8
        %s239 = scalar_lea.vmem %s0, %s238
        %s240 = smul.u32 32, %s13
      $region36: #{dgb_forward.7} parent=31 // pred_fallthru
        _
      // Predicated region
      $region37: #{dgb_forward.7} parent=31 // pred_check
        %p241 = pneg %p59
      $region38: #{dgb_forward.7} parent=31 // pred_check_branch
        %243 = sbr.rel (%p241) target = $region40
      $region39: #{dgb_forward.7} parent=31 // pred_region
        %s244 = smul.u32 32, %s13
        %p245 = scmp.lt.s32.totalorder %s244, 63
        %s246 = scalar_select %p245, %s244, 63
        %s247 = smul.addr %s246, 4
        %s248 = scalar_lea.vmem %s1, %s247
        %s249 = smul.u32 32, %s13
      $region40: #{dgb_forward.7} parent=31 // pred_fallthru
        _
      // Predicated region
      $region41: #{dgb_forward.7} parent=31 // pred_check
        %p250 = pneg %p85
      $region42: #{dgb_forward.7} parent=31 // pred_check_branch
        %252 = sbr.rel (%p250) target = $region44
      $region43: #{dgb_forward.7} parent=31 // pred_region
        %s253 = smul.u32 32, %s13
        %p254 = scmp.lt.s32.totalorder %s253, 63
        %s255 = scalar_select %p254, %s253, 63
        %s256 = smul.addr %s255, 4
        %s257 = scalar_lea.vmem %s2, %s256
        %s258 = smul.u32 32, %s13
      $region44: #{dgb_forward.7} parent=31 // pred_fallthru
        _
    $region32: #{dgb_forward.7} parent=5 // pred_fallthru
      _
    %p259 = scmp.le.s32.totalorder 1, %s13
    %p260 = scmp.lt.s32.totalorder %s13, 3
    %p261 = pnand %p259, %p260
    %p262 = pneg %p261
    // Predicated region
    $region45: #{dgb_forward.7} parent=5 // pred_check
      _
    $region46: #{dgb_forward.7} parent=5 // pred_check_branch
      %264 = sbr.rel (%p261) target = $region48
    $region47: #{dgb_forward.7} parent=5 // pred_region
      %s265 = ssub.s32 %s13, 1
      %s266 = smul.u32 32, %s18
      %p267 = scmp.lt.s32.totalorder %s266, 63
      %s268 = scalar_select %p267, %s266, 63
      %s269 = smul.addr %s268, 8
      %s270 = scalar_lea.vmem %s0, %s269
      %p271 = pneg %p39
      %p272 = pneg %p36
      %s273 = smul.u32 32, %s18
      %p274 = scmp.lt.s32.totalorder %s273, 63
      %s275 = scalar_select %p274, %s273, 63
      %s276 = smul.addr %s275, 4
      %s277 = scalar_lea.vmem %s1, %s276
      %p278 = pneg %p65
      %p279 = pneg %p62
      %s280 = smul.u32 32, %s18
      %p281 = scmp.lt.s32.totalorder %s280, 63
      %s282 = scalar_select %p281, %s280, 63
      %s283 = smul.addr %s282, 4
      %s284 = scalar_lea.vmem %s2, %s283
      %p285 = pneg %p91
      %p286 = pneg %p88
      %p287 = pneg %p112
      %p288 = pneg %p109
      %p289 = pneg %p133
      %p290 = pneg %p130
      %p291 = pneg %p154
      %p292 = pneg %p151
      %p293 = pneg %p175
      %p294 = pneg %p172
      %p295 = pneg %p201
      %p296 = pneg %p198
      %s297 = smul.u32 32, %s18
      %p298 = scmp.lt.s32.totalorder %s297, 63
      %s299 = scalar_select %p298, %s297, 63
      %s300 = smul.addr %s299, 8
      %s301 = scalar_lea.vmem %s7, %s300
      %s302 = smul.u32 32, %s18
      %p303 = scmp.lt.s32.totalorder %s302, 63
      %s304 = scalar_select %p303, %s302, 63
      %s305 = smul.addr %s304, 8
      %s306 = scalar_lea.vmem %s0, %s305
      %s307 = smul.u32 32, %s18
      %s308 = smul.u32 32, %s18
      %p309 = scmp.lt.s32.totalorder %s308, 63
      %s310 = scalar_select %p309, %s308, 63
      %s311 = smul.addr %s310, 4
      %s312 = scalar_lea.vmem %s1, %s311
      %s313 = smul.u32 32, %s18
      %s314 = smul.u32 32, %s18
      %p315 = scmp.lt.s32.totalorder %s314, 63
      %s316 = scalar_select %p315, %s314, 63
      %s317 = smul.addr %s316, 4
      %s318 = scalar_lea.vmem %s2, %s317
      %s319 = smul.u32 32, %s18
      %s320 = smul.u32 32, %s18
      %p321 = scmp.lt.s32.totalorder %s320, 63
      %s322 = scalar_select %p321, %s320, 63
      %s323 = smul.addr %s322, 8
      %s324 = scalar_lea.vmem %s7, %s323
      %s325 = smul.u32 32, %s18
      %v327 = vld [vmem:[%s318] sm:$0xf]
      %v328 = vld [vmem:[%s318 + $0x4] sm:$0xf]
      %v329 = vld [vmem:[%s318 + $0x8] sm:$0xf]
      %v330 = vld [vmem:[%s318 + $0xc] sm:$0xf]
      %v331 = vld [vmem:[%s318 + $0x10] sm:$0xf]
      %v332 = vld [vmem:[%s318 + $0x14] sm:$0xf]
      %v333 = vld [vmem:[%s318 + $0x18] sm:$0xf]
      %v334 = vld [vmem:[%s318 + $0x1c] sm:$0xf]
      %v335 = vld [vmem:[%s318 + $0x20] sm:$0xf]
      %v336 = vld [vmem:[%s318 + $0x24] sm:$0xf]
      %v337 = vld [vmem:[%s318 + $0x28] sm:$0xf]
      %v338 = vld [vmem:[%s318 + $0x2c] sm:$0xf]
      %v339 = vld [vmem:[%s318 + $0x30] sm:$0xf]
      %v340 = vld [vmem:[%s318 + $0x34] sm:$0xf]
      %v341 = vld [vmem:[%s318 + $0x38] sm:$0xf]
      %v342 = vld [vmem:[%s318 + $0x3c] sm:$0xf]
      %v343 = vld [vmem:[%s318 + $0x40] sm:$0xf]
      %v344 = vld [vmem:[%s318 + $0x44] sm:$0xf]
      %v345 = vld [vmem:[%s318 + $0x48] sm:$0xf]
      %v346 = vld [vmem:[%s318 + $0x4c] sm:$0xf]
      %v347 = vld [vmem:[%s318 + $0x50] sm:$0xf]
      %v348 = vld [vmem:[%s318 + $0x54] sm:$0xf]
      %v349 = vld [vmem:[%s318 + $0x58] sm:$0xf]
      %v350 = vld [vmem:[%s318 + $0x5c] sm:$0xf]
      %v351 = vld [vmem:[%s318 + $0x60] sm:$0xf]
      %v352 = vld [vmem:[%s318 + $0x64] sm:$0xf]
      %v353 = vld [vmem:[%s318 + $0x68] sm:$0xf]
      %v354 = vld [vmem:[%s318 + $0x6c] sm:$0xf]
      %v355 = vld [vmem:[%s318 + $0x70] sm:$0xf]
      %v356 = vld [vmem:[%s318 + $0x74] sm:$0xf]
      %v357 = vld [vmem:[%s318 + $0x78] sm:$0xf]
      %v358 = vld [vmem:[%s318 + $0x7c] sm:$0xf]
      %v359 = vld [vmem:[%s3] sm:$0xf]
      %v360 = vld [vmem:[%s3 + $0x4] sm:$0xf]
      %v361 = vld [vmem:[%s3 + $0x8] sm:$0xf]
      %v362 = vld [vmem:[%s3 + $0xc] sm:$0xf]
      %v363 = vld [vmem:[%s3 + $0x10] sm:$0xf]
      %v364 = vld [vmem:[%s3 + $0x14] sm:$0xf]
      %v365 = vld [vmem:[%s3 + $0x18] sm:$0xf]
      %v366 = vld [vmem:[%s3 + $0x1c] sm:$0xf]
      %v367 = vld [vmem:[%s3 + $0x20] sm:$0xf]
      %v400 = vunpack.c.l.b16 %v327
      %v401 = vunpack.c.l.b16 %v328
      %v402 = vunpack.c.l.b16 %v329
      %v403 = vunpack.c.l.b16 %v330
      %v404 = vunpack.c.l.b16 %v331
      %v405 = vunpack.c.l.b16 %v332
      %v406 = vunpack.c.l.b16 %v333
      %v407 = vunpack.c.l.b16 %v334
      %v408 = vunpack.c.l.b16 %v335
      %v409 = vunpack.c.l.b16 %v336
      %v410 = vunpack.c.l.b16 %v337
      %v411 = vunpack.c.l.b16 %v338
      %v412 = vunpack.c.l.b16 %v339
      %v413 = vunpack.c.l.b16 %v340
      %v414 = vunpack.c.l.b16 %v341
      %v415 = vunpack.c.l.b16 %v342
      %v416 = vunpack.c.l.b16 %v343
      %v417 = vunpack.c.l.b16 %v344
      %v418 = vunpack.c.l.b16 %v345
      %v419 = vunpack.c.l.b16 %v346
      %v420 = vunpack.c.l.b16 %v347
      %v421 = vunpack.c.l.b16 %v348
      %v422 = vunpack.c.l.b16 %v349
      %v423 = vunpack.c.l.b16 %v350
      %v424 = vunpack.c.l.b16 %v351
      %v425 = vunpack.c.l.b16 %v352
      %v426 = vunpack.c.l.b16 %v353
      %v427 = vunpack.c.l.b16 %v354
      %v428 = vunpack.c.l.b16 %v355
      %v429 = vunpack.c.l.b16 %v356
      %v430 = vunpack.c.l.b16 %v357
      %v431 = vunpack.c.l.b16 %v358
      %v432 = vpack.c.b16 %v401, %v400
      %v433 = vpack.c.b16 %v403, %v402
      %v434 = vpack.c.b16 %v405, %v404
      %v435 = vpack.c.b16 %v407, %v406
      %v436 = vpack.c.b16 %v409, %v408
      %v437 = vpack.c.b16 %v411, %v410
      %v438 = vpack.c.b16 %v413, %v412
      %v439 = vpack.c.b16 %v415, %v414
      %v440 = vpack.c.b16 %v417, %v416
      %v441 = vpack.c.b16 %v419, %v418
      %v442 = vpack.c.b16 %v421, %v420
      %v443 = vpack.c.b16 %v423, %v422
      %v444 = vpack.c.b16 %v425, %v424
      %v445 = vpack.c.b16 %v427, %v426
      %v446 = vpack.c.b16 %v429, %v428
      %v447 = vpack.c.b16 %v431, %v430
      %v457 = vunpack.c.l.b16 %v359
      %v458 = vunpack.c.l.b16 %v360
      %v459 = vunpack.c.l.b16 %v361
      %v460 = vunpack.c.l.b16 %v362
      %v461 = vunpack.c.l.b16 %v363
      %v462 = vunpack.c.l.b16 %v364
      %v463 = vunpack.c.l.b16 %v365
      %v464 = vunpack.c.l.b16 %v366
      %v465 = vunpack.c.l.b16 %v367
      %v466 = vpack.c.b16 %v458, %v457
      %v467 = vpack.c.b16 %v460, %v459
      %v468 = vpack.c.b16 %v462, %v461
      %v469 = vpack.c.b16 %v464, %v463
      %v470 = vpack.c.b16 %v465, %v465
      %vm475 = vcmask 588800
      %v477 = vsel %vm475, %v432, 0
      %v480 = vsel %vm475, %v433, 0
      %v483 = vsel %vm475, %v434, 0
      %v486 = vsel %vm475, %v435, 0
      %v489 = vsel %vm475, %v436, 0
      %v492 = vsel %vm475, %v437, 0
      %v495 = vsel %vm475, %v438, 0
      %v498 = vsel %vm475, %v439, 0
      %v501 = vsel %vm475, %v440, 0
      %v504 = vsel %vm475, %v441, 0
      %v507 = vsel %vm475, %v442, 0
      %v510 = vsel %vm475, %v443, 0
      %v513 = vsel %vm475, %v444, 0
      %v516 = vsel %vm475, %v445, 0
      %v519 = vsel %vm475, %v446, 0
      %v522 = vsel %vm475, %v447, 0
      %vm524 = vcmask 1043456
      %v526 = vsel %vm524, %v470, 0
      %528 = vmatprep.subr.bf16.mxu0 0
      %529 = vmatpush1.bf16.msra.mxu0 %v466
      %530 = vmatprep.subr.bf16.mxu0 0
      %531 = vmatpush1.bf16.msra.mxu0 %v467
      %532 = vmatprep.subr.bf16.mxu0 0
      %533 = vmatpush1.bf16.msra.mxu0 %v468
      %534 = vmatprep.subr.bf16.mxu0 0
      %535 = vmatpush1.bf16.msra.mxu0 %v469
      %536 = vmatprep.subr.bf16.mxu0 0
      %537 = vmatpush1.bf16.msra.mxu0 %v526
      %538 = vmatprep.subr.bf16.mxu0 0
      %539 = vmatpush1.bf16.msra.mxu0 0
      %540 = vmatprep.subr.bf16.mxu0 0
      %541 = vmatpush1.bf16.msra.mxu0 0
      %542 = vmatprep.subr.bf16.mxu0 0
      %543 = vmatpush1.bf16.msra.mxu0 0
      %544 = vmatprep.subr.bf16.mxu0 0
      %545 = vmatpush1.bf16.msra.mxu0 0
      %546 = vmatprep.subr.bf16.mxu0 0
      %547 = vmatpush1.bf16.msra.mxu0 0
      %548 = vmatprep.subr.bf16.mxu0 0
      %549 = vmatpush1.bf16.msra.mxu0 0
      %550 = vmatprep.subr.bf16.mxu0 0
      %551 = vmatpush1.bf16.msra.mxu0 0
      %552 = vmatprep.subr.bf16.mxu0 0
      %553 = vmatpush1.bf16.msra.mxu0 0
      %554 = vmatprep.subr.bf16.mxu0 0
      %555 = vmatpush1.bf16.msra.mxu0 0
      %556 = vmatprep.subr.bf16.mxu0 0
      %557 = vmatpush1.bf16.msra.mxu0 0
      %558 = vmatprep.subr.bf16.mxu0 0
      %559 = vmatpush1.bf16.msra.mxu0 0
      %560 = vmatprep.mubr.bf16.mxu0 0
      %561 = vmatmul.mubr.bf16.gmra.mrb[0].mxu0 %v477
      %v562 = vpop.f32.mrb[0].mxu0
      %v563 = vadd.f32 0.0, %v562
      %v564 = vpop.f32.mrb[0].mxu0
      %v565 = vpop.f32.mrb[0].mxu0
      %v566 = vadd.f32 0.0, %v565
      %v567 = vpop.f32.mrb[0].mxu0
      %568 = vmatprep.mubr.bf16.mxu0 0
      %569 = vmatmul.mubr.bf16.gmra.mrb[0].mxu0 %v480
      %v570 = vpop.f32.mrb[0].mxu0
      %v571 = vadd.f32 0.0, %v570
      %v572 = vpop.f32.mrb[0].mxu0
      %v573 = vpop.f32.mrb[0].mxu0
      %v574 = vadd.f32 0.0, %v573
      %v575 = vpop.f32.mrb[0].mxu0
      %576 = vmatprep.mubr.bf16.mxu0 0
      %577 = vmatmul.mubr.bf16.gmra.mrb[0].mxu0 %v483
      %v578 = vpop.f32.mrb[0].mxu0
      %v579 = vadd.f32 0.0, %v578
      %v580 = vpop.f32.mrb[0].mxu0
      %v581 = vpop.f32.mrb[0].mxu0
      %v582 = vadd.f32 0.0, %v581
      %v583 = vpop.f32.mrb[0].mxu0
      %584 = vmatprep.mubr.bf16.mxu0 0
      %585 = vmatmul.mubr.bf16.gmra.mrb[0].mxu0 %v486
      %v586 = vpop.f32.mrb[0].mxu0
      %v587 = vadd.f32 0.0, %v586
      %v588 = vpop.f32.mrb[0].mxu0
      %v589 = vpop.f32.mrb[0].mxu0
      %v590 = vadd.f32 0.0, %v589
      %v591 = vpop.f32.mrb[0].mxu0
      %592 = vmatprep.mubr.bf16.mxu0 0
      %593 = vmatmul.mubr.bf16.gmra.mrb[0].mxu0 %v489
      %v594 = vpop.f32.mrb[0].mxu0
      %v595 = vadd.f32 0.0, %v594
      %v596 = vpop.f32.mrb[0].mxu0
      %v597 = vpop.f32.mrb[0].mxu0
      %v598 = vadd.f32 0.0, %v597
      %v599 = vpop.f32.mrb[0].mxu0
      %600 = vmatprep.mubr.bf16.mxu0 0
      %601 = vmatmul.mubr.bf16.gmra.mrb[0].mxu0 %v492
      %v602 = vpop.f32.mrb[0].mxu0
      %v603 = vadd.f32 0.0, %v602
      %v604 = vpop.f32.mrb[0].mxu0
      %v605 = vpop.f32.mrb[0].mxu0
      %v606 = vadd.f32 0.0, %v605
      %v607 = vpop.f32.mrb[0].mxu0
      %608 = vmatprep.mubr.bf16.mxu0 0
      %609 = vmatmul.mubr.bf16.gmra.mrb[0].mxu0 %v495
      %v610 = vpop.f32.mrb[0].mxu0
      %v611 = vadd.f32 0.0, %v610
      %v612 = vpop.f32.mrb[0].mxu0
      %v613 = vpop.f32.mrb[0].mxu0
      %v614 = vadd.f32 0.0, %v613
      %v615 = vpop.f32.mrb[0].mxu0
      %616 = vmatprep.mubr.bf16.mxu0 0
      %617 = vmatmul.mubr.bf16.gmra.mrb[0].mxu0 %v498
      %v618 = vpop.f32.mrb[0].mxu0
      %v619 = vadd.f32 0.0, %v618
      %v620 = vpop.f32.mrb[0].mxu0
      %v621 = vpop.f32.mrb[0].mxu0
      %v622 = vadd.f32 0.0, %v621
      %v623 = vpop.f32.mrb[0].mxu0
      %624 = vmatprep.mubr.bf16.mxu0 0
      %625 = vmatmul.mubr.bf16.gmra.mrb[0].mxu0 %v501
      %v626 = vpop.f32.mrb[0].mxu0
      %v627 = vadd.f32 0.0, %v626
      %v628 = vpop.f32.mrb[0].mxu0
      %v629 = vpop.f32.mrb[0].mxu0
      %v630 = vadd.f32 0.0, %v629
      %v631 = vpop.f32.mrb[0].mxu0
      %632 = vmatprep.mubr.bf16.mxu0 0
      %633 = vmatmul.mubr.bf16.gmra.mrb[0].mxu0 %v504
      %v634 = vpop.f32.mrb[0].mxu0
      %v635 = vadd.f32 0.0, %v634
      %v636 = vpop.f32.mrb[0].mxu0
      %v637 = vpop.f32.mrb[0].mxu0
      %v638 = vadd.f32 0.0, %v637
      %v639 = vpop.f32.mrb[0].mxu0
      %640 = vmatprep.mubr.bf16.mxu0 0
      %641 = vmatmul.mubr.bf16.gmra.mrb[0].mxu0 %v507
      %v642 = vpop.f32.mrb[0].mxu0
      %v643 = vadd.f32 0.0, %v642
      %v644 = vpop.f32.mrb[0].mxu0
      %v645 = vpop.f32.mrb[0].mxu0
      %v646 = vadd.f32 0.0, %v645
      %v647 = vpop.f32.mrb[0].mxu0
      %648 = vmatprep.mubr.bf16.mxu0 0
      %649 = vmatmul.mubr.bf16.gmra.mrb[0].mxu0 %v510
      %v650 = vpop.f32.mrb[0].mxu0
      %v651 = vadd.f32 0.0, %v650
      %v652 = vpop.f32.mrb[0].mxu0
      %v653 = vpop.f32.mrb[0].mxu0
      %v654 = vadd.f32 0.0, %v653
      %v655 = vpop.f32.mrb[0].mxu0
      %656 = vmatprep.mubr.bf16.mxu0 0
      %657 = vmatmul.mubr.bf16.gmra.mrb[0].mxu0 %v513
      %v658 = vpop.f32.mrb[0].mxu0
      %v659 = vadd.f32 0.0, %v658
      %v660 = vpop.f32.mrb[0].mxu0
      %v661 = vpop.f32.mrb[0].mxu0
      %v662 = vadd.f32 0.0, %v661
      %v663 = vpop.f32.mrb[0].mxu0
      %664 = vmatprep.mubr.bf16.mxu0 0
      %665 = vmatmul.mubr.bf16.gmra.mrb[0].mxu0 %v516
      %v666 = vpop.f32.mrb[0].mxu0
      %v667 = vadd.f32 0.0, %v666
      %v668 = vpop.f32.mrb[0].mxu0
      %v669 = vpop.f32.mrb[0].mxu0
      %v670 = vadd.f32 0.0, %v669
      %v671 = vpop.f32.mrb[0].mxu0
      %672 = vmatprep.mubr.bf16.mxu0 0
      %673 = vmatmul.mubr.bf16.gmra.mrb[0].mxu0 %v519
      %v674 = vpop.f32.mrb[0].mxu0
      %v675 = vadd.f32 0.0, %v674
      %v676 = vpop.f32.mrb[0].mxu0
      %v677 = vpop.f32.mrb[0].mxu0
      %v678 = vadd.f32 0.0, %v677
      %v679 = vpop.f32.mrb[0].mxu0
      %680 = vmatprep.mubr.bf16.mxu0 0
      %681 = vmatmul.mubr.bf16.gmra.mrb[0].mxu0 %v522
      %v682 = vpop.f32.mrb[0].mxu0
      %v683 = vadd.f32 0.0, %v682
      %v684 = vpop.f32.mrb[0].mxu0
      %v685 = vpop.f32.mrb[0].mxu0
      %v686 = vadd.f32 0.0, %v685
      %v687 = vpop.f32.mrb[0].mxu0
      %688 = vdwg.mxu0
      %v689 = vld [vmem:[%s312] sm:$0xf]
      %v690 = vld [vmem:[%s312 + $0x4] sm:$0xf]
      %v691 = vld [vmem:[%s312 + $0x8] sm:$0xf]
      %v692 = vld [vmem:[%s312 + $0xc] sm:$0xf]
      %v693 = vld [vmem:[%s312 + $0x10] sm:$0xf]
      %v694 = vld [vmem:[%s312 + $0x14] sm:$0xf]
      %v695 = vld [vmem:[%s312 + $0x18] sm:$0xf]
      %v696 = vld [vmem:[%s312 + $0x1c] sm:$0xf]
      %v697 = vld [vmem:[%s312 + $0x20] sm:$0xf]
      %v698 = vld [vmem:[%s312 + $0x24] sm:$0xf]
      %v699 = vld [vmem:[%s312 + $0x28] sm:$0xf]
      %v700 = vld [vmem:[%s312 + $0x2c] sm:$0xf]
      %v701 = vld [vmem:[%s312 + $0x30] sm:$0xf]
      %v702 = vld [vmem:[%s312 + $0x34] sm:$0xf]
      %v703 = vld [vmem:[%s312 + $0x38] sm:$0xf]
      %v704 = vld [vmem:[%s312 + $0x3c] sm:$0xf]
      %v705 = vld [vmem:[%s312 + $0x40] sm:$0xf]
      %v706 = vld [vmem:[%s312 + $0x44] sm:$0xf]
      %v707 = vld [vmem:[%s312 + $0x48] sm:$0xf]
      %v708 = vld [vmem:[%s312 + $0x4c] sm:$0xf]
      %v709 = vld [vmem:[%s312 + $0x50] sm:$0xf]
      %v710 = vld [vmem:[%s312 + $0x54] sm:$0xf]
      %v711 = vld [vmem:[%s312 + $0x58] sm:$0xf]
      %v712 = vld [vmem:[%s312 + $0x5c] sm:$0xf]
      %v713 = vld [vmem:[%s312 + $0x60] sm:$0xf]
      %v714 = vld [vmem:[%s312 + $0x64] sm:$0xf]
      %v715 = vld [vmem:[%s312 + $0x68] sm:$0xf]
      %v716 = vld [vmem:[%s312 + $0x6c] sm:$0xf]
      %v717 = vld [vmem:[%s312 + $0x70] sm:$0xf]
      %v718 = vld [vmem:[%s312 + $0x74] sm:$0xf]
      %v719 = vld [vmem:[%s312 + $0x78] sm:$0xf]
      %v720 = vld [vmem:[%s312 + $0x7c] sm:$0xf]
      %v721 = vld [vmem:[%s4] sm:$0xf]
      %v754 = vunpack.c.l.b16 %v689
      %v755 = vunpack.c.l.b16 %v690
      %v756 = vunpack.c.l.b16 %v691
      %v757 = vunpack.c.l.b16 %v692
      %v758 = vunpack.c.l.b16 %v693
      %v759 = vunpack.c.l.b16 %v694
      %v760 = vunpack.c.l.b16 %v695
      %v761 = vunpack.c.l.b16 %v696
      %v762 = vunpack.c.l.b16 %v697
      %v763 = vunpack.c.l.b16 %v698
      %v764 = vunpack.c.l.b16 %v699
      %v765 = vunpack.c.l.b16 %v700
      %v766 = vunpack.c.l.b16 %v701
      %v767 = vunpack.c.l.b16 %v702
      %v768 = vunpack.c.l.b16 %v703
      %v769 = vunpack.c.l.b16 %v704
      %v770 = vunpack.c.l.b16 %v705
      %v771 = vunpack.c.l.b16 %v706
      %v772 = vunpack.c.l.b16 %v707
      %v773 = vunpack.c.l.b16 %v708
      %v774 = vunpack.c.l.b16 %v709
      %v775 = vunpack.c.l.b16 %v710
      %v776 = vunpack.c.l.b16 %v711
      %v777 = vunpack.c.l.b16 %v712
      %v778 = vunpack.c.l.b16 %v713
      %v779 = vunpack.c.l.b16 %v714
      %v780 = vunpack.c.l.b16 %v715
      %v781 = vunpack.c.l.b16 %v716
      %v782 = vunpack.c.l.b16 %v717
      %v783 = vunpack.c.l.b16 %v718
      %v784 = vunpack.c.l.b16 %v719
      %v785 = vunpack.c.l.b16 %v720
      %v786 = vpack.c.b16 %v755, %v754
      %v787 = vpack.c.b16 %v757, %v756
      %v788 = vpack.c.b16 %v759, %v758
      %v789 = vpack.c.b16 %v761, %v760
      %v790 = vpack.c.b16 %v763, %v762
      %v791 = vpack.c.b16 %v765, %v764
      %v792 = vpack.c.b16 %v767, %v766
      %v793 = vpack.c.b16 %v769, %v768
      %v794 = vpack.c.b16 %v771, %v770
      %v795 = vpack.c.b16 %v773, %v772
      %v796 = vpack.c.b16 %v775, %v774
      %v797 = vpack.c.b16 %v777, %v776
      %v798 = vpack.c.b16 %v779, %v778
      %v799 = vpack.c.b16 %v781, %v780
      %v800 = vpack.c.b16 %v783, %v782
      %v801 = vpack.c.b16 %v785, %v784
      %vm802 = vcmask 64512
      %v804 = vsel %vm802, %v786, 0
      %v807 = vsel %vm802, %v787, 0
      %v810 = vsel %vm802, %v788, 0
      %v813 = vsel %vm802, %v789, 0
      %v816 = vsel %vm802, %v790, 0
      %v819 = vsel %vm802, %v791, 0
      %v822 = vsel %vm802, %v792, 0
      %v825 = vsel %vm802, %v793, 0
      %v828 = vsel %vm802, %v794, 0
      %v831 = vsel %vm802, %v795, 0
      %v834 = vsel %vm802, %v796, 0
      %v837 = vsel %vm802, %v797, 0
      %v840 = vsel %vm802, %v798, 0
      %v843 = vsel %vm802, %v799, 0
      %v846 = vsel %vm802, %v800, 0
      %v849 = vsel %vm802, %v801, 0
      %v852 = vsel %vm524, %v721, 0
      %854 = vmatprep.subr.bf16.mxu0 0
      %855 = vmatpush1.bf16.msra.mxu0 %v852
      %856 = vmatprep.subr.bf16.mxu0 0
      %857 = vmatpush1.bf16.msra.mxu0 0
      %858 = vmatprep.subr.bf16.mxu0 0
      %859 = vmatpush1.bf16.msra.mxu0 0
      %860 = vmatprep.subr.bf16.mxu0 0
      %861 = vmatpush1.bf16.msra.mxu0 0
      %862 = vmatprep.subr.bf16.mxu0 0
      %863 = vmatpush1.bf16.msra.mxu0 0
      %864 = vmatprep.subr.bf16.mxu0 0
      %865 = vmatpush1.bf16.msra.mxu0 0
      %866 = vmatprep.subr.bf16.mxu0 0
      %867 = vmatpush1.bf16.msra.mxu0 0
      %868 = vmatprep.subr.bf16.mxu0 0
      %869 = vmatpush1.bf16.msra.mxu0 0
      %870 = vmatprep.subr.bf16.mxu0 0
      %871 = vmatpush1.bf16.msra.mxu0 0
      %872 = vmatprep.subr.bf16.mxu0 0
      %873 = vmatpush1.bf16.msra.mxu0 0
      %874 = vmatprep.subr.bf16.mxu0 0
      %875 = vmatpush1.bf16.msra.mxu0 0
      %876 = vmatprep.subr.bf16.mxu0 0
      %877 = vmatpush1.bf16.msra.mxu0 0
      %878 = vmatprep.subr.bf16.mxu0 0
      %879 = vmatpush1.bf16.msra.mxu0 0
      %880 = vmatprep.subr.bf16.mxu0 0
      %881 = vmatpush1.bf16.msra.mxu0 0
      %882 = vmatprep.subr.bf16.mxu0 0
      %883 = vmatpush1.bf16.msra.mxu0 0
      %884 = vmatprep.subr.bf16.mxu0 0
      %885 = vmatpush1.bf16.msra.mxu0 0
      %886 = vmatprep.mubr.bf16.mxu0 0
      %887 = vmatmul.mubr.bf16.gmra.mrb[0].mxu0 %v804
      %v888 = vpop.f32.mrb[0].mxu0
      %v889 = vadd.f32 0.0, %v888
      %v890 = vpop.f32.mrb[0].mxu0
      %v891 = vpop.f32.mrb[0].mxu0
      %v892 = vadd.f32 0.0, %v891
      %v893 = vpop.f32.mrb[0].mxu0
      %894 = vmatprep.mubr.bf16.mxu0 0
      %895 = vmatmul.mubr.bf16.gmra.mrb[0].mxu0 %v807
      %v896 = vpop.f32.mrb[0].mxu0
      %v897 = vadd.f32 0.0, %v896
      %v898 = vpop.f32.mrb[0].mxu0
      %v899 = vpop.f32.mrb[0].mxu0
      %v900 = vadd.f32 0.0, %v899
      %v901 = vpop.f32.mrb[0].mxu0
      %902 = vmatprep.mubr.bf16.mxu0 0
      %903 = vmatmul.mubr.bf16.gmra.mrb[0].mxu0 %v810
      %v904 = vpop.f32.mrb[0].mxu0
      %v905 = vadd.f32 0.0, %v904
      %v906 = vpop.f32.mrb[0].mxu0
      %v907 = vpop.f32.mrb[0].mxu0
      %v908 = vadd.f32 0.0, %v907
      %v909 = vpop.f32.mrb[0].mxu0
      %910 = vmatprep.mubr.bf16.mxu0 0
      %911 = vmatmul.mubr.bf16.gmra.mrb[0].mxu0 %v813
      %v912 = vpop.f32.mrb[0].mxu0
      %v913 = vadd.f32 0.0, %v912
      %v914 = vpop.f32.mrb[0].mxu0
      %v915 = vpop.f32.mrb[0].mxu0
      %v916 = vadd.f32 0.0, %v915
      %v917 = vpop.f32.mrb[0].mxu0
      %918 = vmatprep.mubr.bf16.mxu0 0
      %919 = vmatmul.mubr.bf16.gmra.mrb[0].mxu0 %v816
      %v920 = vpop.f32.mrb[0].mxu0
      %v921 = vadd.f32 0.0, %v920
      %v922 = vpop.f32.mrb[0].mxu0
      %v923 = vpop.f32.mrb[0].mxu0
      %v924 = vadd.f32 0.0, %v923
      %v925 = vpop.f32.mrb[0].mxu0
      %926 = vmatprep.mubr.bf16.mxu0 0
      %927 = vmatmul.mubr.bf16.gmra.mrb[0].mxu0 %v819
      %v928 = vpop.f32.mrb[0].mxu0
      %v929 = vadd.f32 0.0, %v928
      %v930 = vpop.f32.mrb[0].mxu0
      %v931 = vpop.f32.mrb[0].mxu0
      %v932 = vadd.f32 0.0, %v931
      %v933 = vpop.f32.mrb[0].mxu0
      %934 = vmatprep.mubr.bf16.mxu0 0
      %935 = vmatmul.mubr.bf16.gmra.mrb[0].mxu0 %v822
      %v936 = vpop.f32.mrb[0].mxu0
      %v937 = vadd.f32 0.0, %v936
      %v938 = vpop.f32.mrb[0].mxu0
      %v939 = vpop.f32.mrb[0].mxu0
      %v940 = vadd.f32 0.0, %v939
      %v941 = vpop.f32.mrb[0].mxu0
      %942 = vmatprep.mubr.bf16.mxu0 0
      %943 = vmatmul.mubr.bf16.gmra.mrb[0].mxu0 %v825
      %v944 = vpop.f32.mrb[0].mxu0
      %v945 = vadd.f32 0.0, %v944
      %v946 = vpop.f32.mrb[0].mxu0
      %v947 = vpop.f32.mrb[0].mxu0
      %v948 = vadd.f32 0.0, %v947
      %v949 = vpop.f32.mrb[0].mxu0
      %950 = vmatprep.mubr.bf16.mxu0 0
      %951 = vmatmul.mubr.bf16.gmra.mrb[0].mxu0 %v828
      %v952 = vpop.f32.mrb[0].mxu0
      %v953 = vadd.f32 0.0, %v952
      %v954 = vpop.f32.mrb[0].mxu0
      %v955 = vpop.f32.mrb[0].mxu0
      %v956 = vadd.f32 0.0, %v955
      %v957 = vpop.f32.mrb[0].mxu0
      %958 = vmatprep.mubr.bf16.mxu0 0
      %959 = vmatmul.mubr.bf16.gmra.mrb[0].mxu0 %v831
      %v960 = vpop.f32.mrb[0].mxu0
      %v961 = vadd.f32 0.0, %v960
      %v962 = vpop.f32.mrb[0].mxu0
      %v963 = vpop.f32.mrb[0].mxu0
      %v964 = vadd.f32 0.0, %v963
      %v965 = vpop.f32.mrb[0].mxu0
      %966 = vmatprep.mubr.bf16.mxu0 0
      %967 = vmatmul.mubr.bf16.gmra.mrb[0].mxu0 %v834
      %v968 = vpop.f32.mrb[0].mxu0
      %v969 = vadd.f32 0.0, %v968
      %v970 = vpop.f32.mrb[0].mxu0
      %v971 = vpop.f32.mrb[0].mxu0
      %v972 = vadd.f32 0.0, %v971
      %v973 = vpop.f32.mrb[0].mxu0
      %974 = vmatprep.mubr.bf16.mxu0 0
      %975 = vmatmul.mubr.bf16.gmra.mrb[0].mxu0 %v837
      %v976 = vpop.f32.mrb[0].mxu0
      %v977 = vadd.f32 0.0, %v976
      %v978 = vpop.f32.mrb[0].mxu0
      %v979 = vpop.f32.mrb[0].mxu0
      %v980 = vadd.f32 0.0, %v979
      %v981 = vpop.f32.mrb[0].mxu0
      %982 = vmatprep.mubr.bf16.mxu0 0
      %983 = vmatmul.mubr.bf16.gmra.mrb[0].mxu0 %v840
      %v984 = vpop.f32.mrb[0].mxu0
      %v985 = vadd.f32 0.0, %v984
      %v986 = vpop.f32.mrb[0].mxu0
      %v987 = vpop.f32.mrb[0].mxu0
      %v988 = vadd.f32 0.0, %v987
      %v989 = vpop.f32.mrb[0].mxu0
      %990 = vmatprep.mubr.bf16.mxu0 0
      %991 = vmatmul.mubr.bf16.gmra.mrb[0].mxu0 %v843
      %v992 = vpop.f32.mrb[0].mxu0
      %v993 = vadd.f32 0.0, %v992
      %v994 = vpop.f32.mrb[0].mxu0
      %v995 = vpop.f32.mrb[0].mxu0
      %v996 = vadd.f32 0.0, %v995
      %v997 = vpop.f32.mrb[0].mxu0
      %998 = vmatprep.mubr.bf16.mxu0 0
      %999 = vmatmul.mubr.bf16.gmra.mrb[0].mxu0 %v846
      %v1000 = vpop.f32.mrb[0].mxu0
      %v1001 = vadd.f32 0.0, %v1000
      %v1002 = vpop.f32.mrb[0].mxu0
      %v1003 = vpop.f32.mrb[0].mxu0
      %v1004 = vadd.f32 0.0, %v1003
      %v1005 = vpop.f32.mrb[0].mxu0
      %1006 = vmatprep.mubr.bf16.mxu0 0
      %1007 = vmatmul.mubr.bf16.gmra.mrb[0].mxu0 %v849
      %v1008 = vpop.f32.mrb[0].mxu0
      %v1009 = vadd.f32 0.0, %v1008
      %v1010 = vpop.f32.mrb[0].mxu0
      %v1011 = vpop.f32.mrb[0].mxu0
      %v1012 = vadd.f32 0.0, %v1011
      %v1013 = vpop.f32.mrb[0].mxu0
      %1014 = vdwg.mxu0
      %vm1015 = vcmp.ge.f32.partialorder %v889, 0.0
      %vm1016 = vcmp.ge.f32.partialorder %v892, 0.0
      %vm1017 = vcmp.ge.f32.partialorder %v897, 0.0
      %vm1018 = vcmp.ge.f32.partialorder %v900, 0.0
      %vm1019 = vcmp.ge.f32.partialorder %v905, 0.0
      %vm1020 = vcmp.ge.f32.partialorder %v908, 0.0
      %vm1021 = vcmp.ge.f32.partialorder %v913, 0.0
      %vm1022 = vcmp.ge.f32.partialorder %v916, 0.0
      %vm1023 = vcmp.ge.f32.partialorder %v921, 0.0
      %vm1024 = vcmp.ge.f32.partialorder %v924, 0.0
      %vm1025 = vcmp.ge.f32.partialorder %v929, 0.0
      %vm1026 = vcmp.ge.f32.partialorder %v932, 0.0
      %vm1027 = vcmp.ge.f32.partialorder %v937, 0.0
      %vm1028 = vcmp.ge.f32.partialorder %v940, 0.0
      %vm1029 = vcmp.ge.f32.partialorder %v945, 0.0
      %vm1030 = vcmp.ge.f32.partialorder %v948, 0.0
      %vm1031 = vcmp.ge.f32.partialorder %v953, 0.0
      %vm1032 = vcmp.ge.f32.partialorder %v956, 0.0
      %vm1033 = vcmp.ge.f32.partialorder %v961, 0.0
      %vm1034 = vcmp.ge.f32.partialorder %v964, 0.0
      %vm1035 = vcmp.ge.f32.partialorder %v969, 0.0
      %vm1036 = vcmp.ge.f32.partialorder %v972, 0.0
      %vm1037 = vcmp.ge.f32.partialorder %v977, 0.0
      %vm1038 = vcmp.ge.f32.partialorder %v980, 0.0
      %vm1039 = vcmp.ge.f32.partialorder %v985, 0.0
      %vm1040 = vcmp.ge.f32.partialorder %v988, 0.0
      %vm1041 = vcmp.ge.f32.partialorder %v993, 0.0
      %vm1042 = vcmp.ge.f32.partialorder %v996, 0.0
      %vm1043 = vcmp.ge.f32.partialorder %v1001, 0.0
      %vm1044 = vcmp.ge.f32.partialorder %v1004, 0.0
      %vm1045 = vcmp.ge.f32.partialorder %v1009, 0.0
      %vm1046 = vcmp.ge.f32.partialorder %v1012, 0.0
      %v1047 = vmul.f32 %v889, 0.1
      %v1048 = vmul.f32 %v892, 0.1
      %v1049 = vmul.f32 %v897, 0.1
      %v1050 = vmul.f32 %v900, 0.1
      %v1051 = vmul.f32 %v905, 0.1
      %v1052 = vmul.f32 %v908, 0.1
      %v1053 = vmul.f32 %v913, 0.1
      %v1054 = vmul.f32 %v916, 0.1
      %v1055 = vmul.f32 %v921, 0.1
      %v1056 = vmul.f32 %v924, 0.1
      %v1057 = vmul.f32 %v929, 0.1
      %v1058 = vmul.f32 %v932, 0.1
      %v1059 = vmul.f32 %v937, 0.1
      %v1060 = vmul.f32 %v940, 0.1
      %v1061 = vmul.f32 %v945, 0.1
      %v1062 = vmul.f32 %v948, 0.1
      %v1063 = vmul.f32 %v953, 0.1
      %v1064 = vmul.f32 %v956, 0.1
      %v1065 = vmul.f32 %v961, 0.1
      %v1066 = vmul.f32 %v964, 0.1
      %v1067 = vmul.f32 %v969, 0.1
      %v1068 = vmul.f32 %v972, 0.1
      %v1069 = vmul.f32 %v977, 0.1
      %v1070 = vmul.f32 %v980, 0.1
      %v1071 = vmul.f32 %v985, 0.1
      %v1072 = vmul.f32 %v988, 0.1
      %v1073 = vmul.f32 %v993, 0.1
      %v1074 = vmul.f32 %v996, 0.1
      %v1075 = vmul.f32 %v1001, 0.1
      %v1076 = vmul.f32 %v1004, 0.1
      %v1077 = vmul.f32 %v1009, 0.1
      %v1078 = vmul.f32 %v1012, 0.1
      %v1079 = vsel %vm1015, %v889, %v1047
      %v1080 = vsel %vm1016, %v892, %v1048
      %v1081 = vsel %vm1017, %v897, %v1049
      %v1082 = vsel %vm1018, %v900, %v1050
      %v1083 = vsel %vm1019, %v905, %v1051
      %v1084 = vsel %vm1020, %v908, %v1052
      %v1085 = vsel %vm1021, %v913, %v1053
      %v1086 = vsel %vm1022, %v916, %v1054
      %v1087 = vsel %vm1023, %v921, %v1055
      %v1088 = vsel %vm1024, %v924, %v1056
      %v1089 = vsel %vm1025, %v929, %v1057
      %v1090 = vsel %vm1026, %v932, %v1058
      %v1091 = vsel %vm1027, %v937, %v1059
      %v1092 = vsel %vm1028, %v940, %v1060
      %v1093 = vsel %vm1029, %v945, %v1061
      %v1094 = vsel %vm1030, %v948, %v1062
      %v1095 = vsel %vm1031, %v953, %v1063
      %v1096 = vsel %vm1032, %v956, %v1064
      %v1097 = vsel %vm1033, %v961, %v1065
      %v1098 = vsel %vm1034, %v964, %v1066
      %v1099 = vsel %vm1035, %v969, %v1067
      %v1100 = vsel %vm1036, %v972, %v1068
      %v1101 = vsel %vm1037, %v977, %v1069
      %v1102 = vsel %vm1038, %v980, %v1070
      %v1103 = vsel %vm1039, %v985, %v1071
      %v1104 = vsel %vm1040, %v988, %v1072
      %v1105 = vsel %vm1041, %v993, %v1073
      %v1106 = vsel %vm1042, %v996, %v1074
      %v1107 = vsel %vm1043, %v1001, %v1075
      %v1108 = vsel %vm1044, %v1004, %v1076
      %v1109 = vsel %vm1045, %v1009, %v1077
      %v1110 = vsel %vm1046, %v1012, %v1078
      %v1111 = vpack.c.bf16 %v1080, %v1079
      %v1112 = vpack.c.bf16 %v1082, %v1081
      %v1113 = vpack.c.bf16 %v1084, %v1083
      %v1114 = vpack.c.bf16 %v1086, %v1085
      %v1115 = vpack.c.bf16 %v1088, %v1087
      %v1116 = vpack.c.bf16 %v1090, %v1089
      %v1117 = vpack.c.bf16 %v1092, %v1091
      %v1118 = vpack.c.bf16 %v1094, %v1093
      %v1119 = vpack.c.bf16 %v1096, %v1095
      %v1120 = vpack.c.bf16 %v1098, %v1097
      %v1121 = vpack.c.bf16 %v1100, %v1099
      %v1122 = vpack.c.bf16 %v1102, %v1101
      %v1123 = vpack.c.bf16 %v1104, %v1103
      %v1124 = vpack.c.bf16 %v1106, %v1105
      %v1125 = vpack.c.bf16 %v1108, %v1107
      %v1126 = vpack.c.bf16 %v1110, %v1109
      %v1127 = vld [vmem:[%s5] sm:$0xf]
      %v1128 = vld [vmem:[%s5 + $0x4] sm:$0xf]
      %v1131 = vunpack.c.l.b16 %v1127
      %v1132 = vunpack.c.l.b16 %v1128
      %v1133 = vpack.c.b16 %v1132, %v1131
      %vm1135 = vcmask 130048
      %v1137 = vsel %vm1135, %v1111, 0
      %v1140 = vsel %vm1135, %v1112, 0
      %v1143 = vsel %vm1135, %v1113, 0
      %v1146 = vsel %vm1135, %v1114, 0
      %v1149 = vsel %vm1135, %v1115, 0
      %v1152 = vsel %vm1135, %v1116, 0
      %v1155 = vsel %vm1135, %v1117, 0
      %v1158 = vsel %vm1135, %v1118, 0
      %v1161 = vsel %vm1135, %v1119, 0
      %v1164 = vsel %vm1135, %v1120, 0
      %v1167 = vsel %vm1135, %v1121, 0
      %v1170 = vsel %vm1135, %v1122, 0
      %v1173 = vsel %vm1135, %v1123, 0
      %v1176 = vsel %vm1135, %v1124, 0
      %v1179 = vsel %vm1135, %v1125, 0
      %v1182 = vsel %vm1135, %v1126, 0
      %1184 = vmatprep.subr.bf16.mxu0 0
      %1185 = vmatpush1.bf16.msra.mxu0 %v1133
      %1186 = vmatprep.subr.bf16.mxu0 0
      %1187 = vmatpush1.bf16.msra.mxu0 0
      %1188 = vmatprep.subr.bf16.mxu0 0
      %1189 = vmatpush1.bf16.msra.mxu0 0
      %1190 = vmatprep.subr.bf16.mxu0 0
      %1191 = vmatpush1.bf16.msra.mxu0 0
      %1192 = vmatprep.subr.bf16.mxu0 0
      %1193 = vmatpush1.bf16.msra.mxu0 0
      %1194 = vmatprep.subr.bf16.mxu0 0
      %1195 = vmatpush1.bf16.msra.mxu0 0
      %1196 = vmatprep.subr.bf16.mxu0 0
      %1197 = vmatpush1.bf16.msra.mxu0 0
      %1198 = vmatprep.subr.bf16.mxu0 0
      %1199 = vmatpush1.bf16.msra.mxu0 0
      %1200 = vmatprep.subr.bf16.mxu0 0
      %1201 = vmatpush1.bf16.msra.mxu0 0
      %1202 = vmatprep.subr.bf16.mxu0 0
      %1203 = vmatpush1.bf16.msra.mxu0 0
      %1204 = vmatprep.subr.bf16.mxu0 0
      %1205 = vmatpush1.bf16.msra.mxu0 0
      %1206 = vmatprep.subr.bf16.mxu0 0
      %1207 = vmatpush1.bf16.msra.mxu0 0
      %1208 = vmatprep.subr.bf16.mxu0 0
      %1209 = vmatpush1.bf16.msra.mxu0 0
      %1210 = vmatprep.subr.bf16.mxu0 0
      %1211 = vmatpush1.bf16.msra.mxu0 0
      %1212 = vmatprep.subr.bf16.mxu0 0
      %1213 = vmatpush1.bf16.msra.mxu0 0
      %1214 = vmatprep.subr.bf16.mxu0 0
      %1215 = vmatpush1.bf16.msra.mxu0 0
      %1216 = vmatprep.mubr.bf16.mxu0 0
      %1217 = vmatmul.mubr.bf16.gmra.mrb[0].mxu0 %v1137
      %v1218 = vpop.f32.mrb[0].mxu0
      %v1219 = vadd.f32 0.0, %v1218
      %v1220 = vpop.f32.mrb[0].mxu0
      %v1221 = vpop.f32.mrb[0].mxu0
      %v1222 = vadd.f32 0.0, %v1221
      %v1223 = vpop.f32.mrb[0].mxu0
      %1224 = vmatprep.mubr.bf16.mxu0 0
      %1225 = vmatmul.mubr.bf16.gmra.mrb[0].mxu0 %v1140
      %v1226 = vpop.f32.mrb[0].mxu0
      %v1227 = vadd.f32 0.0, %v1226
      %v1228 = vpop.f32.mrb[0].mxu0
      %v1229 = vpop.f32.mrb[0].mxu0
      %v1230 = vadd.f32 0.0, %v1229
      %v1231 = vpop.f32.mrb[0].mxu0
      %1232 = vmatprep.mubr.bf16.mxu0 0
      %1233 = vmatmul.mubr.bf16.gmra.mrb[0].mxu0 %v1143
      %v1234 = vpop.f32.mrb[0].mxu0
      %v1235 = vadd.f32 0.0, %v1234
      %v1236 = vpop.f32.mrb[0].mxu0
      %v1237 = vpop.f32.mrb[0].mxu0
      %v1238 = vadd.f32 0.0, %v1237
      %v1239 = vpop.f32.mrb[0].mxu0
      %1240 = vmatprep.mubr.bf16.mxu0 0
      %1241 = vmatmul.mubr.bf16.gmra.mrb[0].mxu0 %v1146
      %v1242 = vpop.f32.mrb[0].mxu0
      %v1243 = vadd.f32 0.0, %v1242
      %v1244 = vpop.f32.mrb[0].mxu0
      %v1245 = vpop.f32.mrb[0].mxu0
      %v1246 = vadd.f32 0.0, %v1245
      %v1247 = vpop.f32.mrb[0].mxu0
      %1248 = vmatprep.mubr.bf16.mxu0 0
      %1249 = vmatmul.mubr.bf16.gmra.mrb[0].mxu0 %v1149
      %v1250 = vpop.f32.mrb[0].mxu0
      %v1251 = vadd.f32 0.0, %v1250
      %v1252 = vpop.f32.mrb[0].mxu0
      %v1253 = vpop.f32.mrb[0].mxu0
      %v1254 = vadd.f32 0.0, %v1253
      %v1255 = vpop.f32.mrb[0].mxu0
      %1256 = vmatprep.mubr.bf16.mxu0 0
      %1257 = vmatmul.mubr.bf16.gmra.mrb[0].mxu0 %v1152
      %v1258 = vpop.f32.mrb[0].mxu0
      %v1259 = vadd.f32 0.0, %v1258
      %v1260 = vpop.f32.mrb[0].mxu0
      %v1261 = vpop.f32.mrb[0].mxu0
      %v1262 = vadd.f32 0.0, %v1261
      %v1263 = vpop.f32.mrb[0].mxu0
      %1264 = vmatprep.mubr.bf16.mxu0 0
      %1265 = vmatmul.mubr.bf16.gmra.mrb[0].mxu0 %v1155
      %v1266 = vpop.f32.mrb[0].mxu0
      %v1267 = vadd.f32 0.0, %v1266
      %v1268 = vpop.f32.mrb[0].mxu0
      %v1269 = vpop.f32.mrb[0].mxu0
      %v1270 = vadd.f32 0.0, %v1269
      %v1271 = vpop.f32.mrb[0].mxu0
      %1272 = vmatprep.mubr.bf16.mxu0 0
      %1273 = vmatmul.mubr.bf16.gmra.mrb[0].mxu0 %v1158
      %v1274 = vpop.f32.mrb[0].mxu0
      %v1275 = vadd.f32 0.0, %v1274
      %v1276 = vpop.f32.mrb[0].mxu0
      %v1277 = vpop.f32.mrb[0].mxu0
      %v1278 = vadd.f32 0.0, %v1277
      %v1279 = vpop.f32.mrb[0].mxu0
      %1280 = vmatprep.mubr.bf16.mxu0 0
      %1281 = vmatmul.mubr.bf16.gmra.mrb[0].mxu0 %v1161
      %v1282 = vpop.f32.mrb[0].mxu0
      %v1283 = vadd.f32 0.0, %v1282
      %v1284 = vpop.f32.mrb[0].mxu0
      %v1285 = vpop.f32.mrb[0].mxu0
      %v1286 = vadd.f32 0.0, %v1285
      %v1287 = vpop.f32.mrb[0].mxu0
      %1288 = vmatprep.mubr.bf16.mxu0 0
      %1289 = vmatmul.mubr.bf16.gmra.mrb[0].mxu0 %v1164
      %v1290 = vpop.f32.mrb[0].mxu0
      %v1291 = vadd.f32 0.0, %v1290
      %v1292 = vpop.f32.mrb[0].mxu0
      %v1293 = vpop.f32.mrb[0].mxu0
      %v1294 = vadd.f32 0.0, %v1293
      %v1295 = vpop.f32.mrb[0].mxu0
      %1296 = vmatprep.mubr.bf16.mxu0 0
      %1297 = vmatmul.mubr.bf16.gmra.mrb[0].mxu0 %v1167
      %v1298 = vpop.f32.mrb[0].mxu0
      %v1299 = vadd.f32 0.0, %v1298
      %v1300 = vpop.f32.mrb[0].mxu0
      %v1301 = vpop.f32.mrb[0].mxu0
      %v1302 = vadd.f32 0.0, %v1301
      %v1303 = vpop.f32.mrb[0].mxu0
      %1304 = vmatprep.mubr.bf16.mxu0 0
      %1305 = vmatmul.mubr.bf16.gmra.mrb[0].mxu0 %v1170
      %v1306 = vpop.f32.mrb[0].mxu0
      %v1307 = vadd.f32 0.0, %v1306
      %v1308 = vpop.f32.mrb[0].mxu0
      %v1309 = vpop.f32.mrb[0].mxu0
      %v1310 = vadd.f32 0.0, %v1309
      %v1311 = vpop.f32.mrb[0].mxu0
      %1312 = vmatprep.mubr.bf16.mxu0 0
      %1313 = vmatmul.mubr.bf16.gmra.mrb[0].mxu0 %v1173
      %v1314 = vpop.f32.mrb[0].mxu0
      %v1315 = vadd.f32 0.0, %v1314
      %v1316 = vpop.f32.mrb[0].mxu0
      %v1317 = vpop.f32.mrb[0].mxu0
      %v1318 = vadd.f32 0.0, %v1317
      %v1319 = vpop.f32.mrb[0].mxu0
      %1320 = vmatprep.mubr.bf16.mxu0 0
      %1321 = vmatmul.mubr.bf16.gmra.mrb[0].mxu0 %v1176
      %v1322 = vpop.f32.mrb[0].mxu0
      %v1323 = vadd.f32 0.0, %v1322
      %v1324 = vpop.f32.mrb[0].mxu0
      %v1325 = vpop.f32.mrb[0].mxu0
      %v1326 = vadd.f32 0.0, %v1325
      %v1327 = vpop.f32.mrb[0].mxu0
      %1328 = vmatprep.mubr.bf16.mxu0 0
      %1329 = vmatmul.mubr.bf16.gmra.mrb[0].mxu0 %v1179
      %v1330 = vpop.f32.mrb[0].mxu0
      %v1331 = vadd.f32 0.0, %v1330
      %v1332 = vpop.f32.mrb[0].mxu0
      %v1333 = vpop.f32.mrb[0].mxu0
      %v1334 = vadd.f32 0.0, %v1333
      %v1335 = vpop.f32.mrb[0].mxu0
      %1336 = vmatprep.mubr.bf16.mxu0 0
      %1337 = vmatmul.mubr.bf16.gmra.mrb[0].mxu0 %v1182
      %v1338 = vpop.f32.mrb[0].mxu0
      %v1339 = vadd.f32 0.0, %v1338
      %v1340 = vpop.f32.mrb[0].mxu0
      %v1341 = vpop.f32.mrb[0].mxu0
      %v1342 = vadd.f32 0.0, %v1341
      %v1343 = vpop.f32.mrb[0].mxu0
      %1344 = vdwg.mxu0
      %v1345 = vld [vmem:[%s6] sm:$0xf]
      %v1346 = vld [vmem:[%s6 + $0x4] sm:$0xf]
      %v1349 = vunpack.c.l.b16 %v1345
      %v1350 = vunpack.c.l.b16 %v1346
      %v1351 = vpack.c.b16 %v1350, %v1349
      %1353 = vmatprep.subr.bf16.mxu0 0
      %1354 = vmatpush1.bf16.msra.mxu0 %v1351
      %1355 = vmatprep.subr.bf16.mxu0 0
      %1356 = vmatpush1.bf16.msra.mxu0 0
      %1357 = vmatprep.subr.bf16.mxu0 0
      %1358 = vmatpush1.bf16.msra.mxu0 0
      %1359 = vmatprep.subr.bf16.mxu0 0
      %1360 = vmatpush1.bf16.msra.mxu0 0
      %1361 = vmatprep.subr.bf16.mxu0 0
      %1362 = vmatpush1.bf16.msra.mxu0 0
      %1363 = vmatprep.subr.bf16.mxu0 0
      %1364 = vmatpush1.bf16.msra.mxu0 0
      %1365 = vmatprep.subr.bf16.mxu0 0
      %1366 = vmatpush1.bf16.msra.mxu0 0
      %1367 = vmatprep.subr.bf16.mxu0 0
      %1368 = vmatpush1.bf16.msra.mxu0 0
      %1369 = vmatprep.subr.bf16.mxu0 0
      %1370 = vmatpush1.bf16.msra.mxu0 0
      %1371 = vmatprep.subr.bf16.mxu0 0
      %1372 = vmatpush1.bf16.msra.mxu0 0
      %1373 = vmatprep.subr.bf16.mxu0 0
      %1374 = vmatpush1.bf16.msra.mxu0 0
      %1375 = vmatprep.subr.bf16.mxu0 0
      %1376 = vmatpush1.bf16.msra.mxu0 0
      %1377 = vmatprep.subr.bf16.mxu0 0
      %1378 = vmatpush1.bf16.msra.mxu0 0
      %1379 = vmatprep.subr.bf16.mxu0 0
      %1380 = vmatpush1.bf16.msra.mxu0 0
      %1381 = vmatprep.subr.bf16.mxu0 0
      %1382 = vmatpush1.bf16.msra.mxu0 0
      %1383 = vmatprep.subr.bf16.mxu0 0
      %1384 = vmatpush1.bf16.msra.mxu0 0
      %1385 = vmatprep.mubr.bf16.mxu0 0
      %1386 = vmatmul.mubr.bf16.gmra.mrb[0].mxu0 %v1137
      %v1387 = vpop.f32.mrb[0].mxu0
      %v1388 = vadd.f32 0.0, %v1387
      %v1389 = vpop.f32.mrb[0].mxu0
      %v1390 = vpop.f32.mrb[0].mxu0
      %v1391 = vadd.f32 0.0, %v1390
      %v1392 = vpop.f32.mrb[0].mxu0
      %1393 = vmatprep.mubr.bf16.mxu0 0
      %1394 = vmatmul.mubr.bf16.gmra.mrb[0].mxu0 %v1140
      %v1395 = vpop.f32.mrb[0].mxu0
      %v1396 = vadd.f32 0.0, %v1395
      %v1397 = vpop.f32.mrb[0].mxu0
      %v1398 = vpop.f32.mrb[0].mxu0
      %v1399 = vadd.f32 0.0, %v1398
      %v1400 = vpop.f32.mrb[0].mxu0
      %1401 = vmatprep.mubr.bf16.mxu0 0
      %1402 = vmatmul.mubr.bf16.gmra.mrb[0].mxu0 %v1143
      %v1403 = vpop.f32.mrb[0].mxu0
      %v1404 = vadd.f32 0.0, %v1403
      %v1405 = vpop.f32.mrb[0].mxu0
      %v1406 = vpop.f32.mrb[0].mxu0
      %v1407 = vadd.f32 0.0, %v1406
      %v1408 = vpop.f32.mrb[0].mxu0
      %1409 = vmatprep.mubr.bf16.mxu0 0
      %1410 = vmatmul.mubr.bf16.gmra.mrb[0].mxu0 %v1146
      %v1411 = vpop.f32.mrb[0].mxu0
      %v1412 = vadd.f32 0.0, %v1411
      %v1413 = vpop.f32.mrb[0].mxu0
      %v1414 = vpop.f32.mrb[0].mxu0
      %v1415 = vadd.f32 0.0, %v1414
      %v1416 = vpop.f32.mrb[0].mxu0
      %1417 = vmatprep.mubr.bf16.mxu0 0
      %1418 = vmatmul.mubr.bf16.gmra.mrb[0].mxu0 %v1149
      %v1419 = vpop.f32.mrb[0].mxu0
      %v1420 = vadd.f32 0.0, %v1419
      %v1421 = vpop.f32.mrb[0].mxu0
      %v1422 = vpop.f32.mrb[0].mxu0
      %v1423 = vadd.f32 0.0, %v1422
      %v1424 = vpop.f32.mrb[0].mxu0
      %1425 = vmatprep.mubr.bf16.mxu0 0
      %1426 = vmatmul.mubr.bf16.gmra.mrb[0].mxu0 %v1152
      %v1427 = vpop.f32.mrb[0].mxu0
      %v1428 = vadd.f32 0.0, %v1427
      %v1429 = vpop.f32.mrb[0].mxu0
      %v1430 = vpop.f32.mrb[0].mxu0
      %v1431 = vadd.f32 0.0, %v1430
      %v1432 = vpop.f32.mrb[0].mxu0
      %1433 = vmatprep.mubr.bf16.mxu0 0
      %1434 = vmatmul.mubr.bf16.gmra.mrb[0].mxu0 %v1155
      %v1435 = vpop.f32.mrb[0].mxu0
      %v1436 = vadd.f32 0.0, %v1435
      %v1437 = vpop.f32.mrb[0].mxu0
      %v1438 = vpop.f32.mrb[0].mxu0
      %v1439 = vadd.f32 0.0, %v1438
      %v1440 = vpop.f32.mrb[0].mxu0
      %1441 = vmatprep.mubr.bf16.mxu0 0
      %1442 = vmatmul.mubr.bf16.gmra.mrb[0].mxu0 %v1158
      %v1443 = vpop.f32.mrb[0].mxu0
      %v1444 = vadd.f32 0.0, %v1443
      %v1445 = vpop.f32.mrb[0].mxu0
      %v1446 = vpop.f32.mrb[0].mxu0
      %v1447 = vadd.f32 0.0, %v1446
      %v1448 = vpop.f32.mrb[0].mxu0
      %1449 = vmatprep.mubr.bf16.mxu0 0
      %1450 = vmatmul.mubr.bf16.gmra.mrb[0].mxu0 %v1161
      %v1451 = vpop.f32.mrb[0].mxu0
      %v1452 = vadd.f32 0.0, %v1451
      %v1453 = vpop.f32.mrb[0].mxu0
      %v1454 = vpop.f32.mrb[0].mxu0
      %v1455 = vadd.f32 0.0, %v1454
      %v1456 = vpop.f32.mrb[0].mxu0
      %1457 = vmatprep.mubr.bf16.mxu0 0
      %1458 = vmatmul.mubr.bf16.gmra.mrb[0].mxu0 %v1164
      %v1459 = vpop.f32.mrb[0].mxu0
      %v1460 = vadd.f32 0.0, %v1459
      %v1461 = vpop.f32.mrb[0].mxu0
      %v1462 = vpop.f32.mrb[0].mxu0
      %v1463 = vadd.f32 0.0, %v1462
      %v1464 = vpop.f32.mrb[0].mxu0
      %1465 = vmatprep.mubr.bf16.mxu0 0
      %1466 = vmatmul.mubr.bf16.gmra.mrb[0].mxu0 %v1167
      %v1467 = vpop.f32.mrb[0].mxu0
      %v1468 = vadd.f32 0.0, %v1467
      %v1469 = vpop.f32.mrb[0].mxu0
      %v1470 = vpop.f32.mrb[0].mxu0
      %v1471 = vadd.f32 0.0, %v1470
      %v1472 = vpop.f32.mrb[0].mxu0
      %1473 = vmatprep.mubr.bf16.mxu0 0
      %1474 = vmatmul.mubr.bf16.gmra.mrb[0].mxu0 %v1170
      %v1475 = vpop.f32.mrb[0].mxu0
      %v1476 = vadd.f32 0.0, %v1475
      %v1477 = vpop.f32.mrb[0].mxu0
      %v1478 = vpop.f32.mrb[0].mxu0
      %v1479 = vadd.f32 0.0, %v1478
      %v1480 = vpop.f32.mrb[0].mxu0
      %1481 = vmatprep.mubr.bf16.mxu0 0
      %1482 = vmatmul.mubr.bf16.gmra.mrb[0].mxu0 %v1173
      %v1483 = vpop.f32.mrb[0].mxu0
      %v1484 = vadd.f32 0.0, %v1483
      %v1485 = vpop.f32.mrb[0].mxu0
      %v1486 = vpop.f32.mrb[0].mxu0
      %v1487 = vadd.f32 0.0, %v1486
      %v1488 = vpop.f32.mrb[0].mxu0
      %1489 = vmatprep.mubr.bf16.mxu0 0
      %1490 = vmatmul.mubr.bf16.gmra.mrb[0].mxu0 %v1176
      %v1491 = vpop.f32.mrb[0].mxu0
      %v1492 = vadd.f32 0.0, %v1491
      %v1493 = vpop.f32.mrb[0].mxu0
      %v1494 = vpop.f32.mrb[0].mxu0
      %v1495 = vadd.f32 0.0, %v1494
      %v1496 = vpop.f32.mrb[0].mxu0
      %1497 = vmatprep.mubr.bf16.mxu0 0
      %1498 = vmatmul.mubr.bf16.gmra.mrb[0].mxu0 %v1179
      %v1499 = vpop.f32.mrb[0].mxu0
      %v1500 = vadd.f32 0.0, %v1499
      %v1501 = vpop.f32.mrb[0].mxu0
      %v1502 = vpop.f32.mrb[0].mxu0
      %v1503 = vadd.f32 0.0, %v1502
      %v1504 = vpop.f32.mrb[0].mxu0
      %1505 = vmatprep.mubr.bf16.mxu0 0
      %1506 = vmatmul.mubr.bf16.gmra.mrb[0].mxu0 %v1182
      %v1507 = vpop.f32.mrb[0].mxu0
      %v1508 = vadd.f32 0.0, %v1507
      %v1509 = vpop.f32.mrb[0].mxu0
      %v1510 = vpop.f32.mrb[0].mxu0
      %v1511 = vadd.f32 0.0, %v1510
      %v1512 = vpop.f32.mrb[0].mxu0
      %1513 = vdwg.mxu0
      %v1514 = vld [vmem:[%s306] sm:$0xff]
      %v1515 = vld [vmem:[%s306 + $0x8] sm:$0xff]
      %v1516 = vld [vmem:[%s306 + $0x10] sm:$0xff]
      %v1517 = vld [vmem:[%s306 + $0x18] sm:$0xff]
      %v1518 = vld [vmem:[%s306 + $0x20] sm:$0xff]
      %v1519 = vld [vmem:[%s306 + $0x28] sm:$0xff]
      %v1520 = vld [vmem:[%s306 + $0x30] sm:$0xff]
      %v1521 = vld [vmem:[%s306 + $0x38] sm:$0xff]
      %v1522 = vld [vmem:[%s306 + $0x40] sm:$0xff]
      %v1523 = vld [vmem:[%s306 + $0x48] sm:$0xff]
      %v1524 = vld [vmem:[%s306 + $0x50] sm:$0xff]
      %v1525 = vld [vmem:[%s306 + $0x58] sm:$0xff]
      %v1526 = vld [vmem:[%s306 + $0x60] sm:$0xff]
      %v1527 = vld [vmem:[%s306 + $0x68] sm:$0xff]
      %v1528 = vld [vmem:[%s306 + $0x70] sm:$0xff]
      %v1529 = vld [vmem:[%s306 + $0x78] sm:$0xff]
      %v1530 = vld [vmem:[%s306 + $0x80] sm:$0xff]
      %v1531 = vld [vmem:[%s306 + $0x88] sm:$0xff]
      %v1532 = vld [vmem:[%s306 + $0x90] sm:$0xff]
      %v1533 = vld [vmem:[%s306 + $0x98] sm:$0xff]
      %v1534 = vld [vmem:[%s306 + $0xa0] sm:$0xff]
      %v1535 = vld [vmem:[%s306 + $0xa8] sm:$0xff]
      %v1536 = vld [vmem:[%s306 + $0xb0] sm:$0xff]
      %v1537 = vld [vmem:[%s306 + $0xb8] sm:$0xff]
      %v1538 = vld [vmem:[%s306 + $0xc0] sm:$0xff]
      %v1539 = vld [vmem:[%s306 + $0xc8] sm:$0xff]
      %v1540 = vld [vmem:[%s306 + $0xd0] sm:$0xff]
      %v1541 = vld [vmem:[%s306 + $0xd8] sm:$0xff]
      %v1542 = vld [vmem:[%s306 + $0xe0] sm:$0xff]
      %v1543 = vld [vmem:[%s306 + $0xe8] sm:$0xff]
      %v1544 = vld [vmem:[%s306 + $0xf0] sm:$0xff]
      %v1545 = vld [vmem:[%s306 + $0xf8] sm:$0xff]
      %v1546 = vadd.f32 %v1514, %v563
      %v1547 = vadd.f32 %v1515, %v566
      %v1548 = vadd.f32 %v1516, %v571
      %v1549 = vadd.f32 %v1517, %v574
      %v1550 = vadd.f32 %v1518, %v579
      %v1551 = vadd.f32 %v1519, %v582
      %v1552 = vadd.f32 %v1520, %v587
      %v1553 = vadd.f32 %v1521, %v590
      %v1554 = vadd.f32 %v1522, %v595
      %v1555 = vadd.f32 %v1523, %v598
      %v1556 = vadd.f32 %v1524, %v603
      %v1557 = vadd.f32 %v1525, %v606
      %v1558 = vadd.f32 %v1526, %v611
      %v1559 = vadd.f32 %v1527, %v614
      %v1560 = vadd.f32 %v1528, %v619
      %v1561 = vadd.f32 %v1529, %v622
      %v1562 = vadd.f32 %v1530, %v627
      %v1563 = vadd.f32 %v1531, %v630
      %v1564 = vadd.f32 %v1532, %v635
      %v1565 = vadd.f32 %v1533, %v638
      %v1566 = vadd.f32 %v1534, %v643
      %v1567 = vadd.f32 %v1535, %v646
      %v1568 = vadd.f32 %v1536, %v651
      %v1569 = vadd.f32 %v1537, %v654
      %v1570 = vadd.f32 %v1538, %v659
      %v1571 = vadd.f32 %v1539, %v662
      %v1572 = vadd.f32 %v1540, %v667
      %v1573 = vadd.f32 %v1541, %v670
      %v1574 = vadd.f32 %v1542, %v675
      %v1575 = vadd.f32 %v1543, %v678
      %v1576 = vadd.f32 %v1544, %v683
      %v1577 = vadd.f32 %v1545, %v686
      %v1578 = vmul.f32 %v1514, %v1219
      %v1579 = vmul.f32 %v1515, %v1222
      %v1580 = vmul.f32 %v1516, %v1227
      %v1581 = vmul.f32 %v1517, %v1230
      %v1582 = vmul.f32 %v1518, %v1235
      %v1583 = vmul.f32 %v1519, %v1238
      %v1584 = vmul.f32 %v1520, %v1243
      %v1585 = vmul.f32 %v1521, %v1246
      %v1586 = vmul.f32 %v1522, %v1251
      %v1587 = vmul.f32 %v1523, %v1254
      %v1588 = vmul.f32 %v1524, %v1259
      %v1589 = vmul.f32 %v1525, %v1262
      %v1590 = vmul.f32 %v1526, %v1267
      %v1591 = vmul.f32 %v1527, %v1270
      %v1592 = vmul.f32 %v1528, %v1275
      %v1593 = vmul.f32 %v1529, %v1278
      %v1594 = vmul.f32 %v1530, %v1283
      %v1595 = vmul.f32 %v1531, %v1286
      %v1596 = vmul.f32 %v1532, %v1291
      %v1597 = vmul.f32 %v1533, %v1294
      %v1598 = vmul.f32 %v1534, %v1299
      %v1599 = vmul.f32 %v1535, %v1302
      %v1600 = vmul.f32 %v1536, %v1307
      %v1601 = vmul.f32 %v1537, %v1310
      %v1602 = vmul.f32 %v1538, %v1315
      %v1603 = vmul.f32 %v1539, %v1318
      %v1604 = vmul.f32 %v1540, %v1323
      %v1605 = vmul.f32 %v1541, %v1326
      %v1606 = vmul.f32 %v1542, %v1331
      %v1607 = vmul.f32 %v1543, %v1334
      %v1608 = vmul.f32 %v1544, %v1339
      %v1609 = vmul.f32 %v1545, %v1342
      %v1610 = vadd.f32 %v1546, %v1578
      %v1611 = vadd.f32 %v1547, %v1579
      %v1612 = vadd.f32 %v1548, %v1580
      %v1613 = vadd.f32 %v1549, %v1581
      %v1614 = vadd.f32 %v1550, %v1582
      %v1615 = vadd.f32 %v1551, %v1583
      %v1616 = vadd.f32 %v1552, %v1584
      %v1617 = vadd.f32 %v1553, %v1585
      %v1618 = vadd.f32 %v1554, %v1586
      %v1619 = vadd.f32 %v1555, %v1587
      %v1620 = vadd.f32 %v1556, %v1588
      %v1621 = vadd.f32 %v1557, %v1589
      %v1622 = vadd.f32 %v1558, %v1590
      %v1623 = vadd.f32 %v1559, %v1591
      %v1624 = vadd.f32 %v1560, %v1592
      %v1625 = vadd.f32 %v1561, %v1593
      %v1626 = vadd.f32 %v1562, %v1594
      %v1627 = vadd.f32 %v1563, %v1595
      %v1628 = vadd.f32 %v1564, %v1596
      %v1629 = vadd.f32 %v1565, %v1597
      %v1630 = vadd.f32 %v1566, %v1598
      %v1631 = vadd.f32 %v1567, %v1599
      %v1632 = vadd.f32 %v1568, %v1600
      %v1633 = vadd.f32 %v1569, %v1601
      %v1634 = vadd.f32 %v1570, %v1602
      %v1635 = vadd.f32 %v1571, %v1603
      %v1636 = vadd.f32 %v1572, %v1604
      %v1637 = vadd.f32 %v1573, %v1605
      %v1638 = vadd.f32 %v1574, %v1606
      %v1639 = vadd.f32 %v1575, %v1607
      %v1640 = vadd.f32 %v1576, %v1608
      %v1641 = vadd.f32 %v1577, %v1609
      %v1642 = vadd.f32 %v1610, %v1388
      %v1643 = vadd.f32 %v1611, %v1391
      %v1644 = vadd.f32 %v1612, %v1396
      %v1645 = vadd.f32 %v1613, %v1399
      %v1646 = vadd.f32 %v1614, %v1404
      %v1647 = vadd.f32 %v1615, %v1407
      %v1648 = vadd.f32 %v1616, %v1412
      %v1649 = vadd.f32 %v1617, %v1415
      %v1650 = vadd.f32 %v1618, %v1420
      %v1651 = vadd.f32 %v1619, %v1423
      %v1652 = vadd.f32 %v1620, %v1428
      %v1653 = vadd.f32 %v1621, %v1431
      %v1654 = vadd.f32 %v1622, %v1436
      %v1655 = vadd.f32 %v1623, %v1439
      %v1656 = vadd.f32 %v1624, %v1444
      %v1657 = vadd.f32 %v1625, %v1447
      %v1658 = vadd.f32 %v1626, %v1452
      %v1659 = vadd.f32 %v1627, %v1455
      %v1660 = vadd.f32 %v1628, %v1460
      %v1661 = vadd.f32 %v1629, %v1463
      %v1662 = vadd.f32 %v1630, %v1468
      %v1663 = vadd.f32 %v1631, %v1471
      %v1664 = vadd.f32 %v1632, %v1476
      %v1665 = vadd.f32 %v1633, %v1479
      %v1666 = vadd.f32 %v1634, %v1484
      %v1667 = vadd.f32 %v1635, %v1487
      %v1668 = vadd.f32 %v1636, %v1492
      %v1669 = vadd.f32 %v1637, %v1495
      %v1670 = vadd.f32 %v1638, %v1500
      %v1671 = vadd.f32 %v1639, %v1503
      %v1672 = vadd.f32 %v1640, %v1508
      %v1673 = vadd.f32 %v1641, %v1511
      %vm1674 = vcmp.ge.f32.partialorder %v1642, 0.0
      %vm1675 = vcmp.ge.f32.partialorder %v1643, 0.0
      %vm1676 = vcmp.ge.f32.partialorder %v1644, 0.0
      %vm1677 = vcmp.ge.f32.partialorder %v1645, 0.0
      %vm1678 = vcmp.ge.f32.partialorder %v1646, 0.0
      %vm1679 = vcmp.ge.f32.partialorder %v1647, 0.0
      %vm1680 = vcmp.ge.f32.partialorder %v1648, 0.0
      %vm1681 = vcmp.ge.f32.partialorder %v1649, 0.0
      %vm1682 = vcmp.ge.f32.partialorder %v1650, 0.0
      %vm1683 = vcmp.ge.f32.partialorder %v1651, 0.0
      %vm1684 = vcmp.ge.f32.partialorder %v1652, 0.0
      %vm1685 = vcmp.ge.f32.partialorder %v1653, 0.0
      %vm1686 = vcmp.ge.f32.partialorder %v1654, 0.0
      %vm1687 = vcmp.ge.f32.partialorder %v1655, 0.0
      %vm1688 = vcmp.ge.f32.partialorder %v1656, 0.0
      %vm1689 = vcmp.ge.f32.partialorder %v1657, 0.0
      %vm1690 = vcmp.ge.f32.partialorder %v1658, 0.0
      %vm1691 = vcmp.ge.f32.partialorder %v1659, 0.0
      %vm1692 = vcmp.ge.f32.partialorder %v1660, 0.0
      %vm1693 = vcmp.ge.f32.partialorder %v1661, 0.0
      %vm1694 = vcmp.ge.f32.partialorder %v1662, 0.0
      %vm1695 = vcmp.ge.f32.partialorder %v1663, 0.0
      %vm1696 = vcmp.ge.f32.partialorder %v1664, 0.0
      %vm1697 = vcmp.ge.f32.partialorder %v1665, 0.0
      %vm1698 = vcmp.ge.f32.partialorder %v1666, 0.0
      %vm1699 = vcmp.ge.f32.partialorder %v1667, 0.0
      %vm1700 = vcmp.ge.f32.partialorder %v1668, 0.0
      %vm1701 = vcmp.ge.f32.partialorder %v1669, 0.0
      %vm1702 = vcmp.ge.f32.partialorder %v1670, 0.0
      %vm1703 = vcmp.ge.f32.partialorder %v1671, 0.0
      %vm1704 = vcmp.ge.f32.partialorder %v1672, 0.0
      %vm1705 = vcmp.ge.f32.partialorder %v1673, 0.0
      %v1706 = vmul.f32 %v1642, 0.1
      %v1707 = vmul.f32 %v1643, 0.1
      %v1708 = vmul.f32 %v1644, 0.1
      %v1709 = vmul.f32 %v1645, 0.1
      %v1710 = vmul.f32 %v1646, 0.1
      %v1711 = vmul.f32 %v1647, 0.1
      %v1712 = vmul.f32 %v1648, 0.1
      %v1713 = vmul.f32 %v1649, 0.1
      %v1714 = vmul.f32 %v1650, 0.1
      %v1715 = vmul.f32 %v1651, 0.1
      %v1716 = vmul.f32 %v1652, 0.1
      %v1717 = vmul.f32 %v1653, 0.1
      %v1718 = vmul.f32 %v1654, 0.1
      %v1719 = vmul.f32 %v1655, 0.1
      %v1720 = vmul.f32 %v1656, 0.1
      %v1721 = vmul.f32 %v1657, 0.1
      %v1722 = vmul.f32 %v1658, 0.1
      %v1723 = vmul.f32 %v1659, 0.1
      %v1724 = vmul.f32 %v1660, 0.1
      %v1725 = vmul.f32 %v1661, 0.1
      %v1726 = vmul.f32 %v1662, 0.1
      %v1727 = vmul.f32 %v1663, 0.1
      %v1728 = vmul.f32 %v1664, 0.1
      %v1729 = vmul.f32 %v1665, 0.1
      %v1730 = vmul.f32 %v1666, 0.1
      %v1731 = vmul.f32 %v1667, 0.1
      %v1732 = vmul.f32 %v1668, 0.1
      %v1733 = vmul.f32 %v1669, 0.1
      %v1734 = vmul.f32 %v1670, 0.1
      %v1735 = vmul.f32 %v1671, 0.1
      %v1736 = vmul.f32 %v1672, 0.1
      %v1737 = vmul.f32 %v1673, 0.1
      %v1738 = vsel %vm1674, %v1642, %v1706
      %v1739 = vsel %vm1675, %v1643, %v1707
      %v1740 = vsel %vm1676, %v1644, %v1708
      %v1741 = vsel %vm1677, %v1645, %v1709
      %v1742 = vsel %vm1678, %v1646, %v1710
      %v1743 = vsel %vm1679, %v1647, %v1711
      %v1744 = vsel %vm1680, %v1648, %v1712
      %v1745 = vsel %vm1681, %v1649, %v1713
      %v1746 = vsel %vm1682, %v1650, %v1714
      %v1747 = vsel %vm1683, %v1651, %v1715
      %v1748 = vsel %vm1684, %v1652, %v1716
      %v1749 = vsel %vm1685, %v1653, %v1717
      %v1750 = vsel %vm1686, %v1654, %v1718
      %v1751 = vsel %vm1687, %v1655, %v1719
      %v1752 = vsel %vm1688, %v1656, %v1720
      %v1753 = vsel %vm1689, %v1657, %v1721
      %v1754 = vsel %vm1690, %v1658, %v1722
      %v1755 = vsel %vm1691, %v1659, %v1723
      %v1756 = vsel %vm1692, %v1660, %v1724
      %v1757 = vsel %vm1693, %v1661, %v1725
      %v1758 = vsel %vm1694, %v1662, %v1726
      %v1759 = vsel %vm1695, %v1663, %v1727
      %v1760 = vsel %vm1696, %v1664, %v1728
      %v1761 = vsel %vm1697, %v1665, %v1729
      %v1762 = vsel %vm1698, %v1666, %v1730
      %v1763 = vsel %vm1699, %v1667, %v1731
      %v1764 = vsel %vm1700, %v1668, %v1732
      %v1765 = vsel %vm1701, %v1669, %v1733
      %v1766 = vsel %vm1702, %v1670, %v1734
      %v1767 = vsel %vm1703, %v1671, %v1735
      %v1768 = vsel %vm1704, %v1672, %v1736
      %v1769 = vsel %vm1705, %v1673, %v1737
      %1770 = vst.msk [vmem:[%s324] sm:$0xff] %vm802, %v1738
      %1771 = vst.msk [vmem:[%s324 + $0x8] sm:$0xff] %vm802, %v1739
      %1772 = vst.msk [vmem:[%s324 + $0x10] sm:$0xff] %vm802, %v1740
      %1773 = vst.msk [vmem:[%s324 + $0x18] sm:$0xff] %vm802, %v1741
      %1774 = vst.msk [vmem:[%s324 + $0x20] sm:$0xff] %vm802, %v1742
      %1775 = vst.msk [vmem:[%s324 + $0x28] sm:$0xff] %vm802, %v1743
      %1776 = vst.msk [vmem:[%s324 + $0x30] sm:$0xff] %vm802, %v1744
      %1777 = vst.msk [vmem:[%s324 + $0x38] sm:$0xff] %vm802, %v1745
      %1778 = vst.msk [vmem:[%s324 + $0x40] sm:$0xff] %vm802, %v1746
      %1779 = vst.msk [vmem:[%s324 + $0x48] sm:$0xff] %vm802, %v1747
      %1780 = vst.msk [vmem:[%s324 + $0x50] sm:$0xff] %vm802, %v1748
      %1781 = vst.msk [vmem:[%s324 + $0x58] sm:$0xff] %vm802, %v1749
      %1782 = vst.msk [vmem:[%s324 + $0x60] sm:$0xff] %vm802, %v1750
      %1783 = vst.msk [vmem:[%s324 + $0x68] sm:$0xff] %vm802, %v1751
      %1784 = vst.msk [vmem:[%s324 + $0x70] sm:$0xff] %vm802, %v1752
      %1785 = vst.msk [vmem:[%s324 + $0x78] sm:$0xff] %vm802, %v1753
      %1786 = vst.msk [vmem:[%s324 + $0x80] sm:$0xff] %vm802, %v1754
      %1787 = vst.msk [vmem:[%s324 + $0x88] sm:$0xff] %vm802, %v1755
      %1788 = vst.msk [vmem:[%s324 + $0x90] sm:$0xff] %vm802, %v1756
      %1789 = vst.msk [vmem:[%s324 + $0x98] sm:$0xff] %vm802, %v1757
      %1790 = vst.msk [vmem:[%s324 + $0xa0] sm:$0xff] %vm802, %v1758
      %1791 = vst.msk [vmem:[%s324 + $0xa8] sm:$0xff] %vm802, %v1759
      %1792 = vst.msk [vmem:[%s324 + $0xb0] sm:$0xff] %vm802, %v1760
      %1793 = vst.msk [vmem:[%s324 + $0xb8] sm:$0xff] %vm802, %v1761
      %1794 = vst.msk [vmem:[%s324 + $0xc0] sm:$0xff] %vm802, %v1762
      %1795 = vst.msk [vmem:[%s324 + $0xc8] sm:$0xff] %vm802, %v1763
      %1796 = vst.msk [vmem:[%s324 + $0xd0] sm:$0xff] %vm802, %v1764
      %1797 = vst.msk [vmem:[%s324 + $0xd8] sm:$0xff] %vm802, %v1765
      %1798 = vst.msk [vmem:[%s324 + $0xe0] sm:$0xff] %vm802, %v1766
      %1799 = vst.msk [vmem:[%s324 + $0xe8] sm:$0xff] %vm802, %v1767
      %1800 = vst.msk [vmem:[%s324 + $0xf0] sm:$0xff] %vm802, %v1768
      %1801 = vst.msk [vmem:[%s324 + $0xf8] sm:$0xff] %vm802, %v1769
      %s1802 = smul.u32 32, %s18
      %p1803 = scmp.lt.s32.totalorder %s1802, 63
      %s1804 = scalar_select %p1803, %s1802, 63
      %s1805 = smul.addr %s1804, 8
      %s1806 = scalar_lea.vmem %s7, %s1805
      // Predicated region
      $region49: #{dgb_forward.7} parent=47 // pred_check
        %p1807 = pneg %p198
      $region50: #{dgb_forward.7} parent=47 // pred_check_branch
        %1809 = sbr.rel (%p1807) target = $region52
      $region51: #{dgb_forward.7} parent=47 // pred_region
        %s1810 = smul.u32 32, %s18
      $region52: #{dgb_forward.7} parent=47 // pred_fallthru
        _
    $region48: #{dgb_forward.7} parent=5 // pred_fallthru
      _
    %p1811 = scmp.le.s32.totalorder 2, %s13
    // Predicated region
    $region53: #{dgb_forward.7} parent=5 // pred_check
      %p1812 = pneg %p1811
    $region54: #{dgb_forward.7} parent=5 // pred_check_branch
      %1814 = sbr.rel (%p1812) target = $region56
    $region55: #{dgb_forward.7} parent=5 // pred_region
      %s1815 = ssub.s32 %s13, 2
      // Predicated region
      $region57: #{dgb_forward.7} parent=55 // pred_check
        %p1816 = pneg %p204
      $region58: #{dgb_forward.7} parent=55 // pred_check_branch
        %1818 = sbr.rel (%p1816) target = $region60
      $region59: #{dgb_forward.7} parent=55 // pred_region
        %s1819 = smul.u32 32, %s19
        %p1820 = scmp.lt.s32.totalorder %s1819, 63
        %s1821 = scalar_select %p1820, %s1819, 63
        %s1822 = smul.addr %s1821, 8
        %s1823 = scalar_lea.vmem %s7, %s1822
      $region60: #{dgb_forward.7} parent=55 // pred_fallthru
        _
    $region56: #{dgb_forward.7} parent=5 // pred_fallthru
      _
  $region6: #{dgb_forward.7} parent=0 // loop_footer
    %s17 = sadd.s32 1, %s13
  $region7: #{dgb_forward.7} parent=0 // loop_footer_branch
    %12 = sbr.rel target = $region3
  $region8: #{dgb_forward.7} parent=0 // loop_exit
    _

// kernel: dgb_forward.8
$region0: #{dgb_forward.8}
  #allocation0 [shape = 'u32[]', space=smem, size = 0x4, offset = 0x4, fixed_abs, tag = 'smem constant byte address 0x4 - core index']
  #allocation1 [shape = 'u32[144,128]{1,0:T(1,128)}', space=vmem, size = 0x12000, scoped, tag = 'internal scratch']
  %s0 = inlined_call_operand.vmem [shape: bf16[2,288,24], index: 0, kind: input, shape index: {}]
  %s1 = inlined_call_operand.vmem [shape: bf16[3,24,8], index: 1, kind: input, shape index: {}]
  %s2 = inlined_call_operand.vmem [shape: f32[1,8], index: 2, kind: input, shape index: {}]
  %s3 = inlined_call_operand.vmem [shape: f32[2,256,8], index: 3, kind: output, shape index: {}]
  %s4 = sld [smem:[#allocation0]]
  $region45: #{dgb_forward.8} parent=0
    _
  %s6 = ssub.s32 1, %s4
  %s7 = scalar_select 0, %s6, %s4
  loop: start=0, step=1, limit=4
  $region2: #{dgb_forward.8} parent=0 // loop_pre_header
    _
  $region3: #{dgb_forward.8} parent=0 // loop_header
    %s9 = sphi 0, %s13
    %p10 = scmp.ge.s32.totalorder %s9, 4
    %s19 = sphi 0, %s21
    %s22 = sphi 0, %s19
    %s23 = sphi 0, %s22
    %s39 = sphi 0, %s23
    %s43 = sphi 0, %s43
    %s45 = sphi 0, %s43
    %s46 = sphi 0, %s45
    %s60 = sphi 0, %s46
    %s64 = sphi 0, %s64
    %s66 = sphi 0, %s64
    %s67 = sphi 0, %s66
    %s81 = sphi 0, %s67
    %s87 = sphi 0, %s89
    %s90 = sphi 0, %s87
    %s91 = sphi 0, %s90
    %s107 = sphi 0, %s91
  $region4: #{dgb_forward.8} parent=0 // loop_header_branch
    %12 = sbr.rel (%p10) target = $region8
  $region5: #{dgb_forward.8} parent=0 // loop_body
    %s14 = ssub.s32 %s9, 1
    %s15 = ssub.s32 %s9, 2
    %s16 = sadd.s32 %s9, 1
    %s17 = ssub.s32 %s9, %s16
    %p18 = scmp.eq.s32.totalorder %s17, 0
    %s20 = sadd.s32 %s19, 1
    %s21 = scalar_select %p18, %s19, %s20
    %p24 = pneg %p18
    %p25 = scmp.eq.s32.totalorder %s9, 1
    %p26 = por %p24, %p25
    %p27 = scmp.ne.s32.totalorder %s19, %s22
    %p28 = scmp.eq.s32.totalorder %s9, 0
    %p29 = por %p27, %p28
    %p30 = scmp.ne.s32.totalorder %s19, %s22
    %p31 = scmp.eq.s32.totalorder %s14, 1
    %p32 = por %p30, %p31
    %p33 = scmp.ne.s32.totalorder %s22, %s23
    %p34 = scmp.eq.s32.totalorder %s14, 0
    %p35 = por %p33, %p34
    %p36 = scmp.ne.s32.totalorder %s22, %s23
    %p37 = scmp.eq.s32.totalorder %s15, 1
    %p38 = por %p36, %p37
    %p40 = scmp.ne.s32.totalorder %s23, %s39
    %p41 = scmp.eq.s32.totalorder %s15, 0
    %p42 = por %p40, %p41
    %s44 = sadd.s32 %s43, 1
    %p47 = scmp.eq.s32.totalorder %s9, 1
    %p48 = scmp.ne.s32.totalorder %s43, %s45
    %p49 = scmp.eq.s32.totalorder %s9, 0
    %p50 = por %p48, %p49
    %p51 = scmp.ne.s32.totalorder %s43, %s45
    %p52 = scmp.eq.s32.totalorder %s14, 1
    %p53 = por %p51, %p52
    %p54 = scmp.ne.s32.totalorder %s45, %s46
    %p55 = scmp.eq.s32.totalorder %s14, 0
    %p56 = por %p54, %p55
    %p57 = scmp.ne.s32.totalorder %s45, %s46
    %p58 = scmp.eq.s32.totalorder %s15, 1
    %p59 = por %p57, %p58
    %p61 = scmp.ne.s32.totalorder %s46, %s60
    %p62 = scmp.eq.s32.totalorder %s15, 0
    %p63 = por %p61, %p62
    %s65 = sadd.s32 %s64, 1
    %p68 = scmp.eq.s32.totalorder %s9, 1
    %p69 = scmp.ne.s32.totalorder %s64, %s66
    %p70 = scmp.eq.s32.totalorder %s9, 0
    %p71 = por %p69, %p70
    %p72 = scmp.ne.s32.totalorder %s64, %s66
    %p73 = scmp.eq.s32.totalorder %s14, 1
    %p74 = por %p72, %p73
    %p75 = scmp.ne.s32.totalorder %s66, %s67
    %p76 = scmp.eq.s32.totalorder %s14, 0
    %p77 = por %p75, %p76
    %p78 = scmp.ne.s32.totalorder %s66, %s67
    %p79 = scmp.eq.s32.totalorder %s15, 1
    %p80 = por %p78, %p79
    %p82 = scmp.ne.s32.totalorder %s67, %s81
    %p83 = scmp.eq.s32.totalorder %s15, 0
    %p84 = por %p82, %p83
    %s85 = ssub.s32 %s9, %s16
    %p86 = scmp.eq.s32.totalorder %s85, 0
    %s88 = sadd.s32 %s87, 1
    %s89 = scalar_select %p86, %s87, %s88
    %p92 = pneg %p86
    %p93 = scmp.eq.s32.totalorder %s9, 1
    %p94 = por %p92, %p93
    %p95 = scmp.ne.s32.totalorder %s87, %s90
    %p96 = scmp.eq.s32.totalorder %s9, 0
    %p97 = por %p95, %p96
    %p98 = scmp.ne.s32.totalorder %s87, %s90
    %p99 = scmp.eq.s32.totalorder %s14, 1
    %p100 = por %p98, %p99
    %p101 = scmp.ne.s32.totalorder %s90, %s91
    %p102 = scmp.eq.s32.totalorder %s14, 0
    %p103 = por %p101, %p102
    %p104 = scmp.ne.s32.totalorder %s90, %s91
    %p105 = scmp.eq.s32.totalorder %s15, 1
    %p106 = por %p104, %p105
    %p108 = scmp.ne.s32.totalorder %s91, %s107
    %p109 = scmp.eq.s32.totalorder %s15, 0
    %p110 = por %p108, %p109
    %p111 = scmp.le.s32.totalorder 1, %s9
    %p112 = scmp.lt.s32.totalorder %s9, 3
    %p113 = pnand %p111, %p112
    %p114 = pneg %p113
    // Predicated region
    $region9: #{dgb_forward.8} parent=5 // pred_check
      _
    $region10: #{dgb_forward.8} parent=5 // pred_check_branch
      %116 = sbr.rel (%p113) target = $region12
    $region11: #{dgb_forward.8} parent=5 // pred_region
      %s117 = ssub.s32 %s9, 1
      // Predicated region
      $region13: #{dgb_forward.8} parent=11 // pred_check
        %p118 = pneg %p56
      $region14: #{dgb_forward.8} parent=11 // pred_check_branch
        %120 = sbr.rel (%p118) target = $region16
      $region15: #{dgb_forward.8} parent=11 // pred_region
        _
      $region16: #{dgb_forward.8} parent=11 // pred_fallthru
        _
      // Predicated region
      $region17: #{dgb_forward.8} parent=11 // pred_check
        %p121 = pneg %p77
      $region18: #{dgb_forward.8} parent=11 // pred_check_branch
        %123 = sbr.rel (%p121) target = $region20
      $region19: #{dgb_forward.8} parent=11 // pred_region
        _
      $region20: #{dgb_forward.8} parent=11 // pred_fallthru
        _
    $region12: #{dgb_forward.8} parent=5 // pred_fallthru
      _
    %p124 = scmp.lt.s32.totalorder %s9, 2
    // Predicated region
    $region21: #{dgb_forward.8} parent=5 // pred_check
      %p125 = pneg %p124
    $region22: #{dgb_forward.8} parent=5 // pred_check_branch
      %127 = sbr.rel (%p125) target = $region24
    $region23: #{dgb_forward.8} parent=5 // pred_region
      // Predicated region
      $region25: #{dgb_forward.8} parent=23 // pred_check
        %p128 = pneg %p29
      $region26: #{dgb_forward.8} parent=23 // pred_check_branch
        %130 = sbr.rel (%p128) target = $region28
      $region27: #{dgb_forward.8} parent=23 // pred_region
        %p131 = scmp.lt.s32.totalorder %s9, 1
        %s132 = scalar_select %p131, %s9, 1
        %s133 = smul.addr %s132, 36
        %s134 = smul.addr %s133, 4
        %s135 = scalar_lea.vmem %s0, %s134
      $region28: #{dgb_forward.8} parent=23 // pred_fallthru
        _
    $region24: #{dgb_forward.8} parent=5 // pred_fallthru
      _
    %p136 = scmp.le.s32.totalorder 1, %s9
    %p137 = scmp.lt.s32.totalorder %s9, 3
    %p138 = pnand %p136, %p137
    %p139 = pneg %p138
    // Predicated region
    $region29: #{dgb_forward.8} parent=5 // pred_check
      _
    $region30: #{dgb_forward.8} parent=5 // pred_check_branch
      %141 = sbr.rel (%p138) target = $region32
    $region31: #{dgb_forward.8} parent=5 // pred_region
      %s142 = ssub.s32 %s9, 1
      %p143 = scmp.lt.s32.totalorder %s14, 1
      %s144 = scalar_select %p143, %s14, 1
      %s145 = smul.addr %s144, 36
      %s146 = smul.addr %s145, 4
      %s147 = scalar_lea.vmem %s0, %s146
      %p148 = pneg %p35
      %p149 = pneg %p32
      %p150 = pneg %p56
      %p151 = pneg %p53
      %p152 = pneg %p77
      %p153 = pneg %p74
      %p154 = pneg %p103
      %p155 = pneg %p100
      %p156 = scmp.lt.s32.totalorder %s14, 1
      %s157 = scalar_select %p156, %s14, 1
      %s158 = smul.addr %s157, 32
      %s159 = smul.addr %s158, 8
      %s160 = scalar_lea.vmem %s3, %s159
      %p161 = scmp.lt.s32.totalorder %s14, 1
      %s162 = scalar_select %p161, %s14, 1
      %s163 = smul.addr %s162, 36
      %s164 = smul.addr %s163, 4
      %s165 = scalar_lea.vmem %s0, %s164
      %p166 = scmp.lt.s32.totalorder %s14, 1
      %s167 = scalar_select %p166, %s14, 1
      %s168 = smul.addr %s167, 32
      %s169 = smul.addr %s168, 8
      %s170 = scalar_lea.vmem %s3, %s169
      %v172 = vld [vmem:[%s165] sm:$0xf]
      %v173 = vld [vmem:[%s165 + $0x4] sm:$0xf]
      %v174 = vld [vmem:[%s165 + $0x8] sm:$0xf]
      %v175 = vld [vmem:[%s165 + $0xc] sm:$0xf]
      %v176 = vld [vmem:[%s165 + $0x10] sm:$0xf]
      %v177 = vld [vmem:[%s165 + $0x14] sm:$0xf]
      %v178 = vld [vmem:[%s165 + $0x18] sm:$0xf]
      %v179 = vld [vmem:[%s165 + $0x1c] sm:$0xf]
      %v180 = vld [vmem:[%s165 + $0x20] sm:$0xf]
      %v181 = vld [vmem:[%s165 + $0x24] sm:$0xf]
      %v182 = vld [vmem:[%s165 + $0x28] sm:$0xf]
      %v183 = vld [vmem:[%s165 + $0x2c] sm:$0xf]
      %v184 = vld [vmem:[%s165 + $0x30] sm:$0xf]
      %v185 = vld [vmem:[%s165 + $0x34] sm:$0xf]
      %v186 = vld [vmem:[%s165 + $0x38] sm:$0xf]
      %v187 = vld [vmem:[%s165 + $0x3c] sm:$0xf]
      %v188 = vld [vmem:[%s165 + $0x40] sm:$0xf]
      %v189 = vld [vmem:[%s165 + $0x44] sm:$0xf]
      %v190 = vld [vmem:[%s165 + $0x48] sm:$0xf]
      %v191 = vld [vmem:[%s165 + $0x4c] sm:$0xf]
      %v192 = vld [vmem:[%s165 + $0x50] sm:$0xf]
      %v193 = vld [vmem:[%s165 + $0x54] sm:$0xf]
      %v194 = vld [vmem:[%s165 + $0x58] sm:$0xf]
      %v195 = vld [vmem:[%s165 + $0x5c] sm:$0xf]
      %v196 = vld [vmem:[%s165 + $0x60] sm:$0xf]
      %v197 = vld [vmem:[%s165 + $0x64] sm:$0xf]
      %v198 = vld [vmem:[%s165 + $0x68] sm:$0xf]
      %v199 = vld [vmem:[%s165 + $0x6c] sm:$0xf]
      %v200 = vld [vmem:[%s165 + $0x70] sm:$0xf]
      %v201 = vld [vmem:[%s165 + $0x74] sm:$0xf]
      %v202 = vld [vmem:[%s165 + $0x78] sm:$0xf]
      %v203 = vld [vmem:[%s165 + $0x7c] sm:$0xf]
      %v204 = vld [vmem:[%s1] sm:$0xf]
      %v205 = vld [vmem:[%s1 + $0x4] sm:$0xf]
      %v206 = vld [vmem:[%s1 + $0x8] sm:$0xf]
      %v207 = vld [vmem:[%s165 + $0x80] sm:$0xf]
      %v208 = vld [vmem:[%s165 + $0x84] sm:$0xf]
      %s209 = scalar_lea.vmem %s1, 12
      %v210 = vld [vmem:[%s209] sm:$0xf]
      %v211 = vld [vmem:[%s209 + $0x4] sm:$0xf]
      %v212 = vld [vmem:[%s209 + $0x8] sm:$0xf]
      %v245 = vunpack.c.l.b16 %v174
      %v246 = vunpack.c.l.b16 %v175
      %v247 = vunpack.c.l.b16 %v176
      %v248 = vunpack.c.l.b16 %v177
      %v249 = vunpack.c.l.b16 %v178
      %v250 = vunpack.c.l.b16 %v179
      %v251 = vunpack.c.l.b16 %v180
      %v252 = vunpack.c.l.b16 %v181
      %v253 = vunpack.c.l.b16 %v182
      %v254 = vunpack.c.l.b16 %v183
      %v255 = vunpack.c.l.b16 %v184
      %v256 = vunpack.c.l.b16 %v185
      %v257 = vunpack.c.l.b16 %v186
      %v258 = vunpack.c.l.b16 %v187
      %v259 = vunpack.c.l.b16 %v188
      %v260 = vunpack.c.l.b16 %v189
      %v261 = vunpack.c.l.b16 %v190
      %v262 = vunpack.c.l.b16 %v191
      %v263 = vunpack.c.l.b16 %v192
      %v264 = vunpack.c.l.b16 %v193
      %v265 = vunpack.c.l.b16 %v194
      %v266 = vunpack.c.l.b16 %v195
      %v267 = vunpack.c.l.b16 %v196
      %v268 = vunpack.c.l.b16 %v197
      %v269 = vunpack.c.l.b16 %v198
      %v270 = vunpack.c.l.b16 %v199
      %v271 = vunpack.c.l.b16 %v200
      %v272 = vunpack.c.l.b16 %v201
      %v273 = vunpack.c.l.b16 %v202
      %v274 = vunpack.c.l.b16 %v203
      %v275 = vunpack.c.l.b16 %v207
      %v276 = vunpack.c.l.b16 %v208
      %v277 = vpack.c.b16 %v246, %v245
      %v278 = vpack.c.b16 %v248, %v247
      %v279 = vpack.c.b16 %v250, %v249
      %v280 = vpack.c.b16 %v252, %v251
      %v281 = vpack.c.b16 %v254, %v253
      %v282 = vpack.c.b16 %v256, %v255
      %v283 = vpack.c.b16 %v258, %v257
      %v284 = vpack.c.b16 %v260, %v259
      %v285 = vpack.c.b16 %v262, %v261
      %v286 = vpack.c.b16 %v264, %v263
      %v287 = vpack.c.b16 %v266, %v265
      %v288 = vpack.c.b16 %v268, %v267
      %v289 = vpack.c.b16 %v270, %v269
      %v290 = vpack.c.b16 %v272, %v271
      %v291 = vpack.c.b16 %v274, %v273
      %v292 = vpack.c.b16 %v276, %v275
      %v296 = vunpack.c.l.b16 %v210
      %v297 = vunpack.c.l.b16 %v211
      %v298 = vunpack.c.l.b16 %v212
      %v299 = vpack.c.b16 %v297, %v296
      %v300 = vpack.c.b16 %v298, %v298
      %vm302 = vcmask 195584
      %v304 = vsel %vm302, %v277, 0
      %v307 = vsel %vm302, %v278, 0
      %v310 = vsel %vm302, %v279, 0
      %v313 = vsel %vm302, %v280, 0
      %v316 = vsel %vm302, %v281, 0
      %v319 = vsel %vm302, %v282, 0
      %v322 = vsel %vm302, %v283, 0
      %v325 = vsel %vm302, %v284, 0
      %v328 = vsel %vm302, %v285, 0
      %v331 = vsel %vm302, %v286, 0
      %v334 = vsel %vm302, %v287, 0
      %v337 = vsel %vm302, %v288, 0
      %v340 = vsel %vm302, %v289, 0
      %v343 = vsel %vm302, %v290, 0
      %v346 = vsel %vm302, %v291, 0
      %v349 = vsel %vm302, %v292, 0
      %vm351 = vcmask 1043456
      %v353 = vsel %vm351, %v300, 0
      %355 = vmatprep.subr.bf16.mxu0 0
      %356 = vmatpush1.bf16.msra.mxu0 %v299
      %357 = vmatprep.subr.bf16.mxu0 0
      %358 = vmatpush1.bf16.msra.mxu0 %v353
      %359 = vmatprep.subr.bf16.mxu0 0
      %360 = vmatpush1.bf16.msra.mxu0 0
      %361 = vmatprep.subr.bf16.mxu0 0
      %362 = vmatpush1.bf16.msra.mxu0 0
      %363 = vmatprep.subr.bf16.mxu0 0
      %364 = vmatpush1.bf16.msra.mxu0 0
      %365 = vmatprep.subr.bf16.mxu0 0
      %366 = vmatpush1.bf16.msra.mxu0 0
      %367 = vmatprep.subr.bf16.mxu0 0
      %368 = vmatpush1.bf16.msra.mxu0 0
      %369 = vmatprep.subr.bf16.mxu0 0
      %370 = vmatpush1.bf16.msra.mxu0 0
      %371 = vmatprep.subr.bf16.mxu0 0
      %372 = vmatpush1.bf16.msra.mxu0 0
      %373 = vmatprep.subr.bf16.mxu0 0
      %374 = vmatpush1.bf16.msra.mxu0 0
      %375 = vmatprep.subr.bf16.mxu0 0
      %376 = vmatpush1.bf16.msra.mxu0 0
      %377 = vmatprep.subr.bf16.mxu0 0
      %378 = vmatpush1.bf16.msra.mxu0 0
      %379 = vmatprep.subr.bf16.mxu0 0
      %380 = vmatpush1.bf16.msra.mxu0 0
      %381 = vmatprep.subr.bf16.mxu0 0
      %382 = vmatpush1.bf16.msra.mxu0 0
      %383 = vmatprep.subr.bf16.mxu0 0
      %384 = vmatpush1.bf16.msra.mxu0 0
      %385 = vmatprep.subr.bf16.mxu0 0
      %386 = vmatpush1.bf16.msra.mxu0 0
      %387 = vmatprep.mubr.bf16.mxu0 0
      %388 = vmatmul.mubr.bf16.gmra.mrb[0].mxu0 %v304
      %v389 = vpop.f32.mrb[0].mxu0
      %v390 = vadd.f32 0.0, %v389
      %v391 = vpop.f32.mrb[0].mxu0
      %v392 = vpop.f32.mrb[0].mxu0
      %v393 = vadd.f32 0.0, %v392
      %v394 = vpop.f32.mrb[0].mxu0
      %395 = vmatprep.mubr.bf16.mxu0 0
      %396 = vmatmul.mubr.bf16.gmra.mrb[0].mxu0 %v307
      %v397 = vpop.f32.mrb[0].mxu0
      %v398 = vadd.f32 0.0, %v397
      %v399 = vpop.f32.mrb[0].mxu0
      %v400 = vpop.f32.mrb[0].mxu0
      %v401 = vadd.f32 0.0, %v400
      %v402 = vpop.f32.mrb[0].mxu0
      %403 = vmatprep.mubr.bf16.mxu0 0
      %404 = vmatmul.mubr.bf16.gmra.mrb[0].mxu0 %v310
      %v405 = vpop.f32.mrb[0].mxu0
      %v406 = vadd.f32 0.0, %v405
      %v407 = vpop.f32.mrb[0].mxu0
      %v408 = vpop.f32.mrb[0].mxu0
      %v409 = vadd.f32 0.0, %v408
      %v410 = vpop.f32.mrb[0].mxu0
      %411 = vmatprep.mubr.bf16.mxu0 0
      %412 = vmatmul.mubr.bf16.gmra.mrb[0].mxu0 %v313
      %v413 = vpop.f32.mrb[0].mxu0
      %v414 = vadd.f32 0.0, %v413
      %v415 = vpop.f32.mrb[0].mxu0
      %v416 = vpop.f32.mrb[0].mxu0
      %v417 = vadd.f32 0.0, %v416
      %v418 = vpop.f32.mrb[0].mxu0
      %419 = vmatprep.mubr.bf16.mxu0 0
      %420 = vmatmul.mubr.bf16.gmra.mrb[0].mxu0 %v316
      %v421 = vpop.f32.mrb[0].mxu0
      %v422 = vadd.f32 0.0, %v421
      %v423 = vpop.f32.mrb[0].mxu0
      %v424 = vpop.f32.mrb[0].mxu0
      %v425 = vadd.f32 0.0, %v424
      %v426 = vpop.f32.mrb[0].mxu0
      %427 = vmatprep.mubr.bf16.mxu0 0
      %428 = vmatmul.mubr.bf16.gmra.mrb[0].mxu0 %v319
      %v429 = vpop.f32.mrb[0].mxu0
      %v430 = vadd.f32 0.0, %v429
      %v431 = vpop.f32.mrb[0].mxu0
      %v432 = vpop.f32.mrb[0].mxu0
      %v433 = vadd.f32 0.0, %v432
      %v434 = vpop.f32.mrb[0].mxu0
      %435 = vmatprep.mubr.bf16.mxu0 0
      %436 = vmatmul.mubr.bf16.gmra.mrb[0].mxu0 %v322
      %v437 = vpop.f32.mrb[0].mxu0
      %v438 = vadd.f32 0.0, %v437
      %v439 = vpop.f32.mrb[0].mxu0
      %v440 = vpop.f32.mrb[0].mxu0
      %v441 = vadd.f32 0.0, %v440
      %v442 = vpop.f32.mrb[0].mxu0
      %443 = vmatprep.mubr.bf16.mxu0 0
      %444 = vmatmul.mubr.bf16.gmra.mrb[0].mxu0 %v325
      %v445 = vpop.f32.mrb[0].mxu0
      %v446 = vadd.f32 0.0, %v445
      %v447 = vpop.f32.mrb[0].mxu0
      %v448 = vpop.f32.mrb[0].mxu0
      %v449 = vadd.f32 0.0, %v448
      %v450 = vpop.f32.mrb[0].mxu0
      %451 = vmatprep.mubr.bf16.mxu0 0
      %452 = vmatmul.mubr.bf16.gmra.mrb[0].mxu0 %v328
      %v453 = vpop.f32.mrb[0].mxu0
      %v454 = vadd.f32 0.0, %v453
      %v455 = vpop.f32.mrb[0].mxu0
      %v456 = vpop.f32.mrb[0].mxu0
      %v457 = vadd.f32 0.0, %v456
      %v458 = vpop.f32.mrb[0].mxu0
      %459 = vmatprep.mubr.bf16.mxu0 0
      %460 = vmatmul.mubr.bf16.gmra.mrb[0].mxu0 %v331
      %v461 = vpop.f32.mrb[0].mxu0
      %v462 = vadd.f32 0.0, %v461
      %v463 = vpop.f32.mrb[0].mxu0
      %v464 = vpop.f32.mrb[0].mxu0
      %v465 = vadd.f32 0.0, %v464
      %v466 = vpop.f32.mrb[0].mxu0
      %467 = vmatprep.mubr.bf16.mxu0 0
      %468 = vmatmul.mubr.bf16.gmra.mrb[0].mxu0 %v334
      %v469 = vpop.f32.mrb[0].mxu0
      %v470 = vadd.f32 0.0, %v469
      %v471 = vpop.f32.mrb[0].mxu0
      %v472 = vpop.f32.mrb[0].mxu0
      %v473 = vadd.f32 0.0, %v472
      %v474 = vpop.f32.mrb[0].mxu0
      %475 = vmatprep.mubr.bf16.mxu0 0
      %476 = vmatmul.mubr.bf16.gmra.mrb[0].mxu0 %v337
      %v477 = vpop.f32.mrb[0].mxu0
      %v478 = vadd.f32 0.0, %v477
      %v479 = vpop.f32.mrb[0].mxu0
      %v480 = vpop.f32.mrb[0].mxu0
      %v481 = vadd.f32 0.0, %v480
      %v482 = vpop.f32.mrb[0].mxu0
      %483 = vmatprep.mubr.bf16.mxu0 0
      %484 = vmatmul.mubr.bf16.gmra.mrb[0].mxu0 %v340
      %v485 = vpop.f32.mrb[0].mxu0
      %v486 = vadd.f32 0.0, %v485
      %v487 = vpop.f32.mrb[0].mxu0
      %v488 = vpop.f32.mrb[0].mxu0
      %v489 = vadd.f32 0.0, %v488
      %v490 = vpop.f32.mrb[0].mxu0
      %491 = vmatprep.mubr.bf16.mxu0 0
      %492 = vmatmul.mubr.bf16.gmra.mrb[0].mxu0 %v343
      %v493 = vpop.f32.mrb[0].mxu0
      %v494 = vadd.f32 0.0, %v493
      %v495 = vpop.f32.mrb[0].mxu0
      %v496 = vpop.f32.mrb[0].mxu0
      %v497 = vadd.f32 0.0, %v496
      %v498 = vpop.f32.mrb[0].mxu0
      %499 = vmatprep.mubr.bf16.mxu0 0
      %500 = vmatmul.mubr.bf16.gmra.mrb[0].mxu0 %v346
      %v501 = vpop.f32.mrb[0].mxu0
      %v502 = vadd.f32 0.0, %v501
      %v503 = vpop.f32.mrb[0].mxu0
      %v504 = vpop.f32.mrb[0].mxu0
      %v505 = vadd.f32 0.0, %v504
      %v506 = vpop.f32.mrb[0].mxu0
      %507 = vmatprep.mubr.bf16.mxu0 0
      %508 = vmatmul.mubr.bf16.gmra.mrb[0].mxu0 %v349
      %v509 = vpop.f32.mrb[0].mxu0
      %v510 = vadd.f32 0.0, %v509
      %v511 = vpop.f32.mrb[0].mxu0
      %v512 = vpop.f32.mrb[0].mxu0
      %v513 = vadd.f32 0.0, %v512
      %v514 = vpop.f32.mrb[0].mxu0
      %515 = vdwg.mxu0
      %v518 = vunpack.c.l.b16 %v172
      %v519 = vunpack.c.l.b16 %v173
      %v520 = vpack.c.b16 %v519, %v518
      %v524 = vunpack.c.l.b16 %v204
      %v525 = vunpack.c.l.b16 %v205
      %v526 = vunpack.c.l.b16 %v206
      %v527 = vpack.c.b16 %v525, %v524
      %v528 = vpack.c.b16 %v526, %v526
      %v531 = vsel %vm302, %v520, 0
      %v534 = vsel %vm351, %v528, 0
      %536 = vmatprep.subr.bf16.mxu0 0
      %537 = vmatpush1.bf16.msra.mxu0 %v527
      %538 = vmatprep.subr.bf16.mxu0 0
      %539 = vmatpush1.bf16.msra.mxu0 %v534
      %540 = vmatprep.subr.bf16.mxu0 0
      %541 = vmatpush1.bf16.msra.mxu0 0
      %542 = vmatprep.subr.bf16.mxu0 0
      %543 = vmatpush1.bf16.msra.mxu0 0
      %544 = vmatprep.subr.bf16.mxu0 0
      %545 = vmatpush1.bf16.msra.mxu0 0
      %546 = vmatprep.subr.bf16.mxu0 0
      %547 = vmatpush1.bf16.msra.mxu0 0
      %548 = vmatprep.subr.bf16.mxu0 0
      %549 = vmatpush1.bf16.msra.mxu0 0
      %550 = vmatprep.subr.bf16.mxu0 0
      %551 = vmatpush1.bf16.msra.mxu0 0
      %552 = vmatprep.subr.bf16.mxu0 0
      %553 = vmatpush1.bf16.msra.mxu0 0
      %554 = vmatprep.subr.bf16.mxu0 0
      %555 = vmatpush1.bf16.msra.mxu0 0
      %556 = vmatprep.subr.bf16.mxu0 0
      %557 = vmatpush1.bf16.msra.mxu0 0
      %558 = vmatprep.subr.bf16.mxu0 0
      %559 = vmatpush1.bf16.msra.mxu0 0
      %560 = vmatprep.subr.bf16.mxu0 0
      %561 = vmatpush1.bf16.msra.mxu0 0
      %562 = vmatprep.subr.bf16.mxu0 0
      %563 = vmatpush1.bf16.msra.mxu0 0
      %564 = vmatprep.subr.bf16.mxu0 0
      %565 = vmatpush1.bf16.msra.mxu0 0
      %566 = vmatprep.subr.bf16.mxu0 0
      %567 = vmatpush1.bf16.msra.mxu0 0
      %568 = vmatprep.mubr.bf16.mxu0 0
      %569 = vmatmul.mubr.bf16.gmra.mrb[0].mxu0 %v531
      %v570 = vpop.f32.mrb[0].mxu0
      %v571 = vadd.f32 %v390, %v570
      %v572 = vpop.f32.mrb[0].mxu0
      %v573 = vpop.f32.mrb[0].mxu0
      %v574 = vadd.f32 %v393, %v573
      %v575 = vpop.f32.mrb[0].mxu0
      %576 = vmatprep.mubr.bf16.mxu0 0
      %577 = vmatmul.mubr.bf16.gmra.mrb[0].mxu0 %v304
      %v578 = vpop.f32.mrb[0].mxu0
      %v579 = vadd.f32 %v398, %v578
      %v580 = vpop.f32.mrb[0].mxu0
      %v581 = vpop.f32.mrb[0].mxu0
      %v582 = vadd.f32 %v401, %v581
      %v583 = vpop.f32.mrb[0].mxu0
      %584 = vmatprep.mubr.bf16.mxu0 0
      %585 = vmatmul.mubr.bf16.gmra.mrb[0].mxu0 %v307
      %v586 = vpop.f32.mrb[0].mxu0
      %v587 = vadd.f32 %v406, %v586
      %v588 = vpop.f32.mrb[0].mxu0
      %v589 = vpop.f32.mrb[0].mxu0
      %v590 = vadd.f32 %v409, %v589
      %v591 = vpop.f32.mrb[0].mxu0
      %592 = vmatprep.mubr.bf16.mxu0 0
      %593 = vmatmul.mubr.bf16.gmra.mrb[0].mxu0 %v310
      %v594 = vpop.f32.mrb[0].mxu0
      %v595 = vadd.f32 %v414, %v594
      %v596 = vpop.f32.mrb[0].mxu0
      %v597 = vpop.f32.mrb[0].mxu0
      %v598 = vadd.f32 %v417, %v597
      %v599 = vpop.f32.mrb[0].mxu0
      %600 = vmatprep.mubr.bf16.mxu0 0
      %601 = vmatmul.mubr.bf16.gmra.mrb[0].mxu0 %v313
      %v602 = vpop.f32.mrb[0].mxu0
      %v603 = vadd.f32 %v422, %v602
      %v604 = vpop.f32.mrb[0].mxu0
      %v605 = vpop.f32.mrb[0].mxu0
      %v606 = vadd.f32 %v425, %v605
      %v607 = vpop.f32.mrb[0].mxu0
      %608 = vmatprep.mubr.bf16.mxu0 0
      %609 = vmatmul.mubr.bf16.gmra.mrb[0].mxu0 %v316
      %v610 = vpop.f32.mrb[0].mxu0
      %v611 = vadd.f32 %v430, %v610
      %v612 = vpop.f32.mrb[0].mxu0
      %v613 = vpop.f32.mrb[0].mxu0
      %v614 = vadd.f32 %v433, %v613
      %v615 = vpop.f32.mrb[0].mxu0
      %616 = vmatprep.mubr.bf16.mxu0 0
      %617 = vmatmul.mubr.bf16.gmra.mrb[0].mxu0 %v319
      %v618 = vpop.f32.mrb[0].mxu0
      %v619 = vadd.f32 %v438, %v618
      %v620 = vpop.f32.mrb[0].mxu0
      %v621 = vpop.f32.mrb[0].mxu0
      %v622 = vadd.f32 %v441, %v621
      %v623 = vpop.f32.mrb[0].mxu0
      %624 = vmatprep.mubr.bf16.mxu0 0
      %625 = vmatmul.mubr.bf16.gmra.mrb[0].mxu0 %v322
      %v626 = vpop.f32.mrb[0].mxu0
      %v627 = vadd.f32 %v446, %v626
      %v628 = vpop.f32.mrb[0].mxu0
      %v629 = vpop.f32.mrb[0].mxu0
      %v630 = vadd.f32 %v449, %v629
      %v631 = vpop.f32.mrb[0].mxu0
      %632 = vmatprep.mubr.bf16.mxu0 0
      %633 = vmatmul.mubr.bf16.gmra.mrb[0].mxu0 %v325
      %v634 = vpop.f32.mrb[0].mxu0
      %v635 = vadd.f32 %v454, %v634
      %v636 = vpop.f32.mrb[0].mxu0
      %v637 = vpop.f32.mrb[0].mxu0
      %v638 = vadd.f32 %v457, %v637
      %v639 = vpop.f32.mrb[0].mxu0
      %640 = vmatprep.mubr.bf16.mxu0 0
      %641 = vmatmul.mubr.bf16.gmra.mrb[0].mxu0 %v328
      %v642 = vpop.f32.mrb[0].mxu0
      %v643 = vadd.f32 %v462, %v642
      %v644 = vpop.f32.mrb[0].mxu0
      %v645 = vpop.f32.mrb[0].mxu0
      %v646 = vadd.f32 %v465, %v645
      %v647 = vpop.f32.mrb[0].mxu0
      %648 = vmatprep.mubr.bf16.mxu0 0
      %649 = vmatmul.mubr.bf16.gmra.mrb[0].mxu0 %v331
      %v650 = vpop.f32.mrb[0].mxu0
      %v651 = vadd.f32 %v470, %v650
      %v652 = vpop.f32.mrb[0].mxu0
      %v653 = vpop.f32.mrb[0].mxu0
      %v654 = vadd.f32 %v473, %v653
      %v655 = vpop.f32.mrb[0].mxu0
      %656 = vmatprep.mubr.bf16.mxu0 0
      %657 = vmatmul.mubr.bf16.gmra.mrb[0].mxu0 %v334
      %v658 = vpop.f32.mrb[0].mxu0
      %v659 = vadd.f32 %v478, %v658
      %v660 = vpop.f32.mrb[0].mxu0
      %v661 = vpop.f32.mrb[0].mxu0
      %v662 = vadd.f32 %v481, %v661
      %v663 = vpop.f32.mrb[0].mxu0
      %664 = vmatprep.mubr.bf16.mxu0 0
      %665 = vmatmul.mubr.bf16.gmra.mrb[0].mxu0 %v337
      %v666 = vpop.f32.mrb[0].mxu0
      %v667 = vadd.f32 %v486, %v666
      %v668 = vpop.f32.mrb[0].mxu0
      %v669 = vpop.f32.mrb[0].mxu0
      %v670 = vadd.f32 %v489, %v669
      %v671 = vpop.f32.mrb[0].mxu0
      %672 = vmatprep.mubr.bf16.mxu0 0
      %673 = vmatmul.mubr.bf16.gmra.mrb[0].mxu0 %v340
      %v674 = vpop.f32.mrb[0].mxu0
      %v675 = vadd.f32 %v494, %v674
      %v676 = vpop.f32.mrb[0].mxu0
      %v677 = vpop.f32.mrb[0].mxu0
      %v678 = vadd.f32 %v497, %v677
      %v679 = vpop.f32.mrb[0].mxu0
      %680 = vmatprep.mubr.bf16.mxu0 0
      %681 = vmatmul.mubr.bf16.gmra.mrb[0].mxu0 %v343
      %v682 = vpop.f32.mrb[0].mxu0
      %v683 = vadd.f32 %v502, %v682
      %v684 = vpop.f32.mrb[0].mxu0
      %v685 = vpop.f32.mrb[0].mxu0
      %v686 = vadd.f32 %v505, %v685
      %v687 = vpop.f32.mrb[0].mxu0
      %688 = vmatprep.mubr.bf16.mxu0 0
      %689 = vmatmul.mubr.bf16.gmra.mrb[0].mxu0 %v346
      %v690 = vpop.f32.mrb[0].mxu0
      %v691 = vadd.f32 %v510, %v690
      %v692 = vpop.f32.mrb[0].mxu0
      %v693 = vpop.f32.mrb[0].mxu0
      %v694 = vadd.f32 %v513, %v693
      %v695 = vpop.f32.mrb[0].mxu0
      %696 = vdwg.mxu0
      %v697 = vld [vmem:[%s165 + $0x10] sm:$0xf]
      %v698 = vld [vmem:[%s165 + $0x14] sm:$0xf]
      %v699 = vld [vmem:[%s165 + $0x18] sm:$0xf]
      %v700 = vld [vmem:[%s165 + $0x1c] sm:$0xf]
      %v701 = vld [vmem:[%s165 + $0x20] sm:$0xf]
      %v702 = vld [vmem:[%s165 + $0x24] sm:$0xf]
      %v703 = vld [vmem:[%s165 + $0x28] sm:$0xf]
      %v704 = vld [vmem:[%s165 + $0x2c] sm:$0xf]
      %v705 = vld [vmem:[%s165 + $0x30] sm:$0xf]
      %v706 = vld [vmem:[%s165 + $0x34] sm:$0xf]
      %v707 = vld [vmem:[%s165 + $0x38] sm:$0xf]
      %v708 = vld [vmem:[%s165 + $0x3c] sm:$0xf]
      %v709 = vld [vmem:[%s165 + $0x40] sm:$0xf]
      %v710 = vld [vmem:[%s165 + $0x44] sm:$0xf]
      %v711 = vld [vmem:[%s165 + $0x48] sm:$0xf]
      %v712 = vld [vmem:[%s165 + $0x4c] sm:$0xf]
      %v713 = vld [vmem:[%s165 + $0x50] sm:$0xf]
      %v714 = vld [vmem:[%s165 + $0x54] sm:$0xf]
      %v715 = vld [vmem:[%s165 + $0x58] sm:$0xf]
      %v716 = vld [vmem:[%s165 + $0x5c] sm:$0xf]
      %v717 = vld [vmem:[%s165 + $0x60] sm:$0xf]
      %v718 = vld [vmem:[%s165 + $0x64] sm:$0xf]
      %v719 = vld [vmem:[%s165 + $0x68] sm:$0xf]
      %v720 = vld [vmem:[%s165 + $0x6c] sm:$0xf]
      %v721 = vld [vmem:[%s165 + $0x70] sm:$0xf]
      %v722 = vld [vmem:[%s165 + $0x74] sm:$0xf]
      %v723 = vld [vmem:[%s165 + $0x78] sm:$0xf]
      %v724 = vld [vmem:[%s165 + $0x7c] sm:$0xf]
      %v725 = vld [vmem:[%s165 + $0x80] sm:$0xf]
      %v726 = vld [vmem:[%s165 + $0x84] sm:$0xf]
      %v727 = vld [vmem:[%s165 + $0x88] sm:$0xf]
      %v728 = vld [vmem:[%s165 + $0x8c] sm:$0xf]
      %s729 = scalar_lea.vmem %s1, 24
      %v730 = vld [vmem:[%s729] sm:$0xf]
      %v731 = vld [vmem:[%s729 + $0x4] sm:$0xf]
      %v732 = vld [vmem:[%s729 + $0x8] sm:$0xf]
      %v765 = vunpack.c.l.b16 %v697
      %v766 = vunpack.c.l.b16 %v698
      %v767 = vunpack.c.l.b16 %v699
      %v768 = vunpack.c.l.b16 %v700
      %v769 = vunpack.c.l.b16 %v701
      %v770 = vunpack.c.l.b16 %v702
      %v771 = vunpack.c.l.b16 %v703
      %v772 = vunpack.c.l.b16 %v704
      %v773 = vunpack.c.l.b16 %v705
      %v774 = vunpack.c.l.b16 %v706
      %v775 = vunpack.c.l.b16 %v707
      %v776 = vunpack.c.l.b16 %v708
      %v777 = vunpack.c.l.b16 %v709
      %v778 = vunpack.c.l.b16 %v710
      %v779 = vunpack.c.l.b16 %v711
      %v780 = vunpack.c.l.b16 %v712
      %v781 = vunpack.c.l.b16 %v713
      %v782 = vunpack.c.l.b16 %v714
      %v783 = vunpack.c.l.b16 %v715
      %v784 = vunpack.c.l.b16 %v716
      %v785 = vunpack.c.l.b16 %v717
      %v786 = vunpack.c.l.b16 %v718
      %v787 = vunpack.c.l.b16 %v719
      %v788 = vunpack.c.l.b16 %v720
      %v789 = vunpack.c.l.b16 %v721
      %v790 = vunpack.c.l.b16 %v722
      %v791 = vunpack.c.l.b16 %v723
      %v792 = vunpack.c.l.b16 %v724
      %v793 = vunpack.c.l.b16 %v725
      %v794 = vunpack.c.l.b16 %v726
      %v795 = vunpack.c.l.b16 %v727
      %v796 = vunpack.c.l.b16 %v728
      %v797 = vpack.c.b16 %v766, %v765
      %v798 = vpack.c.b16 %v768, %v767
      %v799 = vpack.c.b16 %v770, %v769
      %v800 = vpack.c.b16 %v772, %v771
      %v801 = vpack.c.b16 %v774, %v773
      %v802 = vpack.c.b16 %v776, %v775
      %v803 = vpack.c.b16 %v778, %v777
      %v804 = vpack.c.b16 %v780, %v779
      %v805 = vpack.c.b16 %v782, %v781
      %v806 = vpack.c.b16 %v784, %v783
      %v807 = vpack.c.b16 %v786, %v785
      %v808 = vpack.c.b16 %v788, %v787
      %v809 = vpack.c.b16 %v790, %v789
      %v810 = vpack.c.b16 %v792, %v791
      %v811 = vpack.c.b16 %v794, %v793
      %v812 = vpack.c.b16 %v796, %v795
      %v816 = vunpack.c.l.b16 %v730
      %v817 = vunpack.c.l.b16 %v731
      %v818 = vunpack.c.l.b16 %v732
      %v819 = vpack.c.b16 %v817, %v816
      %v820 = vpack.c.b16 %v818, %v818
      %v823 = vsel %vm302, %v797, 0
      %v826 = vsel %vm302, %v798, 0
      %v829 = vsel %vm302, %v799, 0
      %v832 = vsel %vm302, %v800, 0
      %v835 = vsel %vm302, %v801, 0
      %v838 = vsel %vm302, %v802, 0
      %v841 = vsel %vm302, %v803, 0
      %v844 = vsel %vm302, %v804, 0
      %v847 = vsel %vm302, %v805, 0
      %v850 = vsel %vm302, %v806, 0
      %v853 = vsel %vm302, %v807, 0
      %v856 = vsel %vm302, %v808, 0
      %v859 = vsel %vm302, %v809, 0
      %v862 = vsel %vm302, %v810, 0
      %v865 = vsel %vm302, %v811, 0
      %v868 = vsel %vm302, %v812, 0
      %v871 = vsel %vm351, %v820, 0
      %873 = vmatprep.subr.bf16.mxu0 0
      %874 = vmatpush1.bf16.msra.mxu0 %v819
      %875 = vmatprep.subr.bf16.mxu0 0
      %876 = vmatpush1.bf16.msra.mxu0 %v871
      %877 = vmatprep.subr.bf16.mxu0 0
      %878 = vmatpush1.bf16.msra.mxu0 0
      %879 = vmatprep.subr.bf16.mxu0 0
      %880 = vmatpush1.bf16.msra.mxu0 0
      %881 = vmatprep.subr.bf16.mxu0 0
      %882 = vmatpush1.bf16.msra.mxu0 0
      %883 = vmatprep.subr.bf16.mxu0 0
      %884 = vmatpush1.bf16.msra.mxu0 0
      %885 = vmatprep.subr.bf16.mxu0 0
      %886 = vmatpush1.bf16.msra.mxu0 0
      %887 = vmatprep.subr.bf16.mxu0 0
      %888 = vmatpush1.bf16.msra.mxu0 0
      %889 = vmatprep.subr.bf16.mxu0 0
      %890 = vmatpush1.bf16.msra.mxu0 0
      %891 = vmatprep.subr.bf16.mxu0 0
      %892 = vmatpush1.bf16.msra.mxu0 0
      %893 = vmatprep.subr.bf16.mxu0 0
      %894 = vmatpush1.bf16.msra.mxu0 0
      %895 = vmatprep.subr.bf16.mxu0 0
      %896 = vmatpush1.bf16.msra.mxu0 0
      %897 = vmatprep.subr.bf16.mxu0 0
      %898 = vmatpush1.bf16.msra.mxu0 0
      %899 = vmatprep.subr.bf16.mxu0 0
      %900 = vmatpush1.bf16.msra.mxu0 0
      %901 = vmatprep.subr.bf16.mxu0 0
      %902 = vmatpush1.bf16.msra.mxu0 0
      %903 = vmatprep.subr.bf16.mxu0 0
      %904 = vmatpush1.bf16.msra.mxu0 0
      %905 = vmatprep.mubr.bf16.mxu0 0
      %906 = vmatmul.mubr.bf16.gmra.mrb[0].mxu0 %v823
      %v907 = vpop.f32.mrb[0].mxu0
      %v908 = vadd.f32 0.0, %v907
      %v909 = vpop.f32.mrb[0].mxu0
      %v910 = vpop.f32.mrb[0].mxu0
      %v911 = vadd.f32 0.0, %v910
      %v912 = vpop.f32.mrb[0].mxu0
      %913 = vmatprep.mubr.bf16.mxu0 0
      %914 = vmatmul.mubr.bf16.gmra.mrb[0].mxu0 %v826
      %v915 = vpop.f32.mrb[0].mxu0
      %v916 = vadd.f32 0.0, %v915
      %v917 = vpop.f32.mrb[0].mxu0
      %v918 = vpop.f32.mrb[0].mxu0
      %v919 = vadd.f32 0.0, %v918
      %v920 = vpop.f32.mrb[0].mxu0
      %921 = vmatprep.mubr.bf16.mxu0 0
      %922 = vmatmul.mubr.bf16.gmra.mrb[0].mxu0 %v829
      %v923 = vpop.f32.mrb[0].mxu0
      %v924 = vadd.f32 0.0, %v923
      %v925 = vpop.f32.mrb[0].mxu0
      %v926 = vpop.f32.mrb[0].mxu0
      %v927 = vadd.f32 0.0, %v926
      %v928 = vpop.f32.mrb[0].mxu0
      %929 = vmatprep.mubr.bf16.mxu0 0
      %930 = vmatmul.mubr.bf16.gmra.mrb[0].mxu0 %v832
      %v931 = vpop.f32.mrb[0].mxu0
      %v932 = vadd.f32 0.0, %v931
      %v933 = vpop.f32.mrb[0].mxu0
      %v934 = vpop.f32.mrb[0].mxu0
      %v935 = vadd.f32 0.0, %v934
      %v936 = vpop.f32.mrb[0].mxu0
      %937 = vmatprep.mubr.bf16.mxu0 0
      %938 = vmatmul.mubr.bf16.gmra.mrb[0].mxu0 %v835
      %v939 = vpop.f32.mrb[0].mxu0
      %v940 = vadd.f32 0.0, %v939
      %v941 = vpop.f32.mrb[0].mxu0
      %v942 = vpop.f32.mrb[0].mxu0
      %v943 = vadd.f32 0.0, %v942
      %v944 = vpop.f32.mrb[0].mxu0
      %945 = vmatprep.mubr.bf16.mxu0 0
      %946 = vmatmul.mubr.bf16.gmra.mrb[0].mxu0 %v838
      %v947 = vpop.f32.mrb[0].mxu0
      %v948 = vadd.f32 0.0, %v947
      %v949 = vpop.f32.mrb[0].mxu0
      %v950 = vpop.f32.mrb[0].mxu0
      %v951 = vadd.f32 0.0, %v950
      %v952 = vpop.f32.mrb[0].mxu0
      %953 = vmatprep.mubr.bf16.mxu0 0
      %954 = vmatmul.mubr.bf16.gmra.mrb[0].mxu0 %v841
      %v955 = vpop.f32.mrb[0].mxu0
      %v956 = vadd.f32 0.0, %v955
      %v957 = vpop.f32.mrb[0].mxu0
      %v958 = vpop.f32.mrb[0].mxu0
      %v959 = vadd.f32 0.0, %v958
      %v960 = vpop.f32.mrb[0].mxu0
      %961 = vmatprep.mubr.bf16.mxu0 0
      %962 = vmatmul.mubr.bf16.gmra.mrb[0].mxu0 %v844
      %v963 = vpop.f32.mrb[0].mxu0
      %v964 = vadd.f32 0.0, %v963
      %v965 = vpop.f32.mrb[0].mxu0
      %v966 = vpop.f32.mrb[0].mxu0
      %v967 = vadd.f32 0.0, %v966
      %v968 = vpop.f32.mrb[0].mxu0
      %969 = vmatprep.mubr.bf16.mxu0 0
      %970 = vmatmul.mubr.bf16.gmra.mrb[0].mxu0 %v847
      %v971 = vpop.f32.mrb[0].mxu0
      %v972 = vadd.f32 0.0, %v971
      %v973 = vpop.f32.mrb[0].mxu0
      %v974 = vpop.f32.mrb[0].mxu0
      %v975 = vadd.f32 0.0, %v974
      %v976 = vpop.f32.mrb[0].mxu0
      %977 = vmatprep.mubr.bf16.mxu0 0
      %978 = vmatmul.mubr.bf16.gmra.mrb[0].mxu0 %v850
      %v979 = vpop.f32.mrb[0].mxu0
      %v980 = vadd.f32 0.0, %v979
      %v981 = vpop.f32.mrb[0].mxu0
      %v982 = vpop.f32.mrb[0].mxu0
      %v983 = vadd.f32 0.0, %v982
      %v984 = vpop.f32.mrb[0].mxu0
      %985 = vmatprep.mubr.bf16.mxu0 0
      %986 = vmatmul.mubr.bf16.gmra.mrb[0].mxu0 %v853
      %v987 = vpop.f32.mrb[0].mxu0
      %v988 = vadd.f32 0.0, %v987
      %v989 = vpop.f32.mrb[0].mxu0
      %v990 = vpop.f32.mrb[0].mxu0
      %v991 = vadd.f32 0.0, %v990
      %v992 = vpop.f32.mrb[0].mxu0
      %993 = vmatprep.mubr.bf16.mxu0 0
      %994 = vmatmul.mubr.bf16.gmra.mrb[0].mxu0 %v856
      %v995 = vpop.f32.mrb[0].mxu0
      %v996 = vadd.f32 0.0, %v995
      %v997 = vpop.f32.mrb[0].mxu0
      %v998 = vpop.f32.mrb[0].mxu0
      %v999 = vadd.f32 0.0, %v998
      %v1000 = vpop.f32.mrb[0].mxu0
      %1001 = vmatprep.mubr.bf16.mxu0 0
      %1002 = vmatmul.mubr.bf16.gmra.mrb[0].mxu0 %v859
      %v1003 = vpop.f32.mrb[0].mxu0
      %v1004 = vadd.f32 0.0, %v1003
      %v1005 = vpop.f32.mrb[0].mxu0
      %v1006 = vpop.f32.mrb[0].mxu0
      %v1007 = vadd.f32 0.0, %v1006
      %v1008 = vpop.f32.mrb[0].mxu0
      %1009 = vmatprep.mubr.bf16.mxu0 0
      %1010 = vmatmul.mubr.bf16.gmra.mrb[0].mxu0 %v862
      %v1011 = vpop.f32.mrb[0].mxu0
      %v1012 = vadd.f32 0.0, %v1011
      %v1013 = vpop.f32.mrb[0].mxu0
      %v1014 = vpop.f32.mrb[0].mxu0
      %v1015 = vadd.f32 0.0, %v1014
      %v1016 = vpop.f32.mrb[0].mxu0
      %1017 = vmatprep.mubr.bf16.mxu0 0
      %1018 = vmatmul.mubr.bf16.gmra.mrb[0].mxu0 %v865
      %v1019 = vpop.f32.mrb[0].mxu0
      %v1020 = vadd.f32 0.0, %v1019
      %v1021 = vpop.f32.mrb[0].mxu0
      %v1022 = vpop.f32.mrb[0].mxu0
      %v1023 = vadd.f32 0.0, %v1022
      %v1024 = vpop.f32.mrb[0].mxu0
      %1025 = vmatprep.mubr.bf16.mxu0 0
      %1026 = vmatmul.mubr.bf16.gmra.mrb[0].mxu0 %v868
      %v1027 = vpop.f32.mrb[0].mxu0
      %v1028 = vadd.f32 0.0, %v1027
      %v1029 = vpop.f32.mrb[0].mxu0
      %v1030 = vpop.f32.mrb[0].mxu0
      %v1031 = vadd.f32 0.0, %v1030
      %v1032 = vpop.f32.mrb[0].mxu0
      %1033 = vdwg.mxu0
      %v1034 = vadd.f32 %v571, %v908
      %v1035 = vadd.f32 %v574, %v911
      %v1036 = vadd.f32 %v579, %v916
      %v1037 = vadd.f32 %v582, %v919
      %v1038 = vadd.f32 %v587, %v924
      %v1039 = vadd.f32 %v590, %v927
      %v1040 = vadd.f32 %v595, %v932
      %v1041 = vadd.f32 %v598, %v935
      %v1042 = vadd.f32 %v603, %v940
      %v1043 = vadd.f32 %v606, %v943
      %v1044 = vadd.f32 %v611, %v948
      %v1045 = vadd.f32 %v614, %v951
      %v1046 = vadd.f32 %v619, %v956
      %v1047 = vadd.f32 %v622, %v959
      %v1048 = vadd.f32 %v627, %v964
      %v1049 = vadd.f32 %v630, %v967
      %v1050 = vadd.f32 %v635, %v972
      %v1051 = vadd.f32 %v638, %v975
      %v1052 = vadd.f32 %v643, %v980
      %v1053 = vadd.f32 %v646, %v983
      %v1054 = vadd.f32 %v651, %v988
      %v1055 = vadd.f32 %v654, %v991
      %v1056 = vadd.f32 %v659, %v996
      %v1057 = vadd.f32 %v662, %v999
      %v1058 = vadd.f32 %v667, %v1004
      %v1059 = vadd.f32 %v670, %v1007
      %v1060 = vadd.f32 %v675, %v1012
      %v1061 = vadd.f32 %v678, %v1015
      %v1062 = vadd.f32 %v683, %v1020
      %v1063 = vadd.f32 %v686, %v1023
      %v1064 = vadd.f32 %v691, %v1028
      %v1065 = vadd.f32 %v694, %v1031
      %v1066 = vld [vmem:[%s2] sm:$0x1]
      %v1068 = vlaneseq
      %v1069 = vshrl.u32 %v1068, 7
      %v1070 = vsub.s32 0, %v1069
      %v1071 = vrot.slane %v1066, %v1070
      %v1073 = vadd.f32 %v1034, %v1071
      %v1074 = vadd.f32 %v1035, %v1071
      %v1075 = vadd.f32 %v1036, %v1071
      %v1076 = vadd.f32 %v1037, %v1071
      %v1077 = vadd.f32 %v1038, %v1071
      %v1078 = vadd.f32 %v1039, %v1071
      %v1079 = vadd.f32 %v1040, %v1071
      %v1080 = vadd.f32 %v1041, %v1071
      %v1081 = vadd.f32 %v1042, %v1071
      %v1082 = vadd.f32 %v1043, %v1071
      %v1083 = vadd.f32 %v1044, %v1071
      %v1084 = vadd.f32 %v1045, %v1071
      %v1085 = vadd.f32 %v1046, %v1071
      %v1086 = vadd.f32 %v1047, %v1071
      %v1087 = vadd.f32 %v1048, %v1071
      %v1088 = vadd.f32 %v1049, %v1071
      %v1089 = vadd.f32 %v1050, %v1071
      %v1090 = vadd.f32 %v1051, %v1071
      %v1091 = vadd.f32 %v1052, %v1071
      %v1092 = vadd.f32 %v1053, %v1071
      %v1093 = vadd.f32 %v1054, %v1071
      %v1094 = vadd.f32 %v1055, %v1071
      %v1095 = vadd.f32 %v1056, %v1071
      %v1096 = vadd.f32 %v1057, %v1071
      %v1097 = vadd.f32 %v1058, %v1071
      %v1098 = vadd.f32 %v1059, %v1071
      %v1099 = vadd.f32 %v1060, %v1071
      %v1100 = vadd.f32 %v1061, %v1071
      %v1101 = vadd.f32 %v1062, %v1071
      %v1102 = vadd.f32 %v1063, %v1071
      %v1103 = vadd.f32 %v1064, %v1071
      %v1104 = vadd.f32 %v1065, %v1071
      %vm1105 = vcmp.ge.f32.partialorder %v1073, 0.0
      %vm1106 = vcmp.ge.f32.partialorder %v1074, 0.0
      %vm1107 = vcmp.ge.f32.partialorder %v1075, 0.0
      %vm1108 = vcmp.ge.f32.partialorder %v1076, 0.0
      %vm1109 = vcmp.ge.f32.partialorder %v1077, 0.0
      %vm1110 = vcmp.ge.f32.partialorder %v1078, 0.0
      %vm1111 = vcmp.ge.f32.partialorder %v1079, 0.0
      %vm1112 = vcmp.ge.f32.partialorder %v1080, 0.0
      %vm1113 = vcmp.ge.f32.partialorder %v1081, 0.0
      %vm1114 = vcmp.ge.f32.partialorder %v1082, 0.0
      %vm1115 = vcmp.ge.f32.partialorder %v1083, 0.0
      %vm1116 = vcmp.ge.f32.partialorder %v1084, 0.0
      %vm1117 = vcmp.ge.f32.partialorder %v1085, 0.0
      %vm1118 = vcmp.ge.f32.partialorder %v1086, 0.0
      %vm1119 = vcmp.ge.f32.partialorder %v1087, 0.0
      %vm1120 = vcmp.ge.f32.partialorder %v1088, 0.0
      %vm1121 = vcmp.ge.f32.partialorder %v1089, 0.0
      %vm1122 = vcmp.ge.f32.partialorder %v1090, 0.0
      %vm1123 = vcmp.ge.f32.partialorder %v1091, 0.0
      %vm1124 = vcmp.ge.f32.partialorder %v1092, 0.0
      %vm1125 = vcmp.ge.f32.partialorder %v1093, 0.0
      %vm1126 = vcmp.ge.f32.partialorder %v1094, 0.0
      %vm1127 = vcmp.ge.f32.partialorder %v1095, 0.0
      %vm1128 = vcmp.ge.f32.partialorder %v1096, 0.0
      %vm1129 = vcmp.ge.f32.partialorder %v1097, 0.0
      %vm1130 = vcmp.ge.f32.partialorder %v1098, 0.0
      %vm1131 = vcmp.ge.f32.partialorder %v1099, 0.0
      %vm1132 = vcmp.ge.f32.partialorder %v1100, 0.0
      %vm1133 = vcmp.ge.f32.partialorder %v1101, 0.0
      %vm1134 = vcmp.ge.f32.partialorder %v1102, 0.0
      %vm1135 = vcmp.ge.f32.partialorder %v1103, 0.0
      %vm1136 = vcmp.ge.f32.partialorder %v1104, 0.0
      %v1137 = vmul.f32 %v1073, 0.1
      %v1138 = vmul.f32 %v1074, 0.1
      %v1139 = vmul.f32 %v1075, 0.1
      %v1140 = vmul.f32 %v1076, 0.1
      %v1141 = vmul.f32 %v1077, 0.1
      %v1142 = vmul.f32 %v1078, 0.1
      %v1143 = vmul.f32 %v1079, 0.1
      %v1144 = vmul.f32 %v1080, 0.1
      %v1145 = vmul.f32 %v1081, 0.1
      %v1146 = vmul.f32 %v1082, 0.1
      %v1147 = vmul.f32 %v1083, 0.1
      %v1148 = vmul.f32 %v1084, 0.1
      %v1149 = vmul.f32 %v1085, 0.1
      %v1150 = vmul.f32 %v1086, 0.1
      %v1151 = vmul.f32 %v1087, 0.1
      %v1152 = vmul.f32 %v1088, 0.1
      %v1153 = vmul.f32 %v1089, 0.1
      %v1154 = vmul.f32 %v1090, 0.1
      %v1155 = vmul.f32 %v1091, 0.1
      %v1156 = vmul.f32 %v1092, 0.1
      %v1157 = vmul.f32 %v1093, 0.1
      %v1158 = vmul.f32 %v1094, 0.1
      %v1159 = vmul.f32 %v1095, 0.1
      %v1160 = vmul.f32 %v1096, 0.1
      %v1161 = vmul.f32 %v1097, 0.1
      %v1162 = vmul.f32 %v1098, 0.1
      %v1163 = vmul.f32 %v1099, 0.1
      %v1164 = vmul.f32 %v1100, 0.1
      %v1165 = vmul.f32 %v1101, 0.1
      %v1166 = vmul.f32 %v1102, 0.1
      %v1167 = vmul.f32 %v1103, 0.1
      %v1168 = vmul.f32 %v1104, 0.1
      %v1169 = vsel %vm1105, %v1073, %v1137
      %v1170 = vsel %vm1106, %v1074, %v1138
      %v1171 = vsel %vm1107, %v1075, %v1139
      %v1172 = vsel %vm1108, %v1076, %v1140
      %v1173 = vsel %vm1109, %v1077, %v1141
      %v1174 = vsel %vm1110, %v1078, %v1142
      %v1175 = vsel %vm1111, %v1079, %v1143
      %v1176 = vsel %vm1112, %v1080, %v1144
      %v1177 = vsel %vm1113, %v1081, %v1145
      %v1178 = vsel %vm1114, %v1082, %v1146
      %v1179 = vsel %vm1115, %v1083, %v1147
      %v1180 = vsel %vm1116, %v1084, %v1148
      %v1181 = vsel %vm1117, %v1085, %v1149
      %v1182 = vsel %vm1118, %v1086, %v1150
      %v1183 = vsel %vm1119, %v1087, %v1151
      %v1184 = vsel %vm1120, %v1088, %v1152
      %v1185 = vsel %vm1121, %v1089, %v1153
      %v1186 = vsel %vm1122, %v1090, %v1154
      %v1187 = vsel %vm1123, %v1091, %v1155
      %v1188 = vsel %vm1124, %v1092, %v1156
      %v1189 = vsel %vm1125, %v1093, %v1157
      %v1190 = vsel %vm1126, %v1094, %v1158
      %v1191 = vsel %vm1127, %v1095, %v1159
      %v1192 = vsel %vm1128, %v1096, %v1160
      %v1193 = vsel %vm1129, %v1097, %v1161
      %v1194 = vsel %vm1130, %v1098, %v1162
      %v1195 = vsel %vm1131, %v1099, %v1163
      %v1196 = vsel %vm1132, %v1100, %v1164
      %v1197 = vsel %vm1133, %v1101, %v1165
      %v1198 = vsel %vm1134, %v1102, %v1166
      %v1199 = vsel %vm1135, %v1103, %v1167
      %v1200 = vsel %vm1136, %v1104, %v1168
      %vm1201 = vcmask 64512
      %1202 = vst.msk [vmem:[%s170] sm:$0xff] %vm1201, %v1169
      %1203 = vst.msk [vmem:[%s170 + $0x8] sm:$0xff] %vm1201, %v1170
      %1204 = vst.msk [vmem:[%s170 + $0x10] sm:$0xff] %vm1201, %v1171
      %1205 = vst.msk [vmem:[%s170 + $0x18] sm:$0xff] %vm1201, %v1172
      %1206 = vst.msk [vmem:[%s170 + $0x20] sm:$0xff] %vm1201, %v1173
      %1207 = vst.msk [vmem:[%s170 + $0x28] sm:$0xff] %vm1201, %v1174
      %1208 = vst.msk [vmem:[%s170 + $0x30] sm:$0xff] %vm1201, %v1175
      %1209 = vst.msk [vmem:[%s170 + $0x38] sm:$0xff] %vm1201, %v1176
      %1210 = vst.msk [vmem:[%s170 + $0x40] sm:$0xff] %vm1201, %v1177
      %1211 = vst.msk [vmem:[%s170 + $0x48] sm:$0xff] %vm1201, %v1178
      %1212 = vst.msk [vmem:[%s170 + $0x50] sm:$0xff] %vm1201, %v1179
      %1213 = vst.msk [vmem:[%s170 + $0x58] sm:$0xff] %vm1201, %v1180
      %1214 = vst.msk [vmem:[%s170 + $0x60] sm:$0xff] %vm1201, %v1181
      %1215 = vst.msk [vmem:[%s170 + $0x68] sm:$0xff] %vm1201, %v1182
      %1216 = vst.msk [vmem:[%s170 + $0x70] sm:$0xff] %vm1201, %v1183
      %1217 = vst.msk [vmem:[%s170 + $0x78] sm:$0xff] %vm1201, %v1184
      %1218 = vst.msk [vmem:[%s170 + $0x80] sm:$0xff] %vm1201, %v1185
      %1219 = vst.msk [vmem:[%s170 + $0x88] sm:$0xff] %vm1201, %v1186
      %1220 = vst.msk [vmem:[%s170 + $0x90] sm:$0xff] %vm1201, %v1187
      %1221 = vst.msk [vmem:[%s170 + $0x98] sm:$0xff] %vm1201, %v1188
      %1222 = vst.msk [vmem:[%s170 + $0xa0] sm:$0xff] %vm1201, %v1189
      %1223 = vst.msk [vmem:[%s170 + $0xa8] sm:$0xff] %vm1201, %v1190
      %1224 = vst.msk [vmem:[%s170 + $0xb0] sm:$0xff] %vm1201, %v1191
      %1225 = vst.msk [vmem:[%s170 + $0xb8] sm:$0xff] %vm1201, %v1192
      %1226 = vst.msk [vmem:[%s170 + $0xc0] sm:$0xff] %vm1201, %v1193
      %1227 = vst.msk [vmem:[%s170 + $0xc8] sm:$0xff] %vm1201, %v1194
      %1228 = vst.msk [vmem:[%s170 + $0xd0] sm:$0xff] %vm1201, %v1195
      %1229 = vst.msk [vmem:[%s170 + $0xd8] sm:$0xff] %vm1201, %v1196
      %1230 = vst.msk [vmem:[%s170 + $0xe0] sm:$0xff] %vm1201, %v1197
      %1231 = vst.msk [vmem:[%s170 + $0xe8] sm:$0xff] %vm1201, %v1198
      %1232 = vst.msk [vmem:[%s170 + $0xf0] sm:$0xff] %vm1201, %v1199
      %1233 = vst.msk [vmem:[%s170 + $0xf8] sm:$0xff] %vm1201, %v1200
      %p1234 = scmp.lt.s32.totalorder %s14, 1
      %s1235 = scalar_select %p1234, %s14, 1
      %s1236 = smul.addr %s1235, 32
      %s1237 = smul.addr %s1236, 8
      %s1238 = scalar_lea.vmem %s3, %s1237
      // Predicated region
      $region33: #{dgb_forward.8} parent=31 // pred_check
        %p1239 = pneg %p100
      $region34: #{dgb_forward.8} parent=31 // pred_check_branch
        %1241 = sbr.rel (%p1239) target = $region36
      $region35: #{dgb_forward.8} parent=31 // pred_region
        _
      $region36: #{dgb_forward.8} parent=31 // pred_fallthru
        _
    $region32: #{dgb_forward.8} parent=5 // pred_fallthru
      _
    %p1242 = scmp.le.s32.totalorder 2, %s9
    // Predicated region
    $region37: #{dgb_forward.8} parent=5 // pred_check
      %p1243 = pneg %p1242
    $region38: #{dgb_forward.8} parent=5 // pred_check_branch
      %1245 = sbr.rel (%p1243) target = $region40
    $region39: #{dgb_forward.8} parent=5 // pred_region
      %s1246 = ssub.s32 %s9, 2
      // Predicated region
      $region41: #{dgb_forward.8} parent=39 // pred_check
        %p1247 = pneg %p106
      $region42: #{dgb_forward.8} parent=39 // pred_check_branch
        %1249 = sbr.rel (%p1247) target = $region44
      $region43: #{dgb_forward.8} parent=39 // pred_region
        %p1250 = scmp.lt.s32.totalorder %s15, 1
        %s1251 = scalar_select %p1250, %s15, 1
        %s1252 = smul.addr %s1251, 32
        %s1253 = smul.addr %s1252, 8
        %s1254 = scalar_lea.vmem %s3, %s1253
      $region44: #{dgb_forward.8} parent=39 // pred_fallthru
        _
    $region40: #{dgb_forward.8} parent=5 // pred_fallthru
      _
  $region6: #{dgb_forward.8} parent=0 // loop_footer
    %s13 = sadd.s32 1, %s9
  $region7: #{dgb_forward.8} parent=0 // loop_footer_branch
    %8 = sbr.rel target = $region3
  $region8: #{dgb_forward.8} parent=0 // loop_exit
    _

// kernel: dgb_forward.11
$region0: #{dgb_forward.11}
  #allocation0 [shape = 'u32[]', space=smem, size = 0x4, offset = 0x4, fixed_abs, tag = 'smem constant byte address 0x4 - core index']
  #allocation1 [shape = 'u32[144,128]{1,0:T(1,128)}', space=vmem, size = 0x12000, scoped, tag = 'internal scratch']
  %s0 = inlined_call_operand.vmem [shape: bf16[2,288,24], index: 0, kind: input, shape index: {}]
  %s1 = inlined_call_operand.vmem [shape: bf16[3,24,8], index: 1, kind: input, shape index: {}]
  %s2 = inlined_call_operand.vmem [shape: f32[1,8], index: 2, kind: input, shape index: {}]
  %s3 = inlined_call_operand.vmem [shape: f32[2,256,8], index: 3, kind: input, shape index: {}]
  %s4 = inlined_call_operand.vmem [shape: f32[2,256,8], index: 4, kind: output, shape index: {}]
  %s5 = sld [smem:[#allocation0]]
  $region49: #{dgb_forward.11} parent=0
    _
  %s7 = ssub.s32 1, %s5
  %s8 = scalar_select 0, %s7, %s5
  loop: start=0, step=1, limit=4
  $region2: #{dgb_forward.11} parent=0 // loop_pre_header
    _
  $region3: #{dgb_forward.11} parent=0 // loop_header
    %s10 = sphi 0, %s14
    %p11 = scmp.ge.s32.totalorder %s10, 4
    %s20 = sphi 0, %s22
    %s23 = sphi 0, %s20
    %s24 = sphi 0, %s23
    %s40 = sphi 0, %s24
    %s44 = sphi 0, %s44
    %s46 = sphi 0, %s44
    %s47 = sphi 0, %s46
    %s61 = sphi 0, %s47
    %s65 = sphi 0, %s65
    %s67 = sphi 0, %s65
    %s68 = sphi 0, %s67
    %s82 = sphi 0, %s68
    %s88 = sphi 0, %s90
    %s91 = sphi 0, %s88
    %s92 = sphi 0, %s91
    %s108 = sphi 0, %s92
    %s114 = sphi 0, %s116
    %s117 = sphi 0, %s114
    %s118 = sphi 0, %s117
    %s134 = sphi 0, %s118
  $region4: #{dgb_forward.11} parent=0 // loop_header_branch
    %13 = sbr.rel (%p11) target = $region8
  $region5: #{dgb_forward.11} parent=0 // loop_body
    %s15 = ssub.s32 %s10, 1
    %s16 = ssub.s32 %s10, 2
    %s17 = sadd.s32 %s10, 1
    %s18 = ssub.s32 %s10, %s17
    %p19 = scmp.eq.s32.totalorder %s18, 0
    %s21 = sadd.s32 %s20, 1
    %s22 = scalar_select %p19, %s20, %s21
    %p25 = pneg %p19
    %p26 = scmp.eq.s32.totalorder %s10, 1
    %p27 = por %p25, %p26
    %p28 = scmp.ne.s32.totalorder %s20, %s23
    %p29 = scmp.eq.s32.totalorder %s10, 0
    %p30 = por %p28, %p29
    %p31 = scmp.ne.s32.totalorder %s20, %s23
    %p32 = scmp.eq.s32.totalorder %s15, 1
    %p33 = por %p31, %p32
    %p34 = scmp.ne.s32.totalorder %s23, %s24
    %p35 = scmp.eq.s32.totalorder %s15, 0
    %p36 = por %p34, %p35
    %p37 = scmp.ne.s32.totalorder %s23, %s24
    %p38 = scmp.eq.s32.totalorder %s16, 1
    %p39 = por %p37, %p38
    %p41 = scmp.ne.s32.totalorder %s24, %s40
    %p42 = scmp.eq.s32.totalorder %s16, 0
    %p43 = por %p41, %p42
    %s45 = sadd.s32 %s44, 1
    %p48 = scmp.eq.s32.totalorder %s10, 1
    %p49 = scmp.ne.s32.totalorder %s44, %s46
    %p50 = scmp.eq.s32.totalorder %s10, 0
    %p51 = por %p49, %p50
    %p52 = scmp.ne.s32.totalorder %s44, %s46
    %p53 = scmp.eq.s32.totalorder %s15, 1
    %p54 = por %p52, %p53
    %p55 = scmp.ne.s32.totalorder %s46, %s47
    %p56 = scmp.eq.s32.totalorder %s15, 0
    %p57 = por %p55, %p56
    %p58 = scmp.ne.s32.totalorder %s46, %s47
    %p59 = scmp.eq.s32.totalorder %s16, 1
    %p60 = por %p58, %p59
    %p62 = scmp.ne.s32.totalorder %s47, %s61
    %p63 = scmp.eq.s32.totalorder %s16, 0
    %p64 = por %p62, %p63
    %s66 = sadd.s32 %s65, 1
    %p69 = scmp.eq.s32.totalorder %s10, 1
    %p70 = scmp.ne.s32.totalorder %s65, %s67
    %p71 = scmp.eq.s32.totalorder %s10, 0
    %p72 = por %p70, %p71
    %p73 = scmp.ne.s32.totalorder %s65, %s67
    %p74 = scmp.eq.s32.totalorder %s15, 1
    %p75 = por %p73, %p74
    %p76 = scmp.ne.s32.totalorder %s67, %s68
    %p77 = scmp.eq.s32.totalorder %s15, 0
    %p78 = por %p76, %p77
    %p79 = scmp.ne.s32.totalorder %s67, %s68
    %p80 = scmp.eq.s32.totalorder %s16, 1
    %p81 = por %p79, %p80
    %p83 = scmp.ne.s32.totalorder %s68, %s82
    %p84 = scmp.eq.s32.totalorder %s16, 0
    %p85 = por %p83, %p84
    %s86 = ssub.s32 %s10, %s17
    %p87 = scmp.eq.s32.totalorder %s86, 0
    %s89 = sadd.s32 %s88, 1
    %s90 = scalar_select %p87, %s88, %s89
    %p93 = pneg %p87
    %p94 = scmp.eq.s32.totalorder %s10, 1
    %p95 = por %p93, %p94
    %p96 = scmp.ne.s32.totalorder %s88, %s91
    %p97 = scmp.eq.s32.totalorder %s10, 0
    %p98 = por %p96, %p97
    %p99 = scmp.ne.s32.totalorder %s88, %s91
    %p100 = scmp.eq.s32.totalorder %s15, 1
    %p101 = por %p99, %p100
    %p102 = scmp.ne.s32.totalorder %s91, %s92
    %p103 = scmp.eq.s32.totalorder %s15, 0
    %p104 = por %p102, %p103
    %p105 = scmp.ne.s32.totalorder %s91, %s92
    %p106 = scmp.eq.s32.totalorder %s16, 1
    %p107 = por %p105, %p106
    %p109 = scmp.ne.s32.totalorder %s92, %s108
    %p110 = scmp.eq.s32.totalorder %s16, 0
    %p111 = por %p109, %p110
    %s112 = ssub.s32 %s10, %s17
    %p113 = scmp.eq.s32.totalorder %s112, 0
    %s115 = sadd.s32 %s114, 1
    %s116 = scalar_select %p113, %s114, %s115
    %p119 = pneg %p113
    %p120 = scmp.eq.s32.totalorder %s10, 1
    %p121 = por %p119, %p120
    %p122 = scmp.ne.s32.totalorder %s114, %s117
    %p123 = scmp.eq.s32.totalorder %s10, 0
    %p124 = por %p122, %p123
    %p125 = scmp.ne.s32.totalorder %s114, %s117
    %p126 = scmp.eq.s32.totalorder %s15, 1
    %p127 = por %p125, %p126
    %p128 = scmp.ne.s32.totalorder %s117, %s118
    %p129 = scmp.eq.s32.totalorder %s15, 0
    %p130 = por %p128, %p129
    %p131 = scmp.ne.s32.totalorder %s117, %s118
    %p132 = scmp.eq.s32.totalorder %s16, 1
    %p133 = por %p131, %p132
    %p135 = scmp.ne.s32.totalorder %s118, %s134
    %p136 = scmp.eq.s32.totalorder %s16, 0
    %p137 = por %p135, %p136
    %p138 = scmp.le.s32.totalorder 1, %s10
    %p139 = scmp.lt.s32.totalorder %s10, 3
    %p140 = pnand %p138, %p139
    %p141 = pneg %p140
    // Predicated region
    $region9: #{dgb_forward.11} parent=5 // pred_check
      _
    $region10: #{dgb_forward.11} parent=5 // pred_check_branch
      %143 = sbr.rel (%p140) target = $region12
    $region11: #{dgb_forward.11} parent=5 // pred_region
      %s144 = ssub.s32 %s10, 1
      // Predicated region
      $region13: #{dgb_forward.11} parent=11 // pred_check
        %p145 = pneg %p57
      $region14: #{dgb_forward.11} parent=11 // pred_check_branch
        %147 = sbr.rel (%p145) target = $region16
      $region15: #{dgb_forward.11} parent=11 // pred_region
        _
      $region16: #{dgb_forward.11} parent=11 // pred_fallthru
        _
      // Predicated region
      $region17: #{dgb_forward.11} parent=11 // pred_check
        %p148 = pneg %p78
      $region18: #{dgb_forward.11} parent=11 // pred_check_branch
        %150 = sbr.rel (%p148) target = $region20
      $region19: #{dgb_forward.11} parent=11 // pred_region
        _
      $region20: #{dgb_forward.11} parent=11 // pred_fallthru
        _
    $region12: #{dgb_forward.11} parent=5 // pred_fallthru
      _
    %p151 = scmp.lt.s32.totalorder %s10, 2
    // Predicated region
    $region21: #{dgb_forward.11} parent=5 // pred_check
      %p152 = pneg %p151
    $region22: #{dgb_forward.11} parent=5 // pred_check_branch
      %154 = sbr.rel (%p152) target = $region24
    $region23: #{dgb_forward.11} parent=5 // pred_region
      // Predicated region
      $region25: #{dgb_forward.11} parent=23 // pred_check
        %p155 = pneg %p30
      $region26: #{dgb_forward.11} parent=23 // pred_check_branch
        %157 = sbr.rel (%p155) target = $region28
      $region27: #{dgb_forward.11} parent=23 // pred_region
        %p158 = scmp.lt.s32.totalorder %s10, 1
        %s159 = scalar_select %p158, %s10, 1
        %s160 = smul.addr %s159, 36
        %s161 = smul.addr %s160, 4
        %s162 = scalar_lea.vmem %s0, %s161
      $region28: #{dgb_forward.11} parent=23 // pred_fallthru
        _
      // Predicated region
      $region29: #{dgb_forward.11} parent=23 // pred_check
        %p163 = pneg %p98
      $region30: #{dgb_forward.11} parent=23 // pred_check_branch
        %165 = sbr.rel (%p163) target = $region32
      $region31: #{dgb_forward.11} parent=23 // pred_region
        %p166 = scmp.lt.s32.totalorder %s10, 1
        %s167 = scalar_select %p166, %s10, 1
        %s168 = smul.addr %s167, 32
        %s169 = smul.addr %s168, 8
        %s170 = scalar_lea.vmem %s3, %s169
      $region32: #{dgb_forward.11} parent=23 // pred_fallthru
        _
    $region24: #{dgb_forward.11} parent=5 // pred_fallthru
      _
    %p171 = scmp.le.s32.totalorder 1, %s10
    %p172 = scmp.lt.s32.totalorder %s10, 3
    %p173 = pnand %p171, %p172
    %p174 = pneg %p173
    // Predicated region
    $region33: #{dgb_forward.11} parent=5 // pred_check
      _
    $region34: #{dgb_forward.11} parent=5 // pred_check_branch
      %176 = sbr.rel (%p173) target = $region36
    $region35: #{dgb_forward.11} parent=5 // pred_region
      %s177 = ssub.s32 %s10, 1
      %p178 = scmp.lt.s32.totalorder %s15, 1
      %s179 = scalar_select %p178, %s15, 1
      %s180 = smul.addr %s179, 36
      %s181 = smul.addr %s180, 4
      %s182 = scalar_lea.vmem %s0, %s181
      %p183 = pneg %p36
      %p184 = pneg %p33
      %p185 = pneg %p57
      %p186 = pneg %p54
      %p187 = pneg %p78
      %p188 = pneg %p75
      %p189 = scmp.lt.s32.totalorder %s15, 1
      %s190 = scalar_select %p189, %s15, 1
      %s191 = smul.addr %s190, 32
      %s192 = smul.addr %s191, 8
      %s193 = scalar_lea.vmem %s3, %s192
      %p194 = pneg %p104
      %p195 = pneg %p101
      %p196 = pneg %p130
      %p197 = pneg %p127
      %p198 = scmp.lt.s32.totalorder %s15, 1
      %s199 = scalar_select %p198, %s15, 1
      %s200 = smul.addr %s199, 32
      %s201 = smul.addr %s200, 8
      %s202 = scalar_lea.vmem %s4, %s201
      %p203 = scmp.lt.s32.totalorder %s15, 1
      %s204 = scalar_select %p203, %s15, 1
      %s205 = smul.addr %s204, 36
      %s206 = smul.addr %s205, 4
      %s207 = scalar_lea.vmem %s0, %s206
      %p208 = scmp.lt.s32.totalorder %s15, 1
      %s209 = scalar_select %p208, %s15, 1
      %s210 = smul.addr %s209, 32
      %s211 = smul.addr %s210, 8
      %s212 = scalar_lea.vmem %s3, %s211
      %p213 = scmp.lt.s32.totalorder %s15, 1
      %s214 = scalar_select %p213, %s15, 1
      %s215 = smul.addr %s214, 32
      %s216 = smul.addr %s215, 8
      %s217 = scalar_lea.vmem %s4, %s216
      %v219 = vld [vmem:[%s207] sm:$0xf]
      %v220 = vld [vmem:[%s207 + $0x4] sm:$0xf]
      %v221 = vld [vmem:[%s207 + $0x8] sm:$0xf]
      %v222 = vld [vmem:[%s207 + $0xc] sm:$0xf]
      %v223 = vld [vmem:[%s207 + $0x10] sm:$0xf]
      %v224 = vld [vmem:[%s207 + $0x14] sm:$0xf]
      %v225 = vld [vmem:[%s207 + $0x18] sm:$0xf]
      %v226 = vld [vmem:[%s207 + $0x1c] sm:$0xf]
      %v227 = vld [vmem:[%s207 + $0x20] sm:$0xf]
      %v228 = vld [vmem:[%s207 + $0x24] sm:$0xf]
      %v229 = vld [vmem:[%s207 + $0x28] sm:$0xf]
      %v230 = vld [vmem:[%s207 + $0x2c] sm:$0xf]
      %v231 = vld [vmem:[%s207 + $0x30] sm:$0xf]
      %v232 = vld [vmem:[%s207 + $0x34] sm:$0xf]
      %v233 = vld [vmem:[%s207 + $0x38] sm:$0xf]
      %v234 = vld [vmem:[%s207 + $0x3c] sm:$0xf]
      %v235 = vld [vmem:[%s207 + $0x40] sm:$0xf]
      %v236 = vld [vmem:[%s207 + $0x44] sm:$0xf]
      %v237 = vld [vmem:[%s207 + $0x48] sm:$0xf]
      %v238 = vld [vmem:[%s207 + $0x4c] sm:$0xf]
      %v239 = vld [vmem:[%s207 + $0x50] sm:$0xf]
      %v240 = vld [vmem:[%s207 + $0x54] sm:$0xf]
      %v241 = vld [vmem:[%s207 + $0x58] sm:$0xf]
      %v242 = vld [vmem:[%s207 + $0x5c] sm:$0xf]
      %v243 = vld [vmem:[%s207 + $0x60] sm:$0xf]
      %v244 = vld [vmem:[%s207 + $0x64] sm:$0xf]
      %v245 = vld [vmem:[%s207 + $0x68] sm:$0xf]
      %v246 = vld [vmem:[%s207 + $0x6c] sm:$0xf]
      %v247 = vld [vmem:[%s207 + $0x70] sm:$0xf]
      %v248 = vld [vmem:[%s207 + $0x74] sm:$0xf]
      %v249 = vld [vmem:[%s207 + $0x78] sm:$0xf]
      %v250 = vld [vmem:[%s207 + $0x7c] sm:$0xf]
      %v251 = vld [vmem:[%s1] sm:$0xf]
      %v252 = vld [vmem:[%s1 + $0x4] sm:$0xf]
      %v253 = vld [vmem:[%s1 + $0x8] sm:$0xf]
      %v254 = vld [vmem:[%s207 + $0x80] sm:$0xf]
      %v255 = vld [vmem:[%s207 + $0x84] sm:$0xf]
      %s256 = scalar_lea.vmem %s1, 12
      %v257 = vld [vmem:[%s256] sm:$0xf]
      %v258 = vld [vmem:[%s256 + $0x4] sm:$0xf]
      %v259 = vld [vmem:[%s256 + $0x8] sm:$0xf]
      %v292 = vunpack.c.l.b16 %v221
      %v293 = vunpack.c.l.b16 %v222
      %v294 = vunpack.c.l.b16 %v223
      %v295 = vunpack.c.l.b16 %v224
      %v296 = vunpack.c.l.b16 %v225
      %v297 = vunpack.c.l.b16 %v226
      %v298 = vunpack.c.l.b16 %v227
      %v299 = vunpack.c.l.b16 %v228
      %v300 = vunpack.c.l.b16 %v229
      %v301 = vunpack.c.l.b16 %v230
      %v302 = vunpack.c.l.b16 %v231
      %v303 = vunpack.c.l.b16 %v232
      %v304 = vunpack.c.l.b16 %v233
      %v305 = vunpack.c.l.b16 %v234
      %v306 = vunpack.c.l.b16 %v235
      %v307 = vunpack.c.l.b16 %v236
      %v308 = vunpack.c.l.b16 %v237
      %v309 = vunpack.c.l.b16 %v238
      %v310 = vunpack.c.l.b16 %v239
      %v311 = vunpack.c.l.b16 %v240
      %v312 = vunpack.c.l.b16 %v241
      %v313 = vunpack.c.l.b16 %v242
      %v314 = vunpack.c.l.b16 %v243
      %v315 = vunpack.c.l.b16 %v244
      %v316 = vunpack.c.l.b16 %v245
      %v317 = vunpack.c.l.b16 %v246
      %v318 = vunpack.c.l.b16 %v247
      %v319 = vunpack.c.l.b16 %v248
      %v320 = vunpack.c.l.b16 %v249
      %v321 = vunpack.c.l.b16 %v250
      %v322 = vunpack.c.l.b16 %v254
      %v323 = vunpack.c.l.b16 %v255
      %v324 = vpack.c.b16 %v293, %v292
      %v325 = vpack.c.b16 %v295, %v294
      %v326 = vpack.c.b16 %v297, %v296
      %v327 = vpack.c.b16 %v299, %v298
      %v328 = vpack.c.b16 %v301, %v300
      %v329 = vpack.c.b16 %v303, %v302
      %v330 = vpack.c.b16 %v305, %v304
      %v331 = vpack.c.b16 %v307, %v306
      %v332 = vpack.c.b16 %v309, %v308
      %v333 = vpack.c.b16 %v311, %v310
      %v334 = vpack.c.b16 %v313, %v312
      %v335 = vpack.c.b16 %v315, %v314
      %v336 = vpack.c.b16 %v317, %v316
      %v337 = vpack.c.b16 %v319, %v318
      %v338 = vpack.c.b16 %v321, %v320
      %v339 = vpack.c.b16 %v323, %v322
      %v343 = vunpack.c.l.b16 %v257
      %v344 = vunpack.c.l.b16 %v258
      %v345 = vunpack.c.l.b16 %v259
      %v346 = vpack.c.b16 %v344, %v343
      %v347 = vpack.c.b16 %v345, %v345
      %vm349 = vcmask 195584
      %v351 = vsel %vm349, %v324, 0
      %v354 = vsel %vm349, %v325, 0
      %v357 = vsel %vm349, %v326, 0
      %v360 = vsel %vm349, %v327, 0
      %v363 = vsel %vm349, %v328, 0
      %v366 = vsel %vm349, %v329, 0
      %v369 = vsel %vm349, %v330, 0
      %v372 = vsel %vm349, %v331, 0
      %v375 = vsel %vm349, %v332, 0
      %v378 = vsel %vm349, %v333, 0
      %v381 = vsel %vm349, %v334, 0
      %v384 = vsel %vm349, %v335, 0
      %v387 = vsel %vm349, %v336, 0
      %v390 = vsel %vm349, %v337, 0
      %v393 = vsel %vm349, %v338, 0
      %v396 = vsel %vm349, %v339, 0
      %vm398 = vcmask 1043456
      %v400 = vsel %vm398, %v347, 0
      %402 = vmatprep.subr.bf16.mxu0 0
      %403 = vmatpush1.bf16.msra.mxu0 %v346
      %404 = vmatprep.subr.bf16.mxu0 0
      %405 = vmatpush1.bf16.msra.mxu0 %v400
      %406 = vmatprep.subr.bf16.mxu0 0
      %407 = vmatpush1.bf16.msra.mxu0 0
      %408 = vmatprep.subr.bf16.mxu0 0
      %409 = vmatpush1.bf16.msra.mxu0 0
      %410 = vmatprep.subr.bf16.mxu0 0
      %411 = vmatpush1.bf16.msra.mxu0 0
      %412 = vmatprep.subr.bf16.mxu0 0
      %413 = vmatpush1.bf16.msra.mxu0 0
      %414 = vmatprep.subr.bf16.mxu0 0
      %415 = vmatpush1.bf16.msra.mxu0 0
      %416 = vmatprep.subr.bf16.mxu0 0
      %417 = vmatpush1.bf16.msra.mxu0 0
      %418 = vmatprep.subr.bf16.mxu0 0
      %419 = vmatpush1.bf16.msra.mxu0 0
      %420 = vmatprep.subr.bf16.mxu0 0
      %421 = vmatpush1.bf16.msra.mxu0 0
      %422 = vmatprep.subr.bf16.mxu0 0
      %423 = vmatpush1.bf16.msra.mxu0 0
      %424 = vmatprep.subr.bf16.mxu0 0
      %425 = vmatpush1.bf16.msra.mxu0 0
      %426 = vmatprep.subr.bf16.mxu0 0
      %427 = vmatpush1.bf16.msra.mxu0 0
      %428 = vmatprep.subr.bf16.mxu0 0
      %429 = vmatpush1.bf16.msra.mxu0 0
      %430 = vmatprep.subr.bf16.mxu0 0
      %431 = vmatpush1.bf16.msra.mxu0 0
      %432 = vmatprep.subr.bf16.mxu0 0
      %433 = vmatpush1.bf16.msra.mxu0 0
      %434 = vmatprep.mubr.bf16.mxu0 0
      %435 = vmatmul.mubr.bf16.gmra.mrb[0].mxu0 %v351
      %v436 = vpop.f32.mrb[0].mxu0
      %v437 = vadd.f32 0.0, %v436
      %v438 = vpop.f32.mrb[0].mxu0
      %v439 = vpop.f32.mrb[0].mxu0
      %v440 = vadd.f32 0.0, %v439
      %v441 = vpop.f32.mrb[0].mxu0
      %442 = vmatprep.mubr.bf16.mxu0 0
      %443 = vmatmul.mubr.bf16.gmra.mrb[0].mxu0 %v354
      %v444 = vpop.f32.mrb[0].mxu0
      %v445 = vadd.f32 0.0, %v444
      %v446 = vpop.f32.mrb[0].mxu0
      %v447 = vpop.f32.mrb[0].mxu0
      %v448 = vadd.f32 0.0, %v447
      %v449 = vpop.f32.mrb[0].mxu0
      %450 = vmatprep.mubr.bf16.mxu0 0
      %451 = vmatmul.mubr.bf16.gmra.mrb[0].mxu0 %v357
      %v452 = vpop.f32.mrb[0].mxu0
      %v453 = vadd.f32 0.0, %v452
      %v454 = vpop.f32.mrb[0].mxu0
      %v455 = vpop.f32.mrb[0].mxu0
      %v456 = vadd.f32 0.0, %v455
      %v457 = vpop.f32.mrb[0].mxu0
      %458 = vmatprep.mubr.bf16.mxu0 0
      %459 = vmatmul.mubr.bf16.gmra.mrb[0].mxu0 %v360
      %v460 = vpop.f32.mrb[0].mxu0
      %v461 = vadd.f32 0.0, %v460
      %v462 = vpop.f32.mrb[0].mxu0
      %v463 = vpop.f32.mrb[0].mxu0
      %v464 = vadd.f32 0.0, %v463
      %v465 = vpop.f32.mrb[0].mxu0
      %466 = vmatprep.mubr.bf16.mxu0 0
      %467 = vmatmul.mubr.bf16.gmra.mrb[0].mxu0 %v363
      %v468 = vpop.f32.mrb[0].mxu0
      %v469 = vadd.f32 0.0, %v468
      %v470 = vpop.f32.mrb[0].mxu0
      %v471 = vpop.f32.mrb[0].mxu0
      %v472 = vadd.f32 0.0, %v471
      %v473 = vpop.f32.mrb[0].mxu0
      %474 = vmatprep.mubr.bf16.mxu0 0
      %475 = vmatmul.mubr.bf16.gmra.mrb[0].mxu0 %v366
      %v476 = vpop.f32.mrb[0].mxu0
      %v477 = vadd.f32 0.0, %v476
      %v478 = vpop.f32.mrb[0].mxu0
      %v479 = vpop.f32.mrb[0].mxu0
      %v480 = vadd.f32 0.0, %v479
      %v481 = vpop.f32.mrb[0].mxu0
      %482 = vmatprep.mubr.bf16.mxu0 0
      %483 = vmatmul.mubr.bf16.gmra.mrb[0].mxu0 %v369
      %v484 = vpop.f32.mrb[0].mxu0
      %v485 = vadd.f32 0.0, %v484
      %v486 = vpop.f32.mrb[0].mxu0
      %v487 = vpop.f32.mrb[0].mxu0
      %v488 = vadd.f32 0.0, %v487
      %v489 = vpop.f32.mrb[0].mxu0
      %490 = vmatprep.mubr.bf16.mxu0 0
      %491 = vmatmul.mubr.bf16.gmra.mrb[0].mxu0 %v372
      %v492 = vpop.f32.mrb[0].mxu0
      %v493 = vadd.f32 0.0, %v492
      %v494 = vpop.f32.mrb[0].mxu0
      %v495 = vpop.f32.mrb[0].mxu0
      %v496 = vadd.f32 0.0, %v495
      %v497 = vpop.f32.mrb[0].mxu0
      %498 = vmatprep.mubr.bf16.mxu0 0
      %499 = vmatmul.mubr.bf16.gmra.mrb[0].mxu0 %v375
      %v500 = vpop.f32.mrb[0].mxu0
      %v501 = vadd.f32 0.0, %v500
      %v502 = vpop.f32.mrb[0].mxu0
      %v503 = vpop.f32.mrb[0].mxu0
      %v504 = vadd.f32 0.0, %v503
      %v505 = vpop.f32.mrb[0].mxu0
      %506 = vmatprep.mubr.bf16.mxu0 0
      %507 = vmatmul.mubr.bf16.gmra.mrb[0].mxu0 %v378
      %v508 = vpop.f32.mrb[0].mxu0
      %v509 = vadd.f32 0.0, %v508
      %v510 = vpop.f32.mrb[0].mxu0
      %v511 = vpop.f32.mrb[0].mxu0
      %v512 = vadd.f32 0.0, %v511
      %v513 = vpop.f32.mrb[0].mxu0
      %514 = vmatprep.mubr.bf16.mxu0 0
      %515 = vmatmul.mubr.bf16.gmra.mrb[0].mxu0 %v381
      %v516 = vpop.f32.mrb[0].mxu0
      %v517 = vadd.f32 0.0, %v516
      %v518 = vpop.f32.mrb[0].mxu0
      %v519 = vpop.f32.mrb[0].mxu0
      %v520 = vadd.f32 0.0, %v519
      %v521 = vpop.f32.mrb[0].mxu0
      %522 = vmatprep.mubr.bf16.mxu0 0
      %523 = vmatmul.mubr.bf16.gmra.mrb[0].mxu0 %v384
      %v524 = vpop.f32.mrb[0].mxu0
      %v525 = vadd.f32 0.0, %v524
      %v526 = vpop.f32.mrb[0].mxu0
      %v527 = vpop.f32.mrb[0].mxu0
      %v528 = vadd.f32 0.0, %v527
      %v529 = vpop.f32.mrb[0].mxu0
      %530 = vmatprep.mubr.bf16.mxu0 0
      %531 = vmatmul.mubr.bf16.gmra.mrb[0].mxu0 %v387
      %v532 = vpop.f32.mrb[0].mxu0
      %v533 = vadd.f32 0.0, %v532
      %v534 = vpop.f32.mrb[0].mxu0
      %v535 = vpop.f32.mrb[0].mxu0
      %v536 = vadd.f32 0.0, %v535
      %v537 = vpop.f32.mrb[0].mxu0
      %538 = vmatprep.mubr.bf16.mxu0 0
      %539 = vmatmul.mubr.bf16.gmra.mrb[0].mxu0 %v390
      %v540 = vpop.f32.mrb[0].mxu0
      %v541 = vadd.f32 0.0, %v540
      %v542 = vpop.f32.mrb[0].mxu0
      %v543 = vpop.f32.mrb[0].mxu0
      %v544 = vadd.f32 0.0, %v543
      %v545 = vpop.f32.mrb[0].mxu0
      %546 = vmatprep.mubr.bf16.mxu0 0
      %547 = vmatmul.mubr.bf16.gmra.mrb[0].mxu0 %v393
      %v548 = vpop.f32.mrb[0].mxu0
      %v549 = vadd.f32 0.0, %v548
      %v550 = vpop.f32.mrb[0].mxu0
      %v551 = vpop.f32.mrb[0].mxu0
      %v552 = vadd.f32 0.0, %v551
      %v553 = vpop.f32.mrb[0].mxu0
      %554 = vmatprep.mubr.bf16.mxu0 0
      %555 = vmatmul.mubr.bf16.gmra.mrb[0].mxu0 %v396
      %v556 = vpop.f32.mrb[0].mxu0
      %v557 = vadd.f32 0.0, %v556
      %v558 = vpop.f32.mrb[0].mxu0
      %v559 = vpop.f32.mrb[0].mxu0
      %v560 = vadd.f32 0.0, %v559
      %v561 = vpop.f32.mrb[0].mxu0
      %562 = vdwg.mxu0
      %v565 = vunpack.c.l.b16 %v219
      %v566 = vunpack.c.l.b16 %v220
      %v567 = vpack.c.b16 %v566, %v565
      %v571 = vunpack.c.l.b16 %v251
      %v572 = vunpack.c.l.b16 %v252
      %v573 = vunpack.c.l.b16 %v253
      %v574 = vpack.c.b16 %v572, %v571
      %v575 = vpack.c.b16 %v573, %v573
      %v578 = vsel %vm349, %v567, 0
      %v581 = vsel %vm398, %v575, 0
      %583 = vmatprep.subr.bf16.mxu0 0
      %584 = vmatpush1.bf16.msra.mxu0 %v574
      %585 = vmatprep.subr.bf16.mxu0 0
      %586 = vmatpush1.bf16.msra.mxu0 %v581
      %587 = vmatprep.subr.bf16.mxu0 0
      %588 = vmatpush1.bf16.msra.mxu0 0
      %589 = vmatprep.subr.bf16.mxu0 0
      %590 = vmatpush1.bf16.msra.mxu0 0
      %591 = vmatprep.subr.bf16.mxu0 0
      %592 = vmatpush1.bf16.msra.mxu0 0
      %593 = vmatprep.subr.bf16.mxu0 0
      %594 = vmatpush1.bf16.msra.mxu0 0
      %595 = vmatprep.subr.bf16.mxu0 0
      %596 = vmatpush1.bf16.msra.mxu0 0
      %597 = vmatprep.subr.bf16.mxu0 0
      %598 = vmatpush1.bf16.msra.mxu0 0
      %599 = vmatprep.subr.bf16.mxu0 0
      %600 = vmatpush1.bf16.msra.mxu0 0
      %601 = vmatprep.subr.bf16.mxu0 0
      %602 = vmatpush1.bf16.msra.mxu0 0
      %603 = vmatprep.subr.bf16.mxu0 0
      %604 = vmatpush1.bf16.msra.mxu0 0
      %605 = vmatprep.subr.bf16.mxu0 0
      %606 = vmatpush1.bf16.msra.mxu0 0
      %607 = vmatprep.subr.bf16.mxu0 0
      %608 = vmatpush1.bf16.msra.mxu0 0
      %609 = vmatprep.subr.bf16.mxu0 0
      %610 = vmatpush1.bf16.msra.mxu0 0
      %611 = vmatprep.subr.bf16.mxu0 0
      %612 = vmatpush1.bf16.msra.mxu0 0
      %613 = vmatprep.subr.bf16.mxu0 0
      %614 = vmatpush1.bf16.msra.mxu0 0
      %615 = vmatprep.mubr.bf16.mxu0 0
      %616 = vmatmul.mubr.bf16.gmra.mrb[0].mxu0 %v578
      %v617 = vpop.f32.mrb[0].mxu0
      %v618 = vadd.f32 %v437, %v617
      %v619 = vpop.f32.mrb[0].mxu0
      %v620 = vpop.f32.mrb[0].mxu0
      %v621 = vadd.f32 %v440, %v620
      %v622 = vpop.f32.mrb[0].mxu0
      %623 = vmatprep.mubr.bf16.mxu0 0
      %624 = vmatmul.mubr.bf16.gmra.mrb[0].mxu0 %v351
      %v625 = vpop.f32.mrb[0].mxu0
      %v626 = vadd.f32 %v445, %v625
      %v627 = vpop.f32.mrb[0].mxu0
      %v628 = vpop.f32.mrb[0].mxu0
      %v629 = vadd.f32 %v448, %v628
      %v630 = vpop.f32.mrb[0].mxu0
      %631 = vmatprep.mubr.bf16.mxu0 0
      %632 = vmatmul.mubr.bf16.gmra.mrb[0].mxu0 %v354
      %v633 = vpop.f32.mrb[0].mxu0
      %v634 = vadd.f32 %v453, %v633
      %v635 = vpop.f32.mrb[0].mxu0
      %v636 = vpop.f32.mrb[0].mxu0
      %v637 = vadd.f32 %v456, %v636
      %v638 = vpop.f32.mrb[0].mxu0
      %639 = vmatprep.mubr.bf16.mxu0 0
      %640 = vmatmul.mubr.bf16.gmra.mrb[0].mxu0 %v357
      %v641 = vpop.f32.mrb[0].mxu0
      %v642 = vadd.f32 %v461, %v641
      %v643 = vpop.f32.mrb[0].mxu0
      %v644 = vpop.f32.mrb[0].mxu0
      %v645 = vadd.f32 %v464, %v644
      %v646 = vpop.f32.mrb[0].mxu0
      %647 = vmatprep.mubr.bf16.mxu0 0
      %648 = vmatmul.mubr.bf16.gmra.mrb[0].mxu0 %v360
      %v649 = vpop.f32.mrb[0].mxu0
      %v650 = vadd.f32 %v469, %v649
      %v651 = vpop.f32.mrb[0].mxu0
      %v652 = vpop.f32.mrb[0].mxu0
      %v653 = vadd.f32 %v472, %v652
      %v654 = vpop.f32.mrb[0].mxu0
      %655 = vmatprep.mubr.bf16.mxu0 0
      %656 = vmatmul.mubr.bf16.gmra.mrb[0].mxu0 %v363
      %v657 = vpop.f32.mrb[0].mxu0
      %v658 = vadd.f32 %v477, %v657
      %v659 = vpop.f32.mrb[0].mxu0
      %v660 = vpop.f32.mrb[0].mxu0
      %v661 = vadd.f32 %v480, %v660
      %v662 = vpop.f32.mrb[0].mxu0
      %663 = vmatprep.mubr.bf16.mxu0 0
      %664 = vmatmul.mubr.bf16.gmra.mrb[0].mxu0 %v366
      %v665 = vpop.f32.mrb[0].mxu0
      %v666 = vadd.f32 %v485, %v665
      %v667 = vpop.f32.mrb[0].mxu0
      %v668 = vpop.f32.mrb[0].mxu0
      %v669 = vadd.f32 %v488, %v668
      %v670 = vpop.f32.mrb[0].mxu0
      %671 = vmatprep.mubr.bf16.mxu0 0
      %672 = vmatmul.mubr.bf16.gmra.mrb[0].mxu0 %v369
      %v673 = vpop.f32.mrb[0].mxu0
      %v674 = vadd.f32 %v493, %v673
      %v675 = vpop.f32.mrb[0].mxu0
      %v676 = vpop.f32.mrb[0].mxu0
      %v677 = vadd.f32 %v496, %v676
      %v678 = vpop.f32.mrb[0].mxu0
      %679 = vmatprep.mubr.bf16.mxu0 0
      %680 = vmatmul.mubr.bf16.gmra.mrb[0].mxu0 %v372
      %v681 = vpop.f32.mrb[0].mxu0
      %v682 = vadd.f32 %v501, %v681
      %v683 = vpop.f32.mrb[0].mxu0
      %v684 = vpop.f32.mrb[0].mxu0
      %v685 = vadd.f32 %v504, %v684
      %v686 = vpop.f32.mrb[0].mxu0
      %687 = vmatprep.mubr.bf16.mxu0 0
      %688 = vmatmul.mubr.bf16.gmra.mrb[0].mxu0 %v375
      %v689 = vpop.f32.mrb[0].mxu0
      %v690 = vadd.f32 %v509, %v689
      %v691 = vpop.f32.mrb[0].mxu0
      %v692 = vpop.f32.mrb[0].mxu0
      %v693 = vadd.f32 %v512, %v692
      %v694 = vpop.f32.mrb[0].mxu0
      %695 = vmatprep.mubr.bf16.mxu0 0
      %696 = vmatmul.mubr.bf16.gmra.mrb[0].mxu0 %v378
      %v697 = vpop.f32.mrb[0].mxu0
      %v698 = vadd.f32 %v517, %v697
      %v699 = vpop.f32.mrb[0].mxu0
      %v700 = vpop.f32.mrb[0].mxu0
      %v701 = vadd.f32 %v520, %v700
      %v702 = vpop.f32.mrb[0].mxu0
      %703 = vmatprep.mubr.bf16.mxu0 0
      %704 = vmatmul.mubr.bf16.gmra.mrb[0].mxu0 %v381
      %v705 = vpop.f32.mrb[0].mxu0
      %v706 = vadd.f32 %v525, %v705
      %v707 = vpop.f32.mrb[0].mxu0
      %v708 = vpop.f32.mrb[0].mxu0
      %v709 = vadd.f32 %v528, %v708
      %v710 = vpop.f32.mrb[0].mxu0
      %711 = vmatprep.mubr.bf16.mxu0 0
      %712 = vmatmul.mubr.bf16.gmra.mrb[0].mxu0 %v384
      %v713 = vpop.f32.mrb[0].mxu0
      %v714 = vadd.f32 %v533, %v713
      %v715 = vpop.f32.mrb[0].mxu0
      %v716 = vpop.f32.mrb[0].mxu0
      %v717 = vadd.f32 %v536, %v716
      %v718 = vpop.f32.mrb[0].mxu0
      %719 = vmatprep.mubr.bf16.mxu0 0
      %720 = vmatmul.mubr.bf16.gmra.mrb[0].mxu0 %v387
      %v721 = vpop.f32.mrb[0].mxu0
      %v722 = vadd.f32 %v541, %v721
      %v723 = vpop.f32.mrb[0].mxu0
      %v724 = vpop.f32.mrb[0].mxu0
      %v725 = vadd.f32 %v544, %v724
      %v726 = vpop.f32.mrb[0].mxu0
      %727 = vmatprep.mubr.bf16.mxu0 0
      %728 = vmatmul.mubr.bf16.gmra.mrb[0].mxu0 %v390
      %v729 = vpop.f32.mrb[0].mxu0
      %v730 = vadd.f32 %v549, %v729
      %v731 = vpop.f32.mrb[0].mxu0
      %v732 = vpop.f32.mrb[0].mxu0
      %v733 = vadd.f32 %v552, %v732
      %v734 = vpop.f32.mrb[0].mxu0
      %735 = vmatprep.mubr.bf16.mxu0 0
      %736 = vmatmul.mubr.bf16.gmra.mrb[0].mxu0 %v393
      %v737 = vpop.f32.mrb[0].mxu0
      %v738 = vadd.f32 %v557, %v737
      %v739 = vpop.f32.mrb[0].mxu0
      %v740 = vpop.f32.mrb[0].mxu0
      %v741 = vadd.f32 %v560, %v740
      %v742 = vpop.f32.mrb[0].mxu0
      %743 = vdwg.mxu0
      %v744 = vld [vmem:[%s207 + $0x10] sm:$0xf]
      %v745 = vld [vmem:[%s207 + $0x14] sm:$0xf]
      %v746 = vld [vmem:[%s207 + $0x18] sm:$0xf]
      %v747 = vld [vmem:[%s207 + $0x1c] sm:$0xf]
      %v748 = vld [vmem:[%s207 + $0x20] sm:$0xf]
      %v749 = vld [vmem:[%s207 + $0x24] sm:$0xf]
      %v750 = vld [vmem:[%s207 + $0x28] sm:$0xf]
      %v751 = vld [vmem:[%s207 + $0x2c] sm:$0xf]
      %v752 = vld [vmem:[%s207 + $0x30] sm:$0xf]
      %v753 = vld [vmem:[%s207 + $0x34] sm:$0xf]
      %v754 = vld [vmem:[%s207 + $0x38] sm:$0xf]
      %v755 = vld [vmem:[%s207 + $0x3c] sm:$0xf]
      %v756 = vld [vmem:[%s207 + $0x40] sm:$0xf]
      %v757 = vld [vmem:[%s207 + $0x44] sm:$0xf]
      %v758 = vld [vmem:[%s207 + $0x48] sm:$0xf]
      %v759 = vld [vmem:[%s207 + $0x4c] sm:$0xf]
      %v760 = vld [vmem:[%s207 + $0x50] sm:$0xf]
      %v761 = vld [vmem:[%s207 + $0x54] sm:$0xf]
      %v762 = vld [vmem:[%s207 + $0x58] sm:$0xf]
      %v763 = vld [vmem:[%s207 + $0x5c] sm:$0xf]
      %v764 = vld [vmem:[%s207 + $0x60] sm:$0xf]
      %v765 = vld [vmem:[%s207 + $0x64] sm:$0xf]
      %v766 = vld [vmem:[%s207 + $0x68] sm:$0xf]
      %v767 = vld [vmem:[%s207 + $0x6c] sm:$0xf]
      %v768 = vld [vmem:[%s207 + $0x70] sm:$0xf]
      %v769 = vld [vmem:[%s207 + $0x74] sm:$0xf]
      %v770 = vld [vmem:[%s207 + $0x78] sm:$0xf]
      %v771 = vld [vmem:[%s207 + $0x7c] sm:$0xf]
      %v772 = vld [vmem:[%s207 + $0x80] sm:$0xf]
      %v773 = vld [vmem:[%s207 + $0x84] sm:$0xf]
      %v774 = vld [vmem:[%s207 + $0x88] sm:$0xf]
      %v775 = vld [vmem:[%s207 + $0x8c] sm:$0xf]
      %s776 = scalar_lea.vmem %s1, 24
      %v777 = vld [vmem:[%s776] sm:$0xf]
      %v778 = vld [vmem:[%s776 + $0x4] sm:$0xf]
      %v779 = vld [vmem:[%s776 + $0x8] sm:$0xf]
      %v812 = vunpack.c.l.b16 %v744
      %v813 = vunpack.c.l.b16 %v745
      %v814 = vunpack.c.l.b16 %v746
      %v815 = vunpack.c.l.b16 %v747
      %v816 = vunpack.c.l.b16 %v748
      %v817 = vunpack.c.l.b16 %v749
      %v818 = vunpack.c.l.b16 %v750
      %v819 = vunpack.c.l.b16 %v751
      %v820 = vunpack.c.l.b16 %v752
      %v821 = vunpack.c.l.b16 %v753
      %v822 = vunpack.c.l.b16 %v754
      %v823 = vunpack.c.l.b16 %v755
      %v824 = vunpack.c.l.b16 %v756
      %v825 = vunpack.c.l.b16 %v757
      %v826 = vunpack.c.l.b16 %v758
      %v827 = vunpack.c.l.b16 %v759
      %v828 = vunpack.c.l.b16 %v760
      %v829 = vunpack.c.l.b16 %v761
      %v830 = vunpack.c.l.b16 %v762
      %v831 = vunpack.c.l.b16 %v763
      %v832 = vunpack.c.l.b16 %v764
      %v833 = vunpack.c.l.b16 %v765
      %v834 = vunpack.c.l.b16 %v766
      %v835 = vunpack.c.l.b16 %v767
      %v836 = vunpack.c.l.b16 %v768
      %v837 = vunpack.c.l.b16 %v769
      %v838 = vunpack.c.l.b16 %v770
      %v839 = vunpack.c.l.b16 %v771
      %v840 = vunpack.c.l.b16 %v772
      %v841 = vunpack.c.l.b16 %v773
      %v842 = vunpack.c.l.b16 %v774
      %v843 = vunpack.c.l.b16 %v775
      %v844 = vpack.c.b16 %v813, %v812
      %v845 = vpack.c.b16 %v815, %v814
      %v846 = vpack.c.b16 %v817, %v816
      %v847 = vpack.c.b16 %v819, %v818
      %v848 = vpack.c.b16 %v821, %v820
      %v849 = vpack.c.b16 %v823, %v822
      %v850 = vpack.c.b16 %v825, %v824
      %v851 = vpack.c.b16 %v827, %v826
      %v852 = vpack.c.b16 %v829, %v828
      %v853 = vpack.c.b16 %v831, %v830
      %v854 = vpack.c.b16 %v833, %v832
      %v855 = vpack.c.b16 %v835, %v834
      %v856 = vpack.c.b16 %v837, %v836
      %v857 = vpack.c.b16 %v839, %v838
      %v858 = vpack.c.b16 %v841, %v840
      %v859 = vpack.c.b16 %v843, %v842
      %v863 = vunpack.c.l.b16 %v777
      %v864 = vunpack.c.l.b16 %v778
      %v865 = vunpack.c.l.b16 %v779
      %v866 = vpack.c.b16 %v864, %v863
      %v867 = vpack.c.b16 %v865, %v865
      %v870 = vsel %vm349, %v844, 0
      %v873 = vsel %vm349, %v845, 0
      %v876 = vsel %vm349, %v846, 0
      %v879 = vsel %vm349, %v847, 0
      %v882 = vsel %vm349, %v848, 0
      %v885 = vsel %vm349, %v849, 0
      %v888 = vsel %vm349, %v850, 0
      %v891 = vsel %vm349, %v851, 0
      %v894 = vsel %vm349, %v852, 0
      %v897 = vsel %vm349, %v853, 0
      %v900 = vsel %vm349, %v854, 0
      %v903 = vsel %vm349, %v855, 0
      %v906 = vsel %vm349, %v856, 0
      %v909 = vsel %vm349, %v857, 0
      %v912 = vsel %vm349, %v858, 0
      %v915 = vsel %vm349, %v859, 0
      %v918 = vsel %vm398, %v867, 0
      %920 = vmatprep.subr.bf16.mxu0 0
      %921 = vmatpush1.bf16.msra.mxu0 %v866
      %922 = vmatprep.subr.bf16.mxu0 0
      %923 = vmatpush1.bf16.msra.mxu0 %v918
      %924 = vmatprep.subr.bf16.mxu0 0
      %925 = vmatpush1.bf16.msra.mxu0 0
      %926 = vmatprep.subr.bf16.mxu0 0
      %927 = vmatpush1.bf16.msra.mxu0 0
      %928 = vmatprep.subr.bf16.mxu0 0
      %929 = vmatpush1.bf16.msra.mxu0 0
      %930 = vmatprep.subr.bf16.mxu0 0
      %931 = vmatpush1.bf16.msra.mxu0 0
      %932 = vmatprep.subr.bf16.mxu0 0
      %933 = vmatpush1.bf16.msra.mxu0 0
      %934 = vmatprep.subr.bf16.mxu0 0
      %935 = vmatpush1.bf16.msra.mxu0 0
      %936 = vmatprep.subr.bf16.mxu0 0
      %937 = vmatpush1.bf16.msra.mxu0 0
      %938 = vmatprep.subr.bf16.mxu0 0
      %939 = vmatpush1.bf16.msra.mxu0 0
      %940 = vmatprep.subr.bf16.mxu0 0
      %941 = vmatpush1.bf16.msra.mxu0 0
      %942 = vmatprep.subr.bf16.mxu0 0
      %943 = vmatpush1.bf16.msra.mxu0 0
      %944 = vmatprep.subr.bf16.mxu0 0
      %945 = vmatpush1.bf16.msra.mxu0 0
      %946 = vmatprep.subr.bf16.mxu0 0
      %947 = vmatpush1.bf16.msra.mxu0 0
      %948 = vmatprep.subr.bf16.mxu0 0
      %949 = vmatpush1.bf16.msra.mxu0 0
      %950 = vmatprep.subr.bf16.mxu0 0
      %951 = vmatpush1.bf16.msra.mxu0 0
      %952 = vmatprep.mubr.bf16.mxu0 0
      %953 = vmatmul.mubr.bf16.gmra.mrb[0].mxu0 %v870
      %v954 = vpop.f32.mrb[0].mxu0
      %v955 = vadd.f32 0.0, %v954
      %v956 = vpop.f32.mrb[0].mxu0
      %v957 = vpop.f32.mrb[0].mxu0
      %v958 = vadd.f32 0.0, %v957
      %v959 = vpop.f32.mrb[0].mxu0
      %960 = vmatprep.mubr.bf16.mxu0 0
      %961 = vmatmul.mubr.bf16.gmra.mrb[0].mxu0 %v873
      %v962 = vpop.f32.mrb[0].mxu0
      %v963 = vadd.f32 0.0, %v962
      %v964 = vpop.f32.mrb[0].mxu0
      %v965 = vpop.f32.mrb[0].mxu0
      %v966 = vadd.f32 0.0, %v965
      %v967 = vpop.f32.mrb[0].mxu0
      %968 = vmatprep.mubr.bf16.mxu0 0
      %969 = vmatmul.mubr.bf16.gmra.mrb[0].mxu0 %v876
      %v970 = vpop.f32.mrb[0].mxu0
      %v971 = vadd.f32 0.0, %v970
      %v972 = vpop.f32.mrb[0].mxu0
      %v973 = vpop.f32.mrb[0].mxu0
      %v974 = vadd.f32 0.0, %v973
      %v975 = vpop.f32.mrb[0].mxu0
      %976 = vmatprep.mubr.bf16.mxu0 0
      %977 = vmatmul.mubr.bf16.gmra.mrb[0].mxu0 %v879
      %v978 = vpop.f32.mrb[0].mxu0
      %v979 = vadd.f32 0.0, %v978
      %v980 = vpop.f32.mrb[0].mxu0
      %v981 = vpop.f32.mrb[0].mxu0
      %v982 = vadd.f32 0.0, %v981
      %v983 = vpop.f32.mrb[0].mxu0
      %984 = vmatprep.mubr.bf16.mxu0 0
      %985 = vmatmul.mubr.bf16.gmra.mrb[0].mxu0 %v882
      %v986 = vpop.f32.mrb[0].mxu0
      %v987 = vadd.f32 0.0, %v986
      %v988 = vpop.f32.mrb[0].mxu0
      %v989 = vpop.f32.mrb[0].mxu0
      %v990 = vadd.f32 0.0, %v989
      %v991 = vpop.f32.mrb[0].mxu0
      %992 = vmatprep.mubr.bf16.mxu0 0
      %993 = vmatmul.mubr.bf16.gmra.mrb[0].mxu0 %v885
      %v994 = vpop.f32.mrb[0].mxu0
      %v995 = vadd.f32 0.0, %v994
      %v996 = vpop.f32.mrb[0].mxu0
      %v997 = vpop.f32.mrb[0].mxu0
      %v998 = vadd.f32 0.0, %v997
      %v999 = vpop.f32.mrb[0].mxu0
      %1000 = vmatprep.mubr.bf16.mxu0 0
      %1001 = vmatmul.mubr.bf16.gmra.mrb[0].mxu0 %v888
      %v1002 = vpop.f32.mrb[0].mxu0
      %v1003 = vadd.f32 0.0, %v1002
      %v1004 = vpop.f32.mrb[0].mxu0
      %v1005 = vpop.f32.mrb[0].mxu0
      %v1006 = vadd.f32 0.0, %v1005
      %v1007 = vpop.f32.mrb[0].mxu0
      %1008 = vmatprep.mubr.bf16.mxu0 0
      %1009 = vmatmul.mubr.bf16.gmra.mrb[0].mxu0 %v891
      %v1010 = vpop.f32.mrb[0].mxu0
      %v1011 = vadd.f32 0.0, %v1010
      %v1012 = vpop.f32.mrb[0].mxu0
      %v1013 = vpop.f32.mrb[0].mxu0
      %v1014 = vadd.f32 0.0, %v1013
      %v1015 = vpop.f32.mrb[0].mxu0
      %1016 = vmatprep.mubr.bf16.mxu0 0
      %1017 = vmatmul.mubr.bf16.gmra.mrb[0].mxu0 %v894
      %v1018 = vpop.f32.mrb[0].mxu0
      %v1019 = vadd.f32 0.0, %v1018
      %v1020 = vpop.f32.mrb[0].mxu0
      %v1021 = vpop.f32.mrb[0].mxu0
      %v1022 = vadd.f32 0.0, %v1021
      %v1023 = vpop.f32.mrb[0].mxu0
      %1024 = vmatprep.mubr.bf16.mxu0 0
      %1025 = vmatmul.mubr.bf16.gmra.mrb[0].mxu0 %v897
      %v1026 = vpop.f32.mrb[0].mxu0
      %v1027 = vadd.f32 0.0, %v1026
      %v1028 = vpop.f32.mrb[0].mxu0
      %v1029 = vpop.f32.mrb[0].mxu0
      %v1030 = vadd.f32 0.0, %v1029
      %v1031 = vpop.f32.mrb[0].mxu0
      %1032 = vmatprep.mubr.bf16.mxu0 0
      %1033 = vmatmul.mubr.bf16.gmra.mrb[0].mxu0 %v900
      %v1034 = vpop.f32.mrb[0].mxu0
      %v1035 = vadd.f32 0.0, %v1034
      %v1036 = vpop.f32.mrb[0].mxu0
      %v1037 = vpop.f32.mrb[0].mxu0
      %v1038 = vadd.f32 0.0, %v1037
      %v1039 = vpop.f32.mrb[0].mxu0
      %1040 = vmatprep.mubr.bf16.mxu0 0
      %1041 = vmatmul.mubr.bf16.gmra.mrb[0].mxu0 %v903
      %v1042 = vpop.f32.mrb[0].mxu0
      %v1043 = vadd.f32 0.0, %v1042
      %v1044 = vpop.f32.mrb[0].mxu0
      %v1045 = vpop.f32.mrb[0].mxu0
      %v1046 = vadd.f32 0.0, %v1045
      %v1047 = vpop.f32.mrb[0].mxu0
      %1048 = vmatprep.mubr.bf16.mxu0 0
      %1049 = vmatmul.mubr.bf16.gmra.mrb[0].mxu0 %v906
      %v1050 = vpop.f32.mrb[0].mxu0
      %v1051 = vadd.f32 0.0, %v1050
      %v1052 = vpop.f32.mrb[0].mxu0
      %v1053 = vpop.f32.mrb[0].mxu0
      %v1054 = vadd.f32 0.0, %v1053
      %v1055 = vpop.f32.mrb[0].mxu0
      %1056 = vmatprep.mubr.bf16.mxu0 0
      %1057 = vmatmul.mubr.bf16.gmra.mrb[0].mxu0 %v909
      %v1058 = vpop.f32.mrb[0].mxu0
      %v1059 = vadd.f32 0.0, %v1058
      %v1060 = vpop.f32.mrb[0].mxu0
      %v1061 = vpop.f32.mrb[0].mxu0
      %v1062 = vadd.f32 0.0, %v1061
      %v1063 = vpop.f32.mrb[0].mxu0
      %1064 = vmatprep.mubr.bf16.mxu0 0
      %1065 = vmatmul.mubr.bf16.gmra.mrb[0].mxu0 %v912
      %v1066 = vpop.f32.mrb[0].mxu0
      %v1067 = vadd.f32 0.0, %v1066
      %v1068 = vpop.f32.mrb[0].mxu0
      %v1069 = vpop.f32.mrb[0].mxu0
      %v1070 = vadd.f32 0.0, %v1069
      %v1071 = vpop.f32.mrb[0].mxu0
      %1072 = vmatprep.mubr.bf16.mxu0 0
      %1073 = vmatmul.mubr.bf16.gmra.mrb[0].mxu0 %v915
      %v1074 = vpop.f32.mrb[0].mxu0
      %v1075 = vadd.f32 0.0, %v1074
      %v1076 = vpop.f32.mrb[0].mxu0
      %v1077 = vpop.f32.mrb[0].mxu0
      %v1078 = vadd.f32 0.0, %v1077
      %v1079 = vpop.f32.mrb[0].mxu0
      %1080 = vdwg.mxu0
      %v1081 = vadd.f32 %v618, %v955
      %v1082 = vadd.f32 %v621, %v958
      %v1083 = vadd.f32 %v626, %v963
      %v1084 = vadd.f32 %v629, %v966
      %v1085 = vadd.f32 %v634, %v971
      %v1086 = vadd.f32 %v637, %v974
      %v1087 = vadd.f32 %v642, %v979
      %v1088 = vadd.f32 %v645, %v982
      %v1089 = vadd.f32 %v650, %v987
      %v1090 = vadd.f32 %v653, %v990
      %v1091 = vadd.f32 %v658, %v995
      %v1092 = vadd.f32 %v661, %v998
      %v1093 = vadd.f32 %v666, %v1003
      %v1094 = vadd.f32 %v669, %v1006
      %v1095 = vadd.f32 %v674, %v1011
      %v1096 = vadd.f32 %v677, %v1014
      %v1097 = vadd.f32 %v682, %v1019
      %v1098 = vadd.f32 %v685, %v1022
      %v1099 = vadd.f32 %v690, %v1027
      %v1100 = vadd.f32 %v693, %v1030
      %v1101 = vadd.f32 %v698, %v1035
      %v1102 = vadd.f32 %v701, %v1038
      %v1103 = vadd.f32 %v706, %v1043
      %v1104 = vadd.f32 %v709, %v1046
      %v1105 = vadd.f32 %v714, %v1051
      %v1106 = vadd.f32 %v717, %v1054
      %v1107 = vadd.f32 %v722, %v1059
      %v1108 = vadd.f32 %v725, %v1062
      %v1109 = vadd.f32 %v730, %v1067
      %v1110 = vadd.f32 %v733, %v1070
      %v1111 = vadd.f32 %v738, %v1075
      %v1112 = vadd.f32 %v741, %v1078
      %v1113 = vld [vmem:[%s2] sm:$0x1]
      %v1115 = vlaneseq
      %v1116 = vshrl.u32 %v1115, 7
      %v1117 = vsub.s32 0, %v1116
      %v1118 = vrot.slane %v1113, %v1117
      %v1120 = vadd.f32 %v1081, %v1118
      %v1121 = vadd.f32 %v1082, %v1118
      %v1122 = vadd.f32 %v1083, %v1118
      %v1123 = vadd.f32 %v1084, %v1118
      %v1124 = vadd.f32 %v1085, %v1118
      %v1125 = vadd.f32 %v1086, %v1118
      %v1126 = vadd.f32 %v1087, %v1118
      %v1127 = vadd.f32 %v1088, %v1118
      %v1128 = vadd.f32 %v1089, %v1118
      %v1129 = vadd.f32 %v1090, %v1118
      %v1130 = vadd.f32 %v1091, %v1118
      %v1131 = vadd.f32 %v1092, %v1118
      %v1132 = vadd.f32 %v1093, %v1118
      %v1133 = vadd.f32 %v1094, %v1118
      %v1134 = vadd.f32 %v1095, %v1118
      %v1135 = vadd.f32 %v1096, %v1118
      %v1136 = vadd.f32 %v1097, %v1118
      %v1137 = vadd.f32 %v1098, %v1118
      %v1138 = vadd.f32 %v1099, %v1118
      %v1139 = vadd.f32 %v1100, %v1118
      %v1140 = vadd.f32 %v1101, %v1118
      %v1141 = vadd.f32 %v1102, %v1118
      %v1142 = vadd.f32 %v1103, %v1118
      %v1143 = vadd.f32 %v1104, %v1118
      %v1144 = vadd.f32 %v1105, %v1118
      %v1145 = vadd.f32 %v1106, %v1118
      %v1146 = vadd.f32 %v1107, %v1118
      %v1147 = vadd.f32 %v1108, %v1118
      %v1148 = vadd.f32 %v1109, %v1118
      %v1149 = vadd.f32 %v1110, %v1118
      %v1150 = vadd.f32 %v1111, %v1118
      %v1151 = vadd.f32 %v1112, %v1118
      %v1152 = vld [vmem:[%s212] sm:$0xff]
      %v1153 = vld [vmem:[%s212 + $0x8] sm:$0xff]
      %v1154 = vld [vmem:[%s212 + $0x10] sm:$0xff]
      %v1155 = vld [vmem:[%s212 + $0x18] sm:$0xff]
      %v1156 = vld [vmem:[%s212 + $0x20] sm:$0xff]
      %v1157 = vld [vmem:[%s212 + $0x28] sm:$0xff]
      %v1158 = vld [vmem:[%s212 + $0x30] sm:$0xff]
      %v1159 = vld [vmem:[%s212 + $0x38] sm:$0xff]
      %v1160 = vld [vmem:[%s212 + $0x40] sm:$0xff]
      %v1161 = vld [vmem:[%s212 + $0x48] sm:$0xff]
      %v1162 = vld [vmem:[%s212 + $0x50] sm:$0xff]
      %v1163 = vld [vmem:[%s212 + $0x58] sm:$0xff]
      %v1164 = vld [vmem:[%s212 + $0x60] sm:$0xff]
      %v1165 = vld [vmem:[%s212 + $0x68] sm:$0xff]
      %v1166 = vld [vmem:[%s212 + $0x70] sm:$0xff]
      %v1167 = vld [vmem:[%s212 + $0x78] sm:$0xff]
      %v1168 = vld [vmem:[%s212 + $0x80] sm:$0xff]
      %v1169 = vld [vmem:[%s212 + $0x88] sm:$0xff]
      %v1170 = vld [vmem:[%s212 + $0x90] sm:$0xff]
      %v1171 = vld [vmem:[%s212 + $0x98] sm:$0xff]
      %v1172 = vld [vmem:[%s212 + $0xa0] sm:$0xff]
      %v1173 = vld [vmem:[%s212 + $0xa8] sm:$0xff]
      %v1174 = vld [vmem:[%s212 + $0xb0] sm:$0xff]
      %v1175 = vld [vmem:[%s212 + $0xb8] sm:$0xff]
      %v1176 = vld [vmem:[%s212 + $0xc0] sm:$0xff]
      %v1177 = vld [vmem:[%s212 + $0xc8] sm:$0xff]
      %v1178 = vld [vmem:[%s212 + $0xd0] sm:$0xff]
      %v1179 = vld [vmem:[%s212 + $0xd8] sm:$0xff]
      %v1180 = vld [vmem:[%s212 + $0xe0] sm:$0xff]
      %v1181 = vld [vmem:[%s212 + $0xe8] sm:$0xff]
      %v1182 = vld [vmem:[%s212 + $0xf0] sm:$0xff]
      %v1183 = vld [vmem:[%s212 + $0xf8] sm:$0xff]
      %v1184 = vadd.f32 %v1120, %v1152
      %v1185 = vadd.f32 %v1121, %v1153
      %v1186 = vadd.f32 %v1122, %v1154
      %v1187 = vadd.f32 %v1123, %v1155
      %v1188 = vadd.f32 %v1124, %v1156
      %v1189 = vadd.f32 %v1125, %v1157
      %v1190 = vadd.f32 %v1126, %v1158
      %v1191 = vadd.f32 %v1127, %v1159
      %v1192 = vadd.f32 %v1128, %v1160
      %v1193 = vadd.f32 %v1129, %v1161
      %v1194 = vadd.f32 %v1130, %v1162
      %v1195 = vadd.f32 %v1131, %v1163
      %v1196 = vadd.f32 %v1132, %v1164
      %v1197 = vadd.f32 %v1133, %v1165
      %v1198 = vadd.f32 %v1134, %v1166
      %v1199 = vadd.f32 %v1135, %v1167
      %v1200 = vadd.f32 %v1136, %v1168
      %v1201 = vadd.f32 %v1137, %v1169
      %v1202 = vadd.f32 %v1138, %v1170
      %v1203 = vadd.f32 %v1139, %v1171
      %v1204 = vadd.f32 %v1140, %v1172
      %v1205 = vadd.f32 %v1141, %v1173
      %v1206 = vadd.f32 %v1142, %v1174
      %v1207 = vadd.f32 %v1143, %v1175
      %v1208 = vadd.f32 %v1144, %v1176
      %v1209 = vadd.f32 %v1145, %v1177
      %v1210 = vadd.f32 %v1146, %v1178
      %v1211 = vadd.f32 %v1147, %v1179
      %v1212 = vadd.f32 %v1148, %v1180
      %v1213 = vadd.f32 %v1149, %v1181
      %v1214 = vadd.f32 %v1150, %v1182
      %v1215 = vadd.f32 %v1151, %v1183
      %vm1216 = vcmask 64512
      %1217 = vst.msk [vmem:[%s217] sm:$0xff] %vm1216, %v1184
      %1218 = vst.msk [vmem:[%s217 + $0x8] sm:$0xff] %vm1216, %v1185
      %1219 = vst.msk [vmem:[%s217 + $0x10] sm:$0xff] %vm1216, %v1186
      %1220 = vst.msk [vmem:[%s217 + $0x18] sm:$0xff] %vm1216, %v1187
      %1221 = vst.msk [vmem:[%s217 + $0x20] sm:$0xff] %vm1216, %v1188
      %1222 = vst.msk [vmem:[%s217 + $0x28] sm:$0xff] %vm1216, %v1189
      %1223 = vst.msk [vmem:[%s217 + $0x30] sm:$0xff] %vm1216, %v1190
      %1224 = vst.msk [vmem:[%s217 + $0x38] sm:$0xff] %vm1216, %v1191
      %1225 = vst.msk [vmem:[%s217 + $0x40] sm:$0xff] %vm1216, %v1192
      %1226 = vst.msk [vmem:[%s217 + $0x48] sm:$0xff] %vm1216, %v1193
      %1227 = vst.msk [vmem:[%s217 + $0x50] sm:$0xff] %vm1216, %v1194
      %1228 = vst.msk [vmem:[%s217 + $0x58] sm:$0xff] %vm1216, %v1195
      %1229 = vst.msk [vmem:[%s217 + $0x60] sm:$0xff] %vm1216, %v1196
      %1230 = vst.msk [vmem:[%s217 + $0x68] sm:$0xff] %vm1216, %v1197
      %1231 = vst.msk [vmem:[%s217 + $0x70] sm:$0xff] %vm1216, %v1198
      %1232 = vst.msk [vmem:[%s217 + $0x78] sm:$0xff] %vm1216, %v1199
      %1233 = vst.msk [vmem:[%s217 + $0x80] sm:$0xff] %vm1216, %v1200
      %1234 = vst.msk [vmem:[%s217 + $0x88] sm:$0xff] %vm1216, %v1201
      %1235 = vst.msk [vmem:[%s217 + $0x90] sm:$0xff] %vm1216, %v1202
      %1236 = vst.msk [vmem:[%s217 + $0x98] sm:$0xff] %vm1216, %v1203
      %1237 = vst.msk [vmem:[%s217 + $0xa0] sm:$0xff] %vm1216, %v1204
      %1238 = vst.msk [vmem:[%s217 + $0xa8] sm:$0xff] %vm1216, %v1205
      %1239 = vst.msk [vmem:[%s217 + $0xb0] sm:$0xff] %vm1216, %v1206
      %1240 = vst.msk [vmem:[%s217 + $0xb8] sm:$0xff] %vm1216, %v1207
      %1241 = vst.msk [vmem:[%s217 + $0xc0] sm:$0xff] %vm1216, %v1208
      %1242 = vst.msk [vmem:[%s217 + $0xc8] sm:$0xff] %vm1216, %v1209
      %1243 = vst.msk [vmem:[%s217 + $0xd0] sm:$0xff] %vm1216, %v1210
      %1244 = vst.msk [vmem:[%s217 + $0xd8] sm:$0xff] %vm1216, %v1211
      %1245 = vst.msk [vmem:[%s217 + $0xe0] sm:$0xff] %vm1216, %v1212
      %1246 = vst.msk [vmem:[%s217 + $0xe8] sm:$0xff] %vm1216, %v1213
      %1247 = vst.msk [vmem:[%s217 + $0xf0] sm:$0xff] %vm1216, %v1214
      %1248 = vst.msk [vmem:[%s217 + $0xf8] sm:$0xff] %vm1216, %v1215
      %p1249 = scmp.lt.s32.totalorder %s15, 1
      %s1250 = scalar_select %p1249, %s15, 1
      %s1251 = smul.addr %s1250, 32
      %s1252 = smul.addr %s1251, 8
      %s1253 = scalar_lea.vmem %s4, %s1252
      // Predicated region
      $region37: #{dgb_forward.11} parent=35 // pred_check
        %p1254 = pneg %p127
      $region38: #{dgb_forward.11} parent=35 // pred_check_branch
        %1256 = sbr.rel (%p1254) target = $region40
      $region39: #{dgb_forward.11} parent=35 // pred_region
        _
      $region40: #{dgb_forward.11} parent=35 // pred_fallthru
        _
    $region36: #{dgb_forward.11} parent=5 // pred_fallthru
      _
    %p1257 = scmp.le.s32.totalorder 2, %s10
    // Predicated region
    $region41: #{dgb_forward.11} parent=5 // pred_check
      %p1258 = pneg %p1257
    $region42: #{dgb_forward.11} parent=5 // pred_check_branch
      %1260 = sbr.rel (%p1258) target = $region44
    $region43: #{dgb_forward.11} parent=5 // pred_region
      %s1261 = ssub.s32 %s10, 2
      // Predicated region
      $region45: #{dgb_forward.11} parent=43 // pred_check
        %p1262 = pneg %p133
      $region46: #{dgb_forward.11} parent=43 // pred_check_branch
        %1264 = sbr.rel (%p1262) target = $region48
      $region47: #{dgb_forward.11} parent=43 // pred_region
        %p1265 = scmp.lt.s32.totalorder %s16, 1
        %s1266 = scalar_select %p1265, %s16, 1
        %s1267 = smul.addr %s1266, 32
        %s1268 = smul.addr %s1267, 8
        %s1269 = scalar_lea.vmem %s4, %s1268
      $region48: #{dgb_forward.11} parent=43 // pred_fallthru
        _
    $region44: #{dgb_forward.11} parent=5 // pred_fallthru
      _
  $region6: #{dgb_forward.11} parent=0 // loop_footer
    %s14 = sadd.s32 1, %s10
  $region7: #{dgb_forward.11} parent=0 // loop_footer_branch
    %9 = sbr.rel target = $region3
  $region8: #{dgb_forward.11} parent=0 // loop_exit
    _

</llo_original>
